<compile_context>
chip_gen: v7x
topology: tpu7x:2x2x1
jax: 0.10.0
libtpu: 0.0.40
codegen_flags: <defaults>
</compile_context>

<pallas_src>
import functools

import jax
import jax.numpy as jnp
from jax.experimental import pallas as pl
from jax.experimental.pallas import tpu as pltpu

# ----------------------------- model config ---------------------------------
IMAGE_SIZE = 16
PATCH_SIZE = 4
IN_CHANNELS = 4
NUM_CLASSES = 10
EMBED_DIM = 32
NUM_HEADS = 4
NUM_LAYERS = 2
MLP_DIM = 64

HEAD_DIM = EMBED_DIM // NUM_HEADS
NUM_PATCHES = (IMAGE_SIZE // PATCH_SIZE) ** 2
SEQ_LEN = NUM_PATCHES + 1
PATCH_DIM = IN_CHANNELS * PATCH_SIZE * PATCH_SIZE
LN_EPS = 1e-5
_SQRT_HALF = 0.7071067811865476  # 1/sqrt(2)
_ATTN_SCALE = HEAD_DIM ** (-0.5)


# --------------------------- shared math helpers ------------------------------
def _layernorm(x, g, b):
    """Row-wise LayerNorm over the last axis (biased var, eps=1e-5)."""
    mean = jnp.mean(x, axis=-1, keepdims=True)
    cent = x - mean
    var = jnp.mean(cent * cent, axis=-1, keepdims=True)
    return cent * jax.lax.rsqrt(var + LN_EPS) * g + b


def _erf_approx(x):
    # Abramowitz & Stegun 7.1.26 rational approximation, |abs err| <= 1.5e-7
    # (f32-roundoff level); built only from ops guaranteed to lower in Mosaic.
    p = 0.3275911
    a1, a2, a3, a4, a5 = 0.254829592, -0.284496736, 1.421413741, -1.453152027, 1.061405429
    sgn = jnp.where(x >= 0.0, 1.0, -1.0)
    z = jnp.abs(x)
    t = 1.0 / (1.0 + p * z)
    poly = ((((a5 * t + a4) * t + a3) * t + a2) * t + a1) * t
    return sgn * (1.0 - poly * jnp.exp(-z * z))


def _gelu(x, exact):
    if exact:
        # Exact erf GELU (matches nn.GELU default).
        return 0.5 * x * (1.0 + jax.lax.erf(x * _SQRT_HALF))
    # TODO(synk): if lax.erf has no Mosaic lowering on this backend we fall
    # back to an erf approximation accurate to <=1.5e-7 (f32 noise level).
    return 0.5 * x * (1.0 + _erf_approx(x * _SQRT_HALF))


@functools.lru_cache(maxsize=1)
def _erf_lowers_in_mosaic():
    """Probe whether lax.erf lowers inside a Pallas TPU kernel."""
    def k(x_ref, o_ref):
        o_ref[...] = jax.lax.erf(x_ref[...])

    vmem = pl.BlockSpec(memory_space=pltpu.MemorySpace.VMEM)
    try:
        out = pl.pallas_call(
            k,
            out_shape=jax.ShapeDtypeStruct((8, 128), jnp.float32),
            in_specs=[vmem],
            out_specs=vmem,
        )(jnp.zeros((8, 128), jnp.float32))
        jax.block_until_ready(out)
        return True
    except Exception:  # any lowering/compile failure -> polynomial fallback
        return False


# ------------------------------ fused kernel ---------------------------------
def _vit_fused_kernel(
    patches_ref,  # (B*S, PATCH_DIM) image patches; all-zero rows at cls slots
    pw_ref,       # (PATCH_DIM, E)   patch projection weight
    tok_ref,      # (B*S, E)         per-row bias: conv_b + pos (+ cls at row 0 of each batch)
    bias_ref,     # (B*S, B*S)       additive attention bias: 0 same-batch, -1e30 cross-batch
    sel_ref,      # (B, B*S)         0/1 selection matrix picking the cls rows
    ln1g_ref, ln1b_ref,   # (L, 1, E)
    qkvw_ref, qkvb_ref,   # (L, E, 3E), (L, 1, 3E)  (q-portion pre-scaled by hd**-0.5)
    apw_ref, apb_ref,     # (L, E, E),  (L, 1, E)
    ln2g_ref, ln2b_ref,   # (L, 1, E)
    w1_ref, b1_ref,       # (L, E, MLP), (L, 1, MLP)
    w2_ref, b2_ref,       # (L, MLP, E), (L, 1, E)
    ng_ref, nb_ref,       # (1, E)
    hw_ref, hb_ref,       # (E, NUM_CLASSES), (1, NUM_CLASSES)
    out_ref,              # (B, NUM_CLASSES)
    *,
    exact_gelu,
):
    f32 = jnp.float32

    # Patch projection + token assembly: cls rows of `patches_ref` are zero, so
    # one matmul + the precomputed per-row bias builds the full token matrix.
    x = (jnp.dot(patches_ref[...], pw_ref[...], preferred_element_type=f32)
         + tok_ref[...])
    attn_bias = bias_ref[...]   # hoisted once; reused by every head/layer

    for layer in range(NUM_LAYERS):
        # ---------------- attention: x + proj(MHA(LN1(x))) ----------------
        hln = _layernorm(x, ln1g_ref[layer], ln1b_ref[layer])
        qkv = (jnp.dot(hln, qkvw_ref[layer], preferred_element_type=f32)
               + qkvb_ref[layer])                                  # (B*S, 3E)
        proj_w = apw_ref[layer]                                    # (E, E)
        attn_out = None
        for head in range(NUM_HEADS):
            c = head * HEAD_DIM
            qh = qkv[:, c:c + HEAD_DIM]                            # pre-scaled
            kh = qkv[:, EMBED_DIM + c:EMBED_DIM + c + HEAD_DIM]
            vh = qkv[:, 2 * EMBED_DIM + c:2 * EMBED_DIM + c + HEAD_DIM]
            s = jax.lax.dot_general(
                qh, kh, (((1,), (1,)), ((), ())),
                preferred_element_type=f32) + attn_bias            # (B*S, B*S)
            s = s - jnp.max(s, axis=-1, keepdims=True)
            p = jnp.exp(s)
            p = p / jnp.sum(p, axis=-1, keepdims=True)
            oh = jnp.dot(p, vh, preferred_element_type=f32)        # (B*S, hd)
            # Fold this head straight into the output projection.
            contrib = jnp.dot(oh, proj_w[c:c + HEAD_DIM, :],
                              preferred_element_type=f32)
            attn_out = contrib if attn_out is None else attn_out + contrib
        x = x + (attn_out + apb_ref[layer])

        # ---------------- MLP: x + W2(GELU(W1(LN2(x)))) --------------------
        hln = _layernorm(x, ln2g_ref[layer], ln2b_ref[layer])
        h1 = (jnp.dot(hln, w1_ref[layer], preferred_element_type=f32)
              + b1_ref[layer])
        h1 = _gelu(h1, exact_gelu)
        x = x + (jnp.dot(h1, w2_ref[layer], preferred_element_type=f32)
                 + b2_ref[layer])

    # -------- final LayerNorm (on the cls rows only) + classification head ---
    cls = jnp.dot(sel_ref[...], x, preferred_element_type=f32)     # exact row gather, (B, E)
    cls = _layernorm(cls, ng_ref[...], nb_ref[...])
    out_ref[...] = (jnp.dot(cls, hw_ref[...], preferred_element_type=f32)
                    + hb_ref[...])


# ------------------------------ host wrappers --------------------------------
def _extract_patches(x):
    """NCHW image -> (B, num_patches, C*P*P); each patch flattened (c, ph, pw)."""
    B, C, H, W = x.shape
    P = PATCH_SIZE
    nh, nw = H // P, W // P
    return (
        x.reshape(B, C, nh, P, nw, P)
        .transpose(0, 2, 4, 1, 3, 5)            # (B, nh, nw, C, P, P)
        .reshape(B, nh * nw, C * P * P)
    )


def _extract_patches_with_cls_rows(x):
    """(B*S, C*P*P) patch slab with an all-zero row at each cls slot."""
    patches = _extract_patches(x)
    patches = jnp.pad(patches, ((0, 0), (1, 0), (0, 0)))  # zero row at seq pos 0
    B = x.shape[0]
    return patches.reshape(B * SEQ_LEN, PATCH_DIM)


def prepare_params(params, batch):
    """Stack per-layer weights and precompute token/mask/selection constants."""
    E, S = EMBED_DIM, SEQ_LEN
    layers = params["layers"]

    def stack(name, r, c):
        return jnp.stack([lp[name].reshape(r, c) for lp in layers])

    # Fold the attention scale into the q-portion of the fused QKV weights so
    # the kernel never multiplies by it (host-side, once).
    q_scale = jnp.concatenate(
        [jnp.full((E,), _ATTN_SCALE, jnp.float32), jnp.ones((2 * E,), jnp.float32)]
    )

    pp = {
        "pw": params["conv_w"].reshape(EMBED_DIM, PATCH_DIM).T,      # (PATCH_DIM, E)
        "ln1g": stack("ln1_g", 1, E),
        "ln1b": stack("ln1_b", 1, E),
        "qkvw": stack("qkv_w", E, 3 * E) * q_scale,
        "qkvb": stack("qkv_b", 1, 3 * E) * q_scale,
        "apw": stack("proj_w", E, E),
        "apb": stack("proj_b", 1, E),
        "ln2g": stack("ln2_g", 1, E),
        "ln2b": stack("ln2_b", 1, E),
        "w1": stack("mlp_w1", E, MLP_DIM),
        "b1": stack("mlp_b1", 1, MLP_DIM),
        "w2": stack("mlp_w2", MLP_DIM, E),
        "b2": stack("mlp_b2", 1, E),
        "ng": params["norm_g"].reshape(1, E),
        "nb": params["norm_b"].reshape(1, E),
        "hw": params["head_w"],
        "hb": params["head_b"].reshape(1, NUM_CLASSES),
    }
    # Per-row additive token bias: conv bias + positional embedding for patch
    # rows; cls_token + pos[0] for the cls row of each batch element.
    cls = params["cls_token"].astype(jnp.float32).reshape(1, E)
    pos = params["pos_embed"].astype(jnp.float32).reshape(S, E)
    tok = pos.at[1:, :].add(params["conv_b"].reshape(1, E))
    tok = tok.at[0:1, :].add(cls)
    pp["tok"] = jnp.tile(tok, (batch, 1))                            # (B*S, E)
    # Block-diagonal additive attention bias (keeps batches independent).
    bs = batch * S
    seg = jnp.arange(bs) // S
    same = seg[:, None] == seg[None, :]
    pp["attn_bias"] = jnp.where(same, 0.0, -1e30).astype(jnp.float32)
    # 0/1 selection matrix picking the cls row of every batch element.
    pp["sel"] = (
        jnp.zeros((batch, bs), jnp.float32)
        .at[jnp.arange(batch), jnp.arange(batch) * S]
        .set(1.0)
    )
    return pp


@functools.partial(jax.jit, static_argnames=("exact_gelu",))
def vit_forward(x, pp, exact_gelu=True):
    batch = x.shape[0]
    patches = _extract_patches_with_cls_rows(x)
    kernel = functools.partial(_vit_fused_kernel, exact_gelu=exact_gelu)
    vmem = pl.BlockSpec(memory_space=pltpu.MemorySpace.VMEM)
    inputs = [
        patches, pp["pw"], pp["tok"], pp["attn_bias"], pp["sel"],
        pp["ln1g"], pp["ln1b"], pp["qkvw"], pp["qkvb"], pp["apw"], pp["apb"],
        pp["ln2g"], pp["ln2b"], pp["w1"], pp["b1"], pp["w2"], pp["b2"],
        pp["ng"], pp["nb"], pp["hw"], pp["hb"],
    ]
    return pl.pallas_call(
        kernel,
        out_shape=jax.ShapeDtypeStruct((batch, NUM_CLASSES), jnp.float32),
        in_specs=[vmem] * len(inputs),
        out_specs=vmem,
    )(*inputs)


# --------------------------- pure-JAX reference -------------------------------
def vit_reference(x, params, exact_gelu=True):
    """XLA reference of the PyTorch module forward (for correctness check)."""
    B = x.shape[0]
    f32 = jnp.float32
    patches = _extract_patches(x)                                    # (B, 16, 64)
    pw = params["conv_w"].reshape(EMBED_DIM, PATCH_DIM).T
    h = patches @ pw + params["conv_b"].reshape(1, 1, EMBED_DIM)     # (B, 16, E)
    cls = jnp.broadcast_to(params["cls_token"].astype(f32), (B, 1, EMBED_DIM))
    h = jnp.concatenate([cls, h], axis=1) + params["pos_embed"].astype(f32)

    def erf(v):
        return jax.lax.erf(v) if exact_gelu else _erf_approx(v)

    for lp in params["layers"]:
        n = _layernorm(h, lp["ln1_g"], lp["ln1_b"])
        qkv = n @ lp["qkv_w"] + lp["qkv_b"]                          # (B, S, 3E)
        qkv = qkv.reshape(B, SEQ_LEN, 3, NUM_HEADS, HEAD_DIM).transpose(2, 0, 3, 1, 4)
        q, k, v = qkv[0], qkv[1], qkv[2]                             # (B, H, S, hd)
        attn = jax.nn.softmax(
            jnp.einsum("bhqd,bhkd->bhqk", q, k) * _ATTN_SCALE, axis=-1)
        o = jnp.einsum("bhqk,bhkd->bhqd", attn, v)
        o = o.transpose(0, 2, 1, 3).reshape(B, SEQ_LEN, EMBED_DIM)
        h = h + (o @ lp["proj_w"] + lp["proj_b"])
        n = _layernorm(h, lp["ln2_g"], lp["ln2_b"])
        m = n @ lp["mlp_w1"] + lp["mlp_b1"]
        m = 0.5 * m * (1.0 + erf(m * _SQRT_HALF))
        h = h + (m @ lp["mlp_w2"] + lp["mlp_b2"])

    h = _layernorm(h, params["norm_g"], params["norm_b"])
    return h[:, 0] @ params["head_w"] + params["head_b"].reshape(1, NUM_CLASSES)


# ------------------------------ param init -----------------------------------
def init_params(key):
    keys = iter(jax.random.split(key, 8 + NUM_LAYERS * 8))

    def rnd(shape, scale=0.02):
        return (scale * jax.random.normal(next(keys), shape)).astype(jnp.float32)

    params = {
        "conv_w": rnd((EMBED_DIM, IN_CHANNELS, PATCH_SIZE, PATCH_SIZE)),
        "conv_b": rnd((EMBED_DIM,)),
        # cls_token / pos_embed are zero-initialized bf16, per the module __init__.
        "cls_token": jnp.zeros((1, 1, EMBED_DIM), dtype=jnp.bfloat16),
        "pos_embed": jnp.zeros((1, SEQ_LEN, EMBED_DIM), dtype=jnp.bfloat16),
        "norm_g": jnp.ones((EMBED_DIM,), jnp.float32),
        "norm_b": jnp.zeros((EMBED_DIM,), jnp.float32),
        "head_w": rnd((EMBED_DIM, NUM_CLASSES)),
        "head_b": rnd((NUM_CLASSES,)),
        "layers": [],
    }
    for _ in range(NUM_LAYERS):
        params["layers"].append(
            {
                "ln1_g": jnp.ones((EMBED_DIM,), jnp.float32),
                "ln1_b": jnp.zeros((EMBED_DIM,), jnp.float32),
                "qkv_w": rnd((EMBED_DIM, 3 * EMBED_DIM)),
                "qkv_b": rnd((3 * EMBED_DIM,)),
                "proj_w": rnd((EMBED_DIM, EMBED_DIM)),
                "proj_b": rnd((EMBED_DIM,)),
                "ln2_g": jnp.ones((EMBED_DIM,), jnp.float32),
                "ln2_b": jnp.zeros((EMBED_DIM,), jnp.float32),
                "mlp_w1": rnd((EMBED_DIM, MLP_DIM)),
                "mlp_b1": rnd((MLP_DIM,)),
                "mlp_w2": rnd((MLP_DIM, EMBED_DIM)),
                "mlp_b2": rnd((EMBED_DIM,)),
            }
        )
    return params


# --------------------------------- main ---------------------------------------
if __name__ == "__main__":
    key = jax.random.PRNGKey(0)
    pkey, xkey = jax.random.split(key)
    params = init_params(pkey)
    # NCHW image batch, matching the PyTorch conv input layout.
    x = jax.random.normal(
        xkey, (2, IN_CHANNELS, IMAGE_SIZE, IMAGE_SIZE), dtype=jnp.float32
    )
    pp = prepare_params(params, batch=2)
    exact = _erf_lowers_in_mosaic()     # exact-erf GELU if it lowers, else poly erf
    logits = vit_forward(x, pp, exact_gelu=exact)
    jax.block_until_ready(logits)
    assert logits.shape == (2, NUM_CLASSES), logits.shape

    # Numerical check against the pure-JAX reference of the PyTorch forward.
    ref = vit_reference(x, params, exact_gelu=exact)
    assert jnp.allclose(logits, ref, atol=1e-4, rtol=1e-3), (
        float(jnp.max(jnp.abs(logits - ref)))
    )
    print("KERNEL_OK")
</pallas_src>

<mosaic_0001>
module attributes {stable_mosaic.version = 11 : i64} {
  func.func @k(%arg0: memref<8x128xf32, #tpu.memory_space<vmem>>, %arg1: memref<8x128xf32, #tpu.memory_space<vmem>>) attributes {dimension_semantics = [], scalar_prefetch = 0 : i64, scratch_operands = 0 : i64, tpu.core_type = #tpu.core_type<tc>} {
    %c0 = arith.constant 0 : index
    %c0_0 = arith.constant 0 : index
    %0 = vector.load %arg0[%c0, %c0_0] : memref<8x128xf32, #tpu.memory_space<vmem>>, vector<8x128xf32>
    %1 = math.erf %0 : vector<8x128xf32>
    %c0_1 = arith.constant 0 : index
    %c0_2 = arith.constant 0 : index
    %2 = vector.load %arg1[%c0_1, %c0_2] : memref<8x128xf32, #tpu.memory_space<vmem>>, vector<8x128xf32>
    tpu.vector_store %arg1[%c0_1, %c0_2], %1 {strides = array<i32>} : memref<8x128xf32, #tpu.memory_space<vmem>>, vector<8x128xf32>,
    return
  }
}

module attributes {stable_mosaic.version = 11 : i64} {
  func.func @_vit_fused_kernel(%arg0: memref<34x64xf32, #tpu.memory_space<vmem>>, %arg1: memref<64x32xf32, #tpu.memory_space<vmem>>, %arg2: memref<34x32xf32, #tpu.memory_space<vmem>>, %arg3: memref<34x34xf32, #tpu.memory_space<vmem>>, %arg4: memref<2x34xf32, #tpu.memory_space<vmem>>, %arg5: memref<2x1x32xf32, #tpu.memory_space<vmem>>, %arg6: memref<2x1x32xf32, #tpu.memory_space<vmem>>, %arg7: memref<2x32x96xf32, #tpu.memory_space<vmem>>, %arg8: memref<2x1x96xf32, #tpu.memory_space<vmem>>, %arg9: memref<2x32x32xf32, #tpu.memory_space<vmem>>, %arg10: memref<2x1x32xf32, #tpu.memory_space<vmem>>, %arg11: memref<2x1x32xf32, #tpu.memory_space<vmem>>, %arg12: memref<2x1x32xf32, #tpu.memory_space<vmem>>, %arg13: memref<2x32x64xf32, #tpu.memory_space<vmem>>, %arg14: memref<2x1x64xf32, #tpu.memory_space<vmem>>, %arg15: memref<2x64x32xf32, #tpu.memory_space<vmem>>, %arg16: memref<2x1x32xf32, #tpu.memory_space<vmem>>, %arg17: memref<1x32xf32, #tpu.memory_space<vmem>>, %arg18: memref<1x32xf32, #tpu.memory_space<vmem>>, %arg19: memref<32x10xf32, #tpu.memory_space<vmem>>, %arg20: memref<1x10xf32, #tpu.memory_space<vmem>>, %arg21: memref<2x10xf32, #tpu.memory_space<vmem>>) attributes {dimension_semantics = [], scalar_prefetch = 0 : i64, scratch_operands = 0 : i64, tpu.core_type = #tpu.core_type<tc>} {
    %c0 = arith.constant 0 : index
    %c0_0 = arith.constant 0 : index
    %0 = vector.load %arg0[%c0, %c0_0] : memref<34x64xf32, #tpu.memory_space<vmem>>, vector<34x64xf32>
    %c0_1 = arith.constant 0 : index
    %c0_2 = arith.constant 0 : index
    %1 = vector.load %arg1[%c0_1, %c0_2] : memref<64x32xf32, #tpu.memory_space<vmem>>, vector<64x32xf32>
    %cst = arith.constant dense<0.000000e+00> : vector<34x32xf32>
    %2 = tpu.matmul %0, %1, %cst {dimension_numbers = #tpu.dot_dimension_numbers<[1], [0], [0], [1], [0, 0, 1, 1], [], []>} : vector<34x64xf32>, vector<64x32xf32>, vector<34x32xf32> -> vector<34x32xf32>
    %c0_3 = arith.constant 0 : index
    %c0_4 = arith.constant 0 : index
    %3 = vector.load %arg2[%c0_3, %c0_4] : memref<34x32xf32, #tpu.memory_space<vmem>>, vector<34x32xf32>
    %4 = arith.addf %2, %3 : vector<34x32xf32>
    %c0_5 = arith.constant 0 : index
    %c0_6 = arith.constant 0 : index
    %5 = vector.load %arg3[%c0_5, %c0_6] : memref<34x34xf32, #tpu.memory_space<vmem>>, vector<34x34xf32>
    %c0_7 = arith.constant 0 : index
    %c0_8 = arith.constant 0 : index
    %c0_9 = arith.constant 0 : index
    %6 = vector.load %arg5[%c0_7, %c0_8, %c0_9] : memref<2x1x32xf32, #tpu.memory_space<vmem>>, vector<1x1x32xf32>
    %7 = vector.shape_cast %6 : vector<1x1x32xf32> to vector<1x32xf32>
    %c0_10 = arith.constant 0 : index
    %c0_11 = arith.constant 0 : index
    %c0_12 = arith.constant 0 : index
    %8 = vector.load %arg6[%c0_10, %c0_11, %c0_12] : memref<2x1x32xf32, #tpu.memory_space<vmem>>, vector<1x1x32xf32>
    %9 = vector.shape_cast %8 : vector<1x1x32xf32> to vector<1x32xf32>
    %cst_13 = arith.constant dense<0.000000e+00> : vector<34xf32>
    %10 = vector.multi_reduction <add>, %4, %cst_13 [1] : vector<34x32xf32> to vector<34xf32>
    %11 = vector.shape_cast %10 : vector<34xf32> to vector<34x1xf32>
    %cst_14 = arith.constant 3.200000e+01 : f32
    %12 = vector.broadcast %cst_14 : f32 to vector<34x1xf32>
    %13 = arith.divf %11, %12 : vector<34x1xf32>
    %14 = vector.broadcast %13 : vector<34x1xf32> to vector<34x32xf32>
    %15 = arith.subf %4, %14 : vector<34x32xf32>
    %16 = arith.mulf %15, %15 : vector<34x32xf32>
    %cst_15 = arith.constant dense<0.000000e+00> : vector<34xf32>
    %17 = vector.multi_reduction <add>, %16, %cst_15 [1] : vector<34x32xf32> to vector<34xf32>
    %18 = vector.shape_cast %17 : vector<34xf32> to vector<34x1xf32>
    %cst_16 = arith.constant 3.200000e+01 : f32
    %19 = vector.broadcast %cst_16 : f32 to vector<34x1xf32>
    %20 = arith.divf %18, %19 : vector<34x1xf32>
    %cst_17 = arith.constant 9.99999974E-6 : f32
    %21 = vector.broadcast %cst_17 : f32 to vector<34x1xf32>
    %22 = arith.addf %20, %21 : vector<34x1xf32>
    %23 = math.rsqrt %22 : vector<34x1xf32>
    %24 = vector.broadcast %23 : vector<34x1xf32> to vector<34x32xf32>
    %25 = arith.mulf %15, %24 : vector<34x32xf32>
    %26 = vector.broadcast %7 : vector<1x32xf32> to vector<34x32xf32>
    %27 = arith.mulf %25, %26 : vector<34x32xf32>
    %28 = vector.broadcast %9 : vector<1x32xf32> to vector<34x32xf32>
    %29 = arith.addf %27, %28 : vector<34x32xf32>
    %c0_18 = arith.constant 0 : index
    %c0_19 = arith.constant 0 : index
    %c0_20 = arith.constant 0 : index
    %30 = vector.load %arg7[%c0_18, %c0_19, %c0_20] : memref<2x32x96xf32, #tpu.memory_space<vmem>>, vector<1x32x96xf32>
    %31 = vector.shape_cast %30 : vector<1x32x96xf32> to vector<32x96xf32>
    %cst_21 = arith.constant dense<0.000000e+00> : vector<34x96xf32>
    %32 = tpu.matmul %29, %31, %cst_21 {dimension_numbers = #tpu.dot_dimension_numbers<[1], [0], [0], [1], [0, 0, 1, 1], [], []>} : vector<34x32xf32>, vector<32x96xf32>, vector<34x96xf32> -> vector<34x96xf32>
    %c0_22 = arith.constant 0 : index
    %c0_23 = arith.constant 0 : index
    %c0_24 = arith.constant 0 : index
    %33 = vector.load %arg8[%c0_22, %c0_23, %c0_24] : memref<2x1x96xf32, #tpu.memory_space<vmem>>, vector<1x1x96xf32>
    %34 = vector.shape_cast %33 : vector<1x1x96xf32> to vector<1x96xf32>
    %35 = vector.broadcast %34 : vector<1x96xf32> to vector<34x96xf32>
    %36 = arith.addf %32, %35 : vector<34x96xf32>
    %c0_25 = arith.constant 0 : index
    %c0_26 = arith.constant 0 : index
    %c0_27 = arith.constant 0 : index
    %37 = vector.load %arg9[%c0_25, %c0_26, %c0_27] : memref<2x32x32xf32, #tpu.memory_space<vmem>>, vector<1x32x32xf32>
    %38 = vector.shape_cast %37 : vector<1x32x32xf32> to vector<32x32xf32>
    %39 = vector.extract_strided_slice %36 {offsets = [0, 0], sizes = [34, 8], strides = [1, 1]} : vector<34x96xf32> to vector<34x8xf32>
    %40 = vector.extract_strided_slice %36 {offsets = [0, 32], sizes = [34, 8], strides = [1, 1]} : vector<34x96xf32> to vector<34x8xf32>
    %41 = vector.extract_strided_slice %36 {offsets = [0, 64], sizes = [34, 8], strides = [1, 1]} : vector<34x96xf32> to vector<34x8xf32>
    %cst_28 = arith.constant dense<0.000000e+00> : vector<34x34xf32>
    %42 = tpu.matmul %39, %40, %cst_28 {dimension_numbers = #tpu.dot_dimension_numbers<[1], [1], [0], [0], [0, 0, 1, 0], [], []>} : vector<34x8xf32>, vector<34x8xf32>, vector<34x34xf32> -> vector<34x34xf32>
    %43 = arith.addf %42, %5 : vector<34x34xf32>
    %cst_29 = arith.constant dense<0xFF800000> : vector<34xf32>
    %44 = vector.multi_reduction <maximumf>, %43, %cst_29 [1] : vector<34x34xf32> to vector<34xf32>
    %45 = vector.shape_cast %44 : vector<34xf32> to vector<34x1xf32>
    %46 = vector.broadcast %45 : vector<34x1xf32> to vector<34x34xf32>
    %47 = arith.subf %43, %46 : vector<34x34xf32>
    %48 = math.exp %47 : vector<34x34xf32>
    %cst_30 = arith.constant dense<0.000000e+00> : vector<34xf32>
    %49 = vector.multi_reduction <add>, %48, %cst_30 [1] : vector<34x34xf32> to vector<34xf32>
    %50 = vector.shape_cast %49 : vector<34xf32> to vector<34x1xf32>
    %51 = vector.broadcast %50 : vector<34x1xf32> to vector<34x34xf32>
    %52 = arith.divf %48, %51 : vector<34x34xf32>
    %cst_31 = arith.constant dense<0.000000e+00> : vector<34x8xf32>
    %53 = tpu.matmul %52, %41, %cst_31 {dimension_numbers = #tpu.dot_dimension_numbers<[1], [0], [0], [1], [0, 0, 1, 1], [], []>} : vector<34x34xf32>, vector<34x8xf32>, vector<34x8xf32> -> vector<34x8xf32>
    %54 = vector.extract_strided_slice %38 {offsets = [0, 0], sizes = [8, 32], strides = [1, 1]} : vector<32x32xf32> to vector<8x32xf32>
    %cst_32 = arith.constant dense<0.000000e+00> : vector<34x32xf32>
    %55 = tpu.matmul %53, %54, %cst_32 {dimension_numbers = #tpu.dot_dimension_numbers<[1], [0], [0], [1], [0, 0, 1, 1], [], []>} : vector<34x8xf32>, vector<8x32xf32>, vector<34x32xf32> -> vector<34x32xf32>
    %56 = vector.extract_strided_slice %36 {offsets = [0, 8], sizes = [34, 8], strides = [1, 1]} : vector<34x96xf32> to vector<34x8xf32>
    %57 = vector.extract_strided_slice %36 {offsets = [0, 40], sizes = [34, 8], strides = [1, 1]} : vector<34x96xf32> to vector<34x8xf32>
    %58 = vector.extract_strided_slice %36 {offsets = [0, 72], sizes = [34, 8], strides = [1, 1]} : vector<34x96xf32> to vector<34x8xf32>
    %cst_33 = arith.constant dense<0.000000e+00> : vector<34x34xf32>
    %59 = tpu.matmul %56, %57, %cst_33 {dimension_numbers = #tpu.dot_dimension_numbers<[1], [1], [0], [0], [0, 0, 1, 0], [], []>} : vector<34x8xf32>, vector<34x8xf32>, vector<34x34xf32> -> vector<34x34xf32>
    %60 = arith.addf %59, %5 : vector<34x34xf32>
    %cst_34 = arith.constant dense<0xFF800000> : vector<34xf32>
    %61 = vector.multi_reduction <maximumf>, %60, %cst_34 [1] : vector<34x34xf32> to vector<34xf32>
    %62 = vector.shape_cast %61 : vector<34xf32> to vector<34x1xf32>
    %63 = vector.broadcast %62 : vector<34x1xf32> to vector<34x34xf32>
    %64 = arith.subf %60, %63 : vector<34x34xf32>
    %65 = math.exp %64 : vector<34x34xf32>
    %cst_35 = arith.constant dense<0.000000e+00> : vector<34xf32>
    %66 = vector.multi_reduction <add>, %65, %cst_35 [1] : vector<34x34xf32> to vector<34xf32>
    %67 = vector.shape_cast %66 : vector<34xf32> to vector<34x1xf32>
    %68 = vector.broadcast %67 : vector<34x1xf32> to vector<34x34xf32>
    %69 = arith.divf %65, %68 : vector<34x34xf32>
    %cst_36 = arith.constant dense<0.000000e+00> : vector<34x8xf32>
    %70 = tpu.matmul %69, %58, %cst_36 {dimension_numbers = #tpu.dot_dimension_numbers<[1], [0], [0], [1], [0, 0, 1, 1], [], []>} : vector<34x34xf32>, vector<34x8xf32>, vector<34x8xf32> -> vector<34x8xf32>
    %71 = vector.extract_strided_slice %38 {offsets = [8, 0], sizes = [8, 32], strides = [1, 1]} : vector<32x32xf32> to vector<8x32xf32>
    %cst_37 = arith.constant dense<0.000000e+00> : vector<34x32xf32>
    %72 = tpu.matmul %70, %71, %cst_37 {dimension_numbers = #tpu.dot_dimension_numbers<[1], [0], [0], [1], [0, 0, 1, 1], [], []>} : vector<34x8xf32>, vector<8x32xf32>, vector<34x32xf32> -> vector<34x32xf32>
    %73 = arith.addf %55, %72 : vector<34x32xf32>
    %74 = vector.extract_strided_slice %36 {offsets = [0, 16], sizes = [34, 8], strides = [1, 1]} : vector<34x96xf32> to vector<34x8xf32>
    %75 = vector.extract_strided_slice %36 {offsets = [0, 48], sizes = [34, 8], strides = [1, 1]} : vector<34x96xf32> to vector<34x8xf32>
    %76 = vector.extract_strided_slice %36 {offsets = [0, 80], sizes = [34, 8], strides = [1, 1]} : vector<34x96xf32> to vector<34x8xf32>
    %cst_38 = arith.constant dense<0.000000e+00> : vector<34x34xf32>
    %77 = tpu.matmul %74, %75, %cst_38 {dimension_numbers = #tpu.dot_dimension_numbers<[1], [1], [0], [0], [0, 0, 1, 0], [], []>} : vector<34x8xf32>, vector<34x8xf32>, vector<34x34xf32> -> vector<34x34xf32>
    %78 = arith.addf %77, %5 : vector<34x34xf32>
    %cst_39 = arith.constant dense<0xFF800000> : vector<34xf32>
    %79 = vector.multi_reduction <maximumf>, %78, %cst_39 [1] : vector<34x34xf32> to vector<34xf32>
    %80 = vector.shape_cast %79 : vector<34xf32> to vector<34x1xf32>
    %81 = vector.broadcast %80 : vector<34x1xf32> to vector<34x34xf32>
    %82 = arith.subf %78, %81 : vector<34x34xf32>
    %83 = math.exp %82 : vector<34x34xf32>
    %cst_40 = arith.constant dense<0.000000e+00> : vector<34xf32>
    %84 = vector.multi_reduction <add>, %83, %cst_40 [1] : vector<34x34xf32> to vector<34xf32>
    %85 = vector.shape_cast %84 : vector<34xf32> to vector<34x1xf32>
    %86 = vector.broadcast %85 : vector<34x1xf32> to vector<34x34xf32>
    %87 = arith.divf %83, %86 : vector<34x34xf32>
    %cst_41 = arith.constant dense<0.000000e+00> : vector<34x8xf32>
    %88 = tpu.matmul %87, %76, %cst_41 {dimension_numbers = #tpu.dot_dimension_numbers<[1], [0], [0], [1], [0, 0, 1, 1], [], []>} : vector<34x34xf32>, vector<34x8xf32>, vector<34x8xf32> -> vector<34x8xf32>
    %89 = vector.extract_strided_slice %38 {offsets = [16, 0], sizes = [8, 32], strides = [1, 1]} : vector<32x32xf32> to vector<8x32xf32>
    %cst_42 = arith.constant dense<0.000000e+00> : vector<34x32xf32>
    %90 = tpu.matmul %88, %89, %cst_42 {dimension_numbers = #tpu.dot_dimension_numbers<[1], [0], [0], [1], [0, 0, 1, 1], [], []>} : vector<34x8xf32>, vector<8x32xf32>, vector<34x32xf32> -> vector<34x32xf32>
    %91 = arith.addf %73, %90 : vector<34x32xf32>
    %92 = vector.extract_strided_slice %36 {offsets = [0, 24], sizes = [34, 8], strides = [1, 1]} : vector<34x96xf32> to vector<34x8xf32>
    %93 = vector.extract_strided_slice %36 {offsets = [0, 56], sizes = [34, 8], strides = [1, 1]} : vector<34x96xf32> to vector<34x8xf32>
    %94 = vector.extract_strided_slice %36 {offsets = [0, 88], sizes = [34, 8], strides = [1, 1]} : vector<34x96xf32> to vector<34x8xf32>
    %cst_43 = arith.constant dense<0.000000e+00> : vector<34x34xf32>
    %95 = tpu.matmul %92, %93, %cst_43 {dimension_numbers = #tpu.dot_dimension_numbers<[1], [1], [0], [0], [0, 0, 1, 0], [], []>} : vector<34x8xf32>, vector<34x8xf32>, vector<34x34xf32> -> vector<34x34xf32>
    %96 = arith.addf %95, %5 : vector<34x34xf32>
    %cst_44 = arith.constant dense<0xFF800000> : vector<34xf32>
    %97 = vector.multi_reduction <maximumf>, %96, %cst_44 [1] : vector<34x34xf32> to vector<34xf32>
    %98 = vector.shape_cast %97 : vector<34xf32> to vector<34x1xf32>
    %99 = vector.broadcast %98 : vector<34x1xf32> to vector<34x34xf32>
    %100 = arith.subf %96, %99 : vector<34x34xf32>
    %101 = math.exp %100 : vector<34x34xf32>
    %cst_45 = arith.constant dense<0.000000e+00> : vector<34xf32>
    %102 = vector.multi_reduction <add>, %101, %cst_45 [1] : vector<34x34xf32> to vector<34xf32>
    %103 = vector.shape_cast %102 : vector<34xf32> to vector<34x1xf32>
    %104 = vector.broadcast %103 : vector<34x1xf32> to vector<34x34xf32>
    %105 = arith.divf %101, %104 : vector<34x34xf32>
    %cst_46 = arith.constant dense<0.000000e+00> : vector<34x8xf32>
    %106 = tpu.matmul %105, %94, %cst_46 {dimension_numbers = #tpu.dot_dimension_numbers<[1], [0], [0], [1], [0, 0, 1, 1], [], []>} : vector<34x34xf32>, vector<34x8xf32>, vector<34x8xf32> -> vector<34x8xf32>
    %107 = vector.extract_strided_slice %38 {offsets = [24, 0], sizes = [8, 32], strides = [1, 1]} : vector<32x32xf32> to vector<8x32xf32>
    %cst_47 = arith.constant dense<0.000000e+00> : vector<34x32xf32>
    %108 = tpu.matmul %106, %107, %cst_47 {dimension_numbers = #tpu.dot_dimension_numbers<[1], [0], [0], [1], [0, 0, 1, 1], [], []>} : vector<34x8xf32>, vector<8x32xf32>, vector<34x32xf32> -> vector<34x32xf32>
    %109 = arith.addf %91, %108 : vector<34x32xf32>
    %c0_48 = arith.constant 0 : index
    %c0_49 = arith.constant 0 : index
    %c0_50 = arith.constant 0 : index
    %110 = vector.load %arg10[%c0_48, %c0_49, %c0_50] : memref<2x1x32xf32, #tpu.memory_space<vmem>>, vector<1x1x32xf32>
    %111 = vector.shape_cast %110 : vector<1x1x32xf32> to vector<1x32xf32>
    %112 = vector.broadcast %111 : vector<1x32xf32> to vector<34x32xf32>
    %113 = arith.addf %109, %112 : vector<34x32xf32>
    %114 = arith.addf %4, %113 : vector<34x32xf32>
    %c0_51 = arith.constant 0 : index
    %c0_52 = arith.constant 0 : index
    %c0_53 = arith.constant 0 : index
    %115 = vector.load %arg11[%c0_51, %c0_52, %c0_53] : memref<2x1x32xf32, #tpu.memory_space<vmem>>, vector<1x1x32xf32>
    %116 = vector.shape_cast %115 : vector<1x1x32xf32> to vector<1x32xf32>
    %c0_54 = arith.constant 0 : index
    %c0_55 = arith.constant 0 : index
    %c0_56 = arith.constant 0 : index
    %117 = vector.load %arg12[%c0_54, %c0_55, %c0_56] : memref<2x1x32xf32, #tpu.memory_space<vmem>>, vector<1x1x32xf32>
    %118 = vector.shape_cast %117 : vector<1x1x32xf32> to vector<1x32xf32>
    %cst_57 = arith.constant dense<0.000000e+00> : vector<34xf32>
    %119 = vector.multi_reduction <add>, %114, %cst_57 [1] : vector<34x32xf32> to vector<34xf32>
    %120 = vector.shape_cast %119 : vector<34xf32> to vector<34x1xf32>
    %cst_58 = arith.constant 3.200000e+01 : f32
    %121 = vector.broadcast %cst_58 : f32 to vector<34x1xf32>
    %122 = arith.divf %120, %121 : vector<34x1xf32>
    %123 = vector.broadcast %122 : vector<34x1xf32> to vector<34x32xf32>
    %124 = arith.subf %114, %123 : vector<34x32xf32>
    %125 = arith.mulf %124, %124 : vector<34x32xf32>
    %cst_59 = arith.constant dense<0.000000e+00> : vector<34xf32>
    %126 = vector.multi_reduction <add>, %125, %cst_59 [1] : vector<34x32xf32> to vector<34xf32>
    %127 = vector.shape_cast %126 : vector<34xf32> to vector<34x1xf32>
    %cst_60 = arith.constant 3.200000e+01 : f32
    %128 = vector.broadcast %cst_60 : f32 to vector<34x1xf32>
    %129 = arith.divf %127, %128 : vector<34x1xf32>
    %cst_61 = arith.constant 9.99999974E-6 : f32
    %130 = vector.broadcast %cst_61 : f32 to vector<34x1xf32>
    %131 = arith.addf %129, %130 : vector<34x1xf32>
    %132 = math.rsqrt %131 : vector<34x1xf32>
    %133 = vector.broadcast %132 : vector<34x1xf32> to vector<34x32xf32>
    %134 = arith.mulf %124, %133 : vector<34x32xf32>
    %135 = vector.broadcast %116 : vector<1x32xf32> to vector<34x32xf32>
    %136 = arith.mulf %134, %135 : vector<34x32xf32>
    %137 = vector.broadcast %118 : vector<1x32xf32> to vector<34x32xf32>
    %138 = arith.addf %136, %137 : vector<34x32xf32>
    %c0_62 = arith.constant 0 : index
    %c0_63 = arith.constant 0 : index
    %c0_64 = arith.constant 0 : index
    %139 = vector.load %arg13[%c0_62, %c0_63, %c0_64] : memref<2x32x64xf32, #tpu.memory_space<vmem>>, vector<1x32x64xf32>
    %140 = vector.shape_cast %139 : vector<1x32x64xf32> to vector<32x64xf32>
    %cst_65 = arith.constant dense<0.000000e+00> : vector<34x64xf32>
    %141 = tpu.matmul %138, %140, %cst_65 {dimension_numbers = #tpu.dot_dimension_numbers<[1], [0], [0], [1], [0, 0, 1, 1], [], []>} : vector<34x32xf32>, vector<32x64xf32>, vector<34x64xf32> -> vector<34x64xf32>
    %c0_66 = arith.constant 0 : index
    %c0_67 = arith.constant 0 : index
    %c0_68 = arith.constant 0 : index
    %142 = vector.load %arg14[%c0_66, %c0_67, %c0_68] : memref<2x1x64xf32, #tpu.memory_space<vmem>>, vector<1x1x64xf32>
    %143 = vector.shape_cast %142 : vector<1x1x64xf32> to vector<1x64xf32>
    %144 = vector.broadcast %143 : vector<1x64xf32> to vector<34x64xf32>
    %145 = arith.addf %141, %144 : vector<34x64xf32>
    %cst_69 = arith.constant 5.000000e-01 : f32
    %146 = vector.broadcast %cst_69 : f32 to vector<34x64xf32>
    %147 = arith.mulf %146, %145 : vector<34x64xf32>
    %cst_70 = arith.constant 0.707106769 : f32
    %148 = vector.broadcast %cst_70 : f32 to vector<34x64xf32>
    %149 = arith.mulf %145, %148 : vector<34x64xf32>
    %cst_71 = arith.constant 0.000000e+00 : f32
    %150 = vector.broadcast %cst_71 : f32 to vector<34x64xf32>
    %151 = arith.cmpf oge, %149, %150 : vector<34x64xf32>
    %cst_72 = arith.constant 1.000000e+00 : f32
    %cst_73 = arith.constant -1.000000e+00 : f32
    %152 = vector.broadcast %cst_72 : f32 to vector<34x64xf32>
    %153 = vector.broadcast %cst_73 : f32 to vector<34x64xf32>
    %154 = arith.select %151, %152, %153 : vector<34x64xi1>, vector<34x64xf32>
    %155 = math.absf %149 : vector<34x64xf32>
    %cst_74 = arith.constant 0.327591091 : f32
    %156 = vector.broadcast %cst_74 : f32 to vector<34x64xf32>
    %157 = arith.mulf %156, %155 : vector<34x64xf32>
    %cst_75 = arith.constant 1.000000e+00 : f32
    %158 = vector.broadcast %cst_75 : f32 to vector<34x64xf32>
    %159 = arith.addf %158, %157 : vector<34x64xf32>
    %cst_76 = arith.constant 1.000000e+00 : f32
    %160 = vector.broadcast %cst_76 : f32 to vector<34x64xf32>
    %161 = arith.divf %160, %159 : vector<34x64xf32>
    %cst_77 = arith.constant 1.06140542 : f32
    %162 = vector.broadcast %cst_77 : f32 to vector<34x64xf32>
    %163 = arith.mulf %162, %161 : vector<34x64xf32>
    %cst_78 = arith.constant -1.45315206 : f32
    %164 = vector.broadcast %cst_78 : f32 to vector<34x64xf32>
    %165 = arith.addf %163, %164 : vector<34x64xf32>
    %166 = arith.mulf %165, %161 : vector<34x64xf32>
    %cst_79 = arith.constant 1.42141378 : f32
    %167 = vector.broadcast %cst_79 : f32 to vector<34x64xf32>
    %168 = arith.addf %166, %167 : vector<34x64xf32>
    %169 = arith.mulf %168, %161 : vector<34x64xf32>
    %cst_80 = arith.constant -0.284496725 : f32
    %170 = vector.broadcast %cst_80 : f32 to vector<34x64xf32>
    %171 = arith.addf %169, %170 : vector<34x64xf32>
    %172 = arith.mulf %171, %161 : vector<34x64xf32>
    %cst_81 = arith.constant 0.254829586 : f32
    %173 = vector.broadcast %cst_81 : f32 to vector<34x64xf32>
    %174 = arith.addf %172, %173 : vector<34x64xf32>
    %175 = arith.mulf %174, %161 : vector<34x64xf32>
    %cst_82 = arith.constant 0.000000e+00 : f32
    %176 = vector.broadcast %cst_82 : f32 to vector<34x64xf32>
    %177 = arith.subf %176, %155 : vector<34x64xf32>
    %178 = arith.mulf %177, %155 : vector<34x64xf32>
    %179 = math.exp %178 : vector<34x64xf32>
    %180 = arith.mulf %175, %179 : vector<34x64xf32>
    %cst_83 = arith.constant 1.000000e+00 : f32
    %181 = vector.broadcast %cst_83 : f32 to vector<34x64xf32>
    %182 = arith.subf %181, %180 : vector<34x64xf32>
    %183 = arith.mulf %154, %182 : vector<34x64xf32>
    %cst_84 = arith.constant 1.000000e+00 : f32
    %184 = vector.broadcast %cst_84 : f32 to vector<34x64xf32>
    %185 = arith.addf %184, %183 : vector<34x64xf32>
    %186 = arith.mulf %147, %185 : vector<34x64xf32>
    %c0_85 = arith.constant 0 : index
    %c0_86 = arith.constant 0 : index
    %c0_87 = arith.constant 0 : index
    %187 = vector.load %arg15[%c0_85, %c0_86, %c0_87] : memref<2x64x32xf32, #tpu.memory_space<vmem>>, vector<1x64x32xf32>
    %188 = vector.shape_cast %187 : vector<1x64x32xf32> to vector<64x32xf32>
    %cst_88 = arith.constant dense<0.000000e+00> : vector<34x32xf32>
    %189 = tpu.matmul %186, %188, %cst_88 {dimension_numbers = #tpu.dot_dimension_numbers<[1], [0], [0], [1], [0, 0, 1, 1], [], []>} : vector<34x64xf32>, vector<64x32xf32>, vector<34x32xf32> -> vector<34x32xf32>
    %c0_89 = arith.constant 0 : index
    %c0_90 = arith.constant 0 : index
    %c0_91 = arith.constant 0 : index
    %190 = vector.load %arg16[%c0_89, %c0_90, %c0_91] : memref<2x1x32xf32, #tpu.memory_space<vmem>>, vector<1x1x32xf32>
    %191 = vector.shape_cast %190 : vector<1x1x32xf32> to vector<1x32xf32>
    %192 = vector.broadcast %191 : vector<1x32xf32> to vector<34x32xf32>
    %193 = arith.addf %189, %192 : vector<34x32xf32>
    %194 = arith.addf %114, %193 : vector<34x32xf32>
    %c1 = arith.constant 1 : index
    %c0_92 = arith.constant 0 : index
    %c0_93 = arith.constant 0 : index
    %195 = vector.load %arg5[%c1, %c0_92, %c0_93] : memref<2x1x32xf32, #tpu.memory_space<vmem>>, vector<1x1x32xf32>
    %196 = vector.shape_cast %195 : vector<1x1x32xf32> to vector<1x32xf32>
    %c1_94 = arith.constant 1 : index
    %c0_95 = arith.constant 0 : index
    %c0_96 = arith.constant 0 : index
    %197 = vector.load %arg6[%c1_94, %c0_95, %c0_96] : memref<2x1x32xf32, #tpu.memory_space<vmem>>, vector<1x1x32xf32>
    %198 = vector.shape_cast %197 : vector<1x1x32xf32> to vector<1x32xf32>
    %cst_97 = arith.constant dense<0.000000e+00> : vector<34xf32>
    %199 = vector.multi_reduction <add>, %194, %cst_97 [1] : vector<34x32xf32> to vector<34xf32>
    %200 = vector.shape_cast %199 : vector<34xf32> to vector<34x1xf32>
    %cst_98 = arith.constant 3.200000e+01 : f32
    %201 = vector.broadcast %cst_98 : f32 to vector<34x1xf32>
    %202 = arith.divf %200, %201 : vector<34x1xf32>
    %203 = vector.broadcast %202 : vector<34x1xf32> to vector<34x32xf32>
    %204 = arith.subf %194, %203 : vector<34x32xf32>
    %205 = arith.mulf %204, %204 : vector<34x32xf32>
    %cst_99 = arith.constant dense<0.000000e+00> : vector<34xf32>
    %206 = vector.multi_reduction <add>, %205, %cst_99 [1] : vector<34x32xf32> to vector<34xf32>
    %207 = vector.shape_cast %206 : vector<34xf32> to vector<34x1xf32>
    %cst_100 = arith.constant 3.200000e+01 : f32
    %208 = vector.broadcast %cst_100 : f32 to vector<34x1xf32>
    %209 = arith.divf %207, %208 : vector<34x1xf32>
    %cst_101 = arith.constant 9.99999974E-6 : f32
    %210 = vector.broadcast %cst_101 : f32 to vector<34x1xf32>
    %211 = arith.addf %209, %210 : vector<34x1xf32>
    %212 = math.rsqrt %211 : vector<34x1xf32>
    %213 = vector.broadcast %212 : vector<34x1xf32> to vector<34x32xf32>
    %214 = arith.mulf %204, %213 : vector<34x32xf32>
    %215 = vector.broadcast %196 : vector<1x32xf32> to vector<34x32xf32>
    %216 = arith.mulf %214, %215 : vector<34x32xf32>
    %217 = vector.broadcast %198 : vector<1x32xf32> to vector<34x32xf32>
    %218 = arith.addf %216, %217 : vector<34x32xf32>
    %c1_102 = arith.constant 1 : index
    %c0_103 = arith.constant 0 : index
    %c0_104 = arith.constant 0 : index
    %219 = vector.load %arg7[%c1_102, %c0_103, %c0_104] : memref<2x32x96xf32, #tpu.memory_space<vmem>>, vector<1x32x96xf32>
    %220 = vector.shape_cast %219 : vector<1x32x96xf32> to vector<32x96xf32>
    %cst_105 = arith.constant dense<0.000000e+00> : vector<34x96xf32>
    %221 = tpu.matmul %218, %220, %cst_105 {dimension_numbers = #tpu.dot_dimension_numbers<[1], [0], [0], [1], [0, 0, 1, 1], [], []>} : vector<34x32xf32>, vector<32x96xf32>, vector<34x96xf32> -> vector<34x96xf32>
    %c1_106 = arith.constant 1 : index
    %c0_107 = arith.constant 0 : index
    %c0_108 = arith.constant 0 : index
    %222 = vector.load %arg8[%c1_106, %c0_107, %c0_108] : memref<2x1x96xf32, #tpu.memory_space<vmem>>, vector<1x1x96xf32>
    %223 = vector.shape_cast %222 : vector<1x1x96xf32> to vector<1x96xf32>
    %224 = vector.broadcast %223 : vector<1x96xf32> to vector<34x96xf32>
    %225 = arith.addf %221, %224 : vector<34x96xf32>
    %c1_109 = arith.constant 1 : index
    %c0_110 = arith.constant 0 : index
    %c0_111 = arith.constant 0 : index
    %226 = vector.load %arg9[%c1_109, %c0_110, %c0_111] : memref<2x32x32xf32, #tpu.memory_space<vmem>>, vector<1x32x32xf32>
    %227 = vector.shape_cast %226 : vector<1x32x32xf32> to vector<32x32xf32>
    %228 = vector.extract_strided_slice %225 {offsets = [0, 0], sizes = [34, 8], strides = [1, 1]} : vector<34x96xf32> to vector<34x8xf32>
    %229 = vector.extract_strided_slice %225 {offsets = [0, 32], sizes = [34, 8], strides = [1, 1]} : vector<34x96xf32> to vector<34x8xf32>
    %230 = vector.extract_strided_slice %225 {offsets = [0, 64], sizes = [34, 8], strides = [1, 1]} : vector<34x96xf32> to vector<34x8xf32>
    %cst_112 = arith.constant dense<0.000000e+00> : vector<34x34xf32>
    %231 = tpu.matmul %228, %229, %cst_112 {dimension_numbers = #tpu.dot_dimension_numbers<[1], [1], [0], [0], [0, 0, 1, 0], [], []>} : vector<34x8xf32>, vector<34x8xf32>, vector<34x34xf32> -> vector<34x34xf32>
    %232 = arith.addf %231, %5 : vector<34x34xf32>
    %cst_113 = arith.constant dense<0xFF800000> : vector<34xf32>
    %233 = vector.multi_reduction <maximumf>, %232, %cst_113 [1] : vector<34x34xf32> to vector<34xf32>
    %234 = vector.shape_cast %233 : vector<34xf32> to vector<34x1xf32>
    %235 = vector.broadcast %234 : vector<34x1xf32> to vector<34x34xf32>
    %236 = arith.subf %232, %235 : vector<34x34xf32>
    %237 = math.exp %236 : vector<34x34xf32>
    %cst_114 = arith.constant dense<0.000000e+00> : vector<34xf32>
    %238 = vector.multi_reduction <add>, %237, %cst_114 [1] : vector<34x34xf32> to vector<34xf32>
    %239 = vector.shape_cast %238 : vector<34xf32> to vector<34x1xf32>
    %240 = vector.broadcast %239 : vector<34x1xf32> to vector<34x34xf32>
    %241 = arith.divf %237, %240 : vector<34x34xf32>
    %cst_115 = arith.constant dense<0.000000e+00> : vector<34x8xf32>
    %242 = tpu.matmul %241, %230, %cst_115 {dimension_numbers = #tpu.dot_dimension_numbers<[1], [0], [0], [1], [0, 0, 1, 1], [], []>} : vector<34x34xf32>, vector<34x8xf32>, vector<34x8xf32> -> vector<34x8xf32>
    %243 = vector.extract_strided_slice %227 {offsets = [0, 0], sizes = [8, 32], strides = [1, 1]} : vector<32x32xf32> to vector<8x32xf32>
    %cst_116 = arith.constant dense<0.000000e+00> : vector<34x32xf32>
    %244 = tpu.matmul %242, %243, %cst_116 {dimension_numbers = #tpu.dot_dimension_numbers<[1], [0], [0], [1], [0, 0, 1, 1], [], []>} : vector<34x8xf32>, vector<8x32xf32>, vector<34x32xf32> -> vector<34x32xf32>
    %245 = vector.extract_strided_slice %225 {offsets = [0, 8], sizes = [34, 8], strides = [1, 1]} : vector<34x96xf32> to vector<34x8xf32>
    %246 = vector.extract_strided_slice %225 {offsets = [0, 40], sizes = [34, 8], strides = [1, 1]} : vector<34x96xf32> to vector<34x8xf32>
    %247 = vector.extract_strided_slice %225 {offsets = [0, 72], sizes = [34, 8], strides = [1, 1]} : vector<34x96xf32> to vector<34x8xf32>
    %cst_117 = arith.constant dense<0.000000e+00> : vector<34x34xf32>
    %248 = tpu.matmul %245, %246, %cst_117 {dimension_numbers = #tpu.dot_dimension_numbers<[1], [1], [0], [0], [0, 0, 1, 0], [], []>} : vector<34x8xf32>, vector<34x8xf32>, vector<34x34xf32> -> vector<34x34xf32>
    %249 = arith.addf %248, %5 : vector<34x34xf32>
    %cst_118 = arith.constant dense<0xFF800000> : vector<34xf32>
    %250 = vector.multi_reduction <maximumf>, %249, %cst_118 [1] : vector<34x34xf32> to vector<34xf32>
    %251 = vector.shape_cast %250 : vector<34xf32> to vector<34x1xf32>
    %252 = vector.broadcast %251 : vector<34x1xf32> to vector<34x34xf32>
    %253 = arith.subf %249, %252 : vector<34x34xf32>
    %254 = math.exp %253 : vector<34x34xf32>
    %cst_119 = arith.constant dense<0.000000e+00> : vector<34xf32>
    %255 = vector.multi_reduction <add>, %254, %cst_119 [1] : vector<34x34xf32> to vector<34xf32>
    %256 = vector.shape_cast %255 : vector<34xf32> to vector<34x1xf32>
    %257 = vector.broadcast %256 : vector<34x1xf32> to vector<34x34xf32>
    %258 = arith.divf %254, %257 : vector<34x34xf32>
    %cst_120 = arith.constant dense<0.000000e+00> : vector<34x8xf32>
    %259 = tpu.matmul %258, %247, %cst_120 {dimension_numbers = #tpu.dot_dimension_numbers<[1], [0], [0], [1], [0, 0, 1, 1], [], []>} : vector<34x34xf32>, vector<34x8xf32>, vector<34x8xf32> -> vector<34x8xf32>
    %260 = vector.extract_strided_slice %227 {offsets = [8, 0], sizes = [8, 32], strides = [1, 1]} : vector<32x32xf32> to vector<8x32xf32>
    %cst_121 = arith.constant dense<0.000000e+00> : vector<34x32xf32>
    %261 = tpu.matmul %259, %260, %cst_121 {dimension_numbers = #tpu.dot_dimension_numbers<[1], [0], [0], [1], [0, 0, 1, 1], [], []>} : vector<34x8xf32>, vector<8x32xf32>, vector<34x32xf32> -> vector<34x32xf32>
    %262 = arith.addf %244, %261 : vector<34x32xf32>
    %263 = vector.extract_strided_slice %225 {offsets = [0, 16], sizes = [34, 8], strides = [1, 1]} : vector<34x96xf32> to vector<34x8xf32>
    %264 = vector.extract_strided_slice %225 {offsets = [0, 48], sizes = [34, 8], strides = [1, 1]} : vector<34x96xf32> to vector<34x8xf32>
    %265 = vector.extract_strided_slice %225 {offsets = [0, 80], sizes = [34, 8], strides = [1, 1]} : vector<34x96xf32> to vector<34x8xf32>
    %cst_122 = arith.constant dense<0.000000e+00> : vector<34x34xf32>
    %266 = tpu.matmul %263, %264, %cst_122 {dimension_numbers = #tpu.dot_dimension_numbers<[1], [1], [0], [0], [0, 0, 1, 0], [], []>} : vector<34x8xf32>, vector<34x8xf32>, vector<34x34xf32> -> vector<34x34xf32>
    %267 = arith.addf %266, %5 : vector<34x34xf32>
    %cst_123 = arith.constant dense<0xFF800000> : vector<34xf32>
    %268 = vector.multi_reduction <maximumf>, %267, %cst_123 [1] : vector<34x34xf32> to vector<34xf32>
    %269 = vector.shape_cast %268 : vector<34xf32> to vector<34x1xf32>
    %270 = vector.broadcast %269 : vector<34x1xf32> to vector<34x34xf32>
    %271 = arith.subf %267, %270 : vector<34x34xf32>
    %272 = math.exp %271 : vector<34x34xf32>
    %cst_124 = arith.constant dense<0.000000e+00> : vector<34xf32>
    %273 = vector.multi_reduction <add>, %272, %cst_124 [1] : vector<34x34xf32> to vector<34xf32>
    %274 = vector.shape_cast %273 : vector<34xf32> to vector<34x1xf32>
    %275 = vector.broadcast %274 : vector<34x1xf32> to vector<34x34xf32>
    %276 = arith.divf %272, %275 : vector<34x34xf32>
    %cst_125 = arith.constant dense<0.000000e+00> : vector<34x8xf32>
    %277 = tpu.matmul %276, %265, %cst_125 {dimension_numbers = #tpu.dot_dimension_numbers<[1], [0], [0], [1], [0, 0, 1, 1], [], []>} : vector<34x34xf32>, vector<34x8xf32>, vector<34x8xf32> -> vector<34x8xf32>
    %278 = vector.extract_strided_slice %227 {offsets = [16, 0], sizes = [8, 32], strides = [1, 1]} : vector<32x32xf32> to vector<8x32xf32>
    %cst_126 = arith.constant dense<0.000000e+00> : vector<34x32xf32>
    %279 = tpu.matmul %277, %278, %cst_126 {dimension_numbers = #tpu.dot_dimension_numbers<[1], [0], [0], [1], [0, 0, 1, 1], [], []>} : vector<34x8xf32>, vector<8x32xf32>, vector<34x32xf32> -> vector<34x32xf32>
    %280 = arith.addf %262, %279 : vector<34x32xf32>
    %281 = vector.extract_strided_slice %225 {offsets = [0, 24], sizes = [34, 8], strides = [1, 1]} : vector<34x96xf32> to vector<34x8xf32>
    %282 = vector.extract_strided_slice %225 {offsets = [0, 56], sizes = [34, 8], strides = [1, 1]} : vector<34x96xf32> to vector<34x8xf32>
    %283 = vector.extract_strided_slice %225 {offsets = [0, 88], sizes = [34, 8], strides = [1, 1]} : vector<34x96xf32> to vector<34x8xf32>
    %cst_127 = arith.constant dense<0.000000e+00> : vector<34x34xf32>
    %284 = tpu.matmul %281, %282, %cst_127 {dimension_numbers = #tpu.dot_dimension_numbers<[1], [1], [0], [0], [0, 0, 1, 0], [], []>} : vector<34x8xf32>, vector<34x8xf32>, vector<34x34xf32> -> vector<34x34xf32>
    %285 = arith.addf %284, %5 : vector<34x34xf32>
    %cst_128 = arith.constant dense<0xFF800000> : vector<34xf32>
    %286 = vector.multi_reduction <maximumf>, %285, %cst_128 [1] : vector<34x34xf32> to vector<34xf32>
    %287 = vector.shape_cast %286 : vector<34xf32> to vector<34x1xf32>
    %288 = vector.broadcast %287 : vector<34x1xf32> to vector<34x34xf32>
    %289 = arith.subf %285, %288 : vector<34x34xf32>
    %290 = math.exp %289 : vector<34x34xf32>
    %cst_129 = arith.constant dense<0.000000e+00> : vector<34xf32>
    %291 = vector.multi_reduction <add>, %290, %cst_129 [1] : vector<34x34xf32> to vector<34xf32>
    %292 = vector.shape_cast %291 : vector<34xf32> to vector<34x1xf32>
    %293 = vector.broadcast %292 : vector<34x1xf32> to vector<34x34xf32>
    %294 = arith.divf %290, %293 : vector<34x34xf32>
    %cst_130 = arith.constant dense<0.000000e+00> : vector<34x8xf32>
    %295 = tpu.matmul %294, %283, %cst_130 {dimension_numbers = #tpu.dot_dimension_numbers<[1], [0], [0], [1], [0, 0, 1, 1], [], []>} : vector<34x34xf32>, vector<34x8xf32>, vector<34x8xf32> -> vector<34x8xf32>
    %296 = vector.extract_strided_slice %227 {offsets = [24, 0], sizes = [8, 32], strides = [1, 1]} : vector<32x32xf32> to vector<8x32xf32>
    %cst_131 = arith.constant dense<0.000000e+00> : vector<34x32xf32>
    %297 = tpu.matmul %295, %296, %cst_131 {dimension_numbers = #tpu.dot_dimension_numbers<[1], [0], [0], [1], [0, 0, 1, 1], [], []>} : vector<34x8xf32>, vector<8x32xf32>, vector<34x32xf32> -> vector<34x32xf32>
    %298 = arith.addf %280, %297 : vector<34x32xf32>
    %c1_132 = arith.constant 1 : index
    %c0_133 = arith.constant 0 : index
    %c0_134 = arith.constant 0 : index
    %299 = vector.load %arg10[%c1_132, %c0_133, %c0_134] : memref<2x1x32xf32, #tpu.memory_space<vmem>>, vector<1x1x32xf32>
    %300 = vector.shape_cast %299 : vector<1x1x32xf32> to vector<1x32xf32>
    %301 = vector.broadcast %300 : vector<1x32xf32> to vector<34x32xf32>
    %302 = arith.addf %298, %301 : vector<34x32xf32>
    %303 = arith.addf %194, %302 : vector<34x32xf32>
    %c1_135 = arith.constant 1 : index
    %c0_136 = arith.constant 0 : index
    %c0_137 = arith.constant 0 : index
    %304 = vector.load %arg11[%c1_135, %c0_136, %c0_137] : memref<2x1x32xf32, #tpu.memory_space<vmem>>, vector<1x1x32xf32>
    %305 = vector.shape_cast %304 : vector<1x1x32xf32> to vector<1x32xf32>
    %c1_138 = arith.constant 1 : index
    %c0_139 = arith.constant 0 : index
    %c0_140 = arith.constant 0 : index
    %306 = vector.load %arg12[%c1_138, %c0_139, %c0_140] : memref<2x1x32xf32, #tpu.memory_space<vmem>>, vector<1x1x32xf32>
    %307 = vector.shape_cast %306 : vector<1x1x32xf32> to vector<1x32xf32>
    %cst_141 = arith.constant dense<0.000000e+00> : vector<34xf32>
    %308 = vector.multi_reduction <add>, %303, %cst_141 [1] : vector<34x32xf32> to vector<34xf32>
    %309 = vector.shape_cast %308 : vector<34xf32> to vector<34x1xf32>
    %cst_142 = arith.constant 3.200000e+01 : f32
    %310 = vector.broadcast %cst_142 : f32 to vector<34x1xf32>
    %311 = arith.divf %309, %310 : vector<34x1xf32>
    %312 = vector.broadcast %311 : vector<34x1xf32> to vector<34x32xf32>
    %313 = arith.subf %303, %312 : vector<34x32xf32>
    %314 = arith.mulf %313, %313 : vector<34x32xf32>
    %cst_143 = arith.constant dense<0.000000e+00> : vector<34xf32>
    %315 = vector.multi_reduction <add>, %314, %cst_143 [1] : vector<34x32xf32> to vector<34xf32>
    %316 = vector.shape_cast %315 : vector<34xf32> to vector<34x1xf32>
    %cst_144 = arith.constant 3.200000e+01 : f32
    %317 = vector.broadcast %cst_144 : f32 to vector<34x1xf32>
    %318 = arith.divf %316, %317 : vector<34x1xf32>
    %cst_145 = arith.constant 9.99999974E-6 : f32
    %319 = vector.broadcast %cst_145 : f32 to vector<34x1xf32>
    %320 = arith.addf %318, %319 : vector<34x1xf32>
    %321 = math.rsqrt %320 : vector<34x1xf32>
    %322 = vector.broadcast %321 : vector<34x1xf32> to vector<34x32xf32>
    %323 = arith.mulf %313, %322 : vector<34x32xf32>
    %324 = vector.broadcast %305 : vector<1x32xf32> to vector<34x32xf32>
    %325 = arith.mulf %323, %324 : vector<34x32xf32>
    %326 = vector.broadcast %307 : vector<1x32xf32> to vector<34x32xf32>
    %327 = arith.addf %325, %326 : vector<34x32xf32>
    %c1_146 = arith.constant 1 : index
    %c0_147 = arith.constant 0 : index
    %c0_148 = arith.constant 0 : index
    %328 = vector.load %arg13[%c1_146, %c0_147, %c0_148] : memref<2x32x64xf32, #tpu.memory_space<vmem>>, vector<1x32x64xf32>
    %329 = vector.shape_cast %328 : vector<1x32x64xf32> to vector<32x64xf32>
    %cst_149 = arith.constant dense<0.000000e+00> : vector<34x64xf32>
    %330 = tpu.matmul %327, %329, %cst_149 {dimension_numbers = #tpu.dot_dimension_numbers<[1], [0], [0], [1], [0, 0, 1, 1], [], []>} : vector<34x32xf32>, vector<32x64xf32>, vector<34x64xf32> -> vector<34x64xf32>
    %c1_150 = arith.constant 1 : index
    %c0_151 = arith.constant 0 : index
    %c0_152 = arith.constant 0 : index
    %331 = vector.load %arg14[%c1_150, %c0_151, %c0_152] : memref<2x1x64xf32, #tpu.memory_space<vmem>>, vector<1x1x64xf32>
    %332 = vector.shape_cast %331 : vector<1x1x64xf32> to vector<1x64xf32>
    %333 = vector.broadcast %332 : vector<1x64xf32> to vector<34x64xf32>
    %334 = arith.addf %330, %333 : vector<34x64xf32>
    %cst_153 = arith.constant 5.000000e-01 : f32
    %335 = vector.broadcast %cst_153 : f32 to vector<34x64xf32>
    %336 = arith.mulf %335, %334 : vector<34x64xf32>
    %cst_154 = arith.constant 0.707106769 : f32
    %337 = vector.broadcast %cst_154 : f32 to vector<34x64xf32>
    %338 = arith.mulf %334, %337 : vector<34x64xf32>
    %cst_155 = arith.constant 0.000000e+00 : f32
    %339 = vector.broadcast %cst_155 : f32 to vector<34x64xf32>
    %340 = arith.cmpf oge, %338, %339 : vector<34x64xf32>
    %cst_156 = arith.constant 1.000000e+00 : f32
    %cst_157 = arith.constant -1.000000e+00 : f32
    %341 = vector.broadcast %cst_156 : f32 to vector<34x64xf32>
    %342 = vector.broadcast %cst_157 : f32 to vector<34x64xf32>
    %343 = arith.select %340, %341, %342 : vector<34x64xi1>, vector<34x64xf32>
    %344 = math.absf %338 : vector<34x64xf32>
    %cst_158 = arith.constant 0.327591091 : f32
    %345 = vector.broadcast %cst_158 : f32 to vector<34x64xf32>
    %346 = arith.mulf %345, %344 : vector<34x64xf32>
    %cst_159 = arith.constant 1.000000e+00 : f32
    %347 = vector.broadcast %cst_159 : f32 to vector<34x64xf32>
    %348 = arith.addf %347, %346 : vector<34x64xf32>
    %cst_160 = arith.constant 1.000000e+00 : f32
    %349 = vector.broadcast %cst_160 : f32 to vector<34x64xf32>
    %350 = arith.divf %349, %348 : vector<34x64xf32>
    %cst_161 = arith.constant 1.06140542 : f32
    %351 = vector.broadcast %cst_161 : f32 to vector<34x64xf32>
    %352 = arith.mulf %351, %350 : vector<34x64xf32>
    %cst_162 = arith.constant -1.45315206 : f32
    %353 = vector.broadcast %cst_162 : f32 to vector<34x64xf32>
    %354 = arith.addf %352, %353 : vector<34x64xf32>
    %355 = arith.mulf %354, %350 : vector<34x64xf32>
    %cst_163 = arith.constant 1.42141378 : f32
    %356 = vector.broadcast %cst_163 : f32 to vector<34x64xf32>
    %357 = arith.addf %355, %356 : vector<34x64xf32>
    %358 = arith.mulf %357, %350 : vector<34x64xf32>
    %cst_164 = arith.constant -0.284496725 : f32
    %359 = vector.broadcast %cst_164 : f32 to vector<34x64xf32>
    %360 = arith.addf %358, %359 : vector<34x64xf32>
    %361 = arith.mulf %360, %350 : vector<34x64xf32>
    %cst_165 = arith.constant 0.254829586 : f32
    %362 = vector.broadcast %cst_165 : f32 to vector<34x64xf32>
    %363 = arith.addf %361, %362 : vector<34x64xf32>
    %364 = arith.mulf %363, %350 : vector<34x64xf32>
    %cst_166 = arith.constant 0.000000e+00 : f32
    %365 = vector.broadcast %cst_166 : f32 to vector<34x64xf32>
    %366 = arith.subf %365, %344 : vector<34x64xf32>
    %367 = arith.mulf %366, %344 : vector<34x64xf32>
    %368 = math.exp %367 : vector<34x64xf32>
    %369 = arith.mulf %364, %368 : vector<34x64xf32>
    %cst_167 = arith.constant 1.000000e+00 : f32
    %370 = vector.broadcast %cst_167 : f32 to vector<34x64xf32>
    %371 = arith.subf %370, %369 : vector<34x64xf32>
    %372 = arith.mulf %343, %371 : vector<34x64xf32>
    %cst_168 = arith.constant 1.000000e+00 : f32
    %373 = vector.broadcast %cst_168 : f32 to vector<34x64xf32>
    %374 = arith.addf %373, %372 : vector<34x64xf32>
    %375 = arith.mulf %336, %374 : vector<34x64xf32>
    %c1_169 = arith.constant 1 : index
    %c0_170 = arith.constant 0 : index
    %c0_171 = arith.constant 0 : index
    %376 = vector.load %arg15[%c1_169, %c0_170, %c0_171] : memref<2x64x32xf32, #tpu.memory_space<vmem>>, vector<1x64x32xf32>
    %377 = vector.shape_cast %376 : vector<1x64x32xf32> to vector<64x32xf32>
    %cst_172 = arith.constant dense<0.000000e+00> : vector<34x32xf32>
    %378 = tpu.matmul %375, %377, %cst_172 {dimension_numbers = #tpu.dot_dimension_numbers<[1], [0], [0], [1], [0, 0, 1, 1], [], []>} : vector<34x64xf32>, vector<64x32xf32>, vector<34x32xf32> -> vector<34x32xf32>
    %c1_173 = arith.constant 1 : index
    %c0_174 = arith.constant 0 : index
    %c0_175 = arith.constant 0 : index
    %379 = vector.load %arg16[%c1_173, %c0_174, %c0_175] : memref<2x1x32xf32, #tpu.memory_space<vmem>>, vector<1x1x32xf32>
    %380 = vector.shape_cast %379 : vector<1x1x32xf32> to vector<1x32xf32>
    %381 = vector.broadcast %380 : vector<1x32xf32> to vector<34x32xf32>
    %382 = arith.addf %378, %381 : vector<34x32xf32>
    %383 = arith.addf %303, %382 : vector<34x32xf32>
    %c0_176 = arith.constant 0 : index
    %c0_177 = arith.constant 0 : index
    %384 = vector.load %arg4[%c0_176, %c0_177] : memref<2x34xf32, #tpu.memory_space<vmem>>, vector<2x34xf32>
    %cst_178 = arith.constant dense<0.000000e+00> : vector<2x32xf32>
    %385 = tpu.matmul %384, %383, %cst_178 {dimension_numbers = #tpu.dot_dimension_numbers<[1], [0], [0], [1], [0, 0, 1, 1], [], []>} : vector<2x34xf32>, vector<34x32xf32>, vector<2x32xf32> -> vector<2x32xf32>
    %c0_179 = arith.constant 0 : index
    %c0_180 = arith.constant 0 : index
    %386 = vector.load %arg17[%c0_179, %c0_180] : memref<1x32xf32, #tpu.memory_space<vmem>>, vector<1x32xf32>
    %c0_181 = arith.constant 0 : index
    %c0_182 = arith.constant 0 : index
    %387 = vector.load %arg18[%c0_181, %c0_182] : memref<1x32xf32, #tpu.memory_space<vmem>>, vector<1x32xf32>
    %cst_183 = arith.constant dense<0.000000e+00> : vector<2xf32>
    %388 = vector.multi_reduction <add>, %385, %cst_183 [1] : vector<2x32xf32> to vector<2xf32>
    %389 = vector.shape_cast %388 : vector<2xf32> to vector<2x1xf32>
    %cst_184 = arith.constant 3.200000e+01 : f32
    %390 = vector.broadcast %cst_184 : f32 to vector<2x1xf32>
    %391 = arith.divf %389, %390 : vector<2x1xf32>
    %392 = vector.broadcast %391 : vector<2x1xf32> to vector<2x32xf32>
    %393 = arith.subf %385, %392 : vector<2x32xf32>
    %394 = arith.mulf %393, %393 : vector<2x32xf32>
    %cst_185 = arith.constant dense<0.000000e+00> : vector<2xf32>
    %395 = vector.multi_reduction <add>, %394, %cst_185 [1] : vector<2x32xf32> to vector<2xf32>
    %396 = vector.shape_cast %395 : vector<2xf32> to vector<2x1xf32>
    %cst_186 = arith.constant 3.200000e+01 : f32
    %397 = vector.broadcast %cst_186 : f32 to vector<2x1xf32>
    %398 = arith.divf %396, %397 : vector<2x1xf32>
    %cst_187 = arith.constant 9.99999974E-6 : f32
    %399 = vector.broadcast %cst_187 : f32 to vector<2x1xf32>
    %400 = arith.addf %398, %399 : vector<2x1xf32>
    %401 = math.rsqrt %400 : vector<2x1xf32>
    %402 = vector.broadcast %401 : vector<2x1xf32> to vector<2x32xf32>
    %403 = arith.mulf %393, %402 : vector<2x32xf32>
    %404 = vector.broadcast %386 : vector<1x32xf32> to vector<2x32xf32>
    %405 = arith.mulf %403, %404 : vector<2x32xf32>
    %406 = vector.broadcast %387 : vector<1x32xf32> to vector<2x32xf32>
    %407 = arith.addf %405, %406 : vector<2x32xf32>
    %c0_188 = arith.constant 0 : index
    %c0_189 = arith.constant 0 : index
    %408 = vector.load %arg19[%c0_188, %c0_189] : memref<32x10xf32, #tpu.memory_space<vmem>>, vector<32x10xf32>
    %cst_190 = arith.constant dense<0.000000e+00> : vector<2x10xf32>
    %409 = tpu.matmul %407, %408, %cst_190 {dimension_numbers = #tpu.dot_dimension_numbers<[1], [0], [0], [1], [0, 0, 1, 1], [], []>} : vector<2x32xf32>, vector<32x10xf32>, vector<2x10xf32> -> vector<2x10xf32>
    %c0_191 = arith.constant 0 : index
    %c0_192 = arith.constant 0 : index
    %410 = vector.load %arg20[%c0_191, %c0_192] : memref<1x10xf32, #tpu.memory_space<vmem>>, vector<1x10xf32>
    %411 = vector.broadcast %410 : vector<1x10xf32> to vector<2x10xf32>
    %412 = arith.addf %409, %411 : vector<2x10xf32>
    %c0_193 = arith.constant 0 : index
    %c0_194 = arith.constant 0 : index
    %413 = vector.load %arg21[%c0_193, %c0_194] : memref<2x10xf32, #tpu.memory_space<vmem>>, vector<2x10xf32>
    tpu.vector_store %arg21[%c0_193, %c0_194], %412 {strides = array<i32>} : memref<2x10xf32, #tpu.memory_space<vmem>>, vector<2x10xf32>,
    return
  }
}

</mosaic_0001>

<llo_original>
// kernel: tpu_custom_call.1
$region0: #{tpu_custom_call.1}
  #allocation0 [shape = 'u32[]', space=smem, size = 0x4, offset = 0x4, fixed_abs, tag = 'smem constant byte address 0x4 - core index']
  #allocation1 [shape = 'u32[144,128]{1,0:T(1,128)}', space=vmem, size = 0x12000, scoped, tag = 'internal scratch']
  %s0 = inlined_call_operand.hbm [shape: f32[8,128], index: 0, kind: input, shape index: {}]
  %s1 = inlined_call_operand.hbm [shape: f32[8,128], index: 1, kind: output, shape index: {}]
  %s2 = sld [smem:[#allocation0]]
  $region18: #{tpu_custom_call.1} parent=0
    _
  %s4 = ssub.s32 1, %s2
  %s5 = scalar_select 0, %s4, %s2
  $region1: #{tpu_custom_call.1} parent=0
    #allocation2 [shape = 'u8[4096]{0}', space=vmem, size = 0x1000, scoped, tag = 'input window, operand 0, single buffered']
    #allocation3 [shape = 's32[1]{0}', space=sflag, size = 0x4, scoped, tag = 'scoped memory for tpu_custom_call.1']
    #allocation4 [shape = 's32[1]{0}', space=sflag, size = 0x4, scoped, tag = 'scoped memory for tpu_custom_call.1']
    #allocation5 [shape = 'u8[4096]{0}', space=vmem, size = 0x1000, scoped, tag = 'output window, operand 0, single buffered']
    %6 = vsyncpa [#allocation3], 0
    %7 = vsyncpa [#allocation4], 0
    // Predicated region
    $region2: #{tpu_custom_call.1} parent=1 // pred_check
      _
    $region3: #{tpu_custom_call.1} parent=1 // pred_check_branch
      %9 = sbr.rel (0) target = $region5
    $region4: #{tpu_custom_call.1} parent=1 // pred_region
      %s11 = ssub.s32 128, 128
      %12 = vsyncadd [#allocation3], %s11
      %s14 = sshll.u32 [#allocation2], 4
      %s15 = int_to_ptr.vmem [resolvable:$true] %s14
      %17 = dma.hbm_to_vmem [thread:$0]  %s0, 128, %s15, [#allocation3]
    $region5: #{tpu_custom_call.1} parent=1 // pred_fallthru
      _
    // Predicated region
    $region6: #{tpu_custom_call.1} parent=1 // pred_check
      _
    $region7: #{tpu_custom_call.1} parent=1 // pred_check_branch
      %19 = sbr.rel (0) target = $region9
    $region8: #{tpu_custom_call.1} parent=1 // pred_region
      %20 = dma.done [#allocation3], 128
    $region9: #{tpu_custom_call.1} parent=1 // pred_fallthru
      _
    %v21 = vld [vmem:[#allocation2] sm:$0xff]
    %v22 = verf.f32.pop %v21
    %23 = vst [vmem:[#allocation5] sm:$0xff] %v22
    // Predicated region
    $region10: #{tpu_custom_call.1} parent=1 // pred_check
      _
    $region11: #{tpu_custom_call.1} parent=1 // pred_check_branch
      %25 = sbr.rel (0) target = $region13
    $region12: #{tpu_custom_call.1} parent=1 // pred_region
      %s27 = ssub.s32 128, 128
      %28 = vsyncadd [#allocation4], %s27
      %s30 = sshll.u32 [#allocation5], 4
      %s31 = int_to_ptr.vmem [resolvable:$true] %s30
      %33 = dma.vmem_to_hbm [thread:$0]  %s31, 128, %s1, [#allocation4]
    $region13: #{tpu_custom_call.1} parent=1 // pred_fallthru
      _
    // Predicated region
    $region14: #{tpu_custom_call.1} parent=1 // pred_check
      _
    $region15: #{tpu_custom_call.1} parent=1 // pred_check_branch
      %35 = sbr.rel (0) target = $region17
    $region16: #{tpu_custom_call.1} parent=1 // pred_region
      %36 = dma.done [#allocation4], 128
    $region17: #{tpu_custom_call.1} parent=1 // pred_fallthru
      _
    %37 = vsyncpa [#allocation3], 1
    %38 = vsyncpa [#allocation4], 1

// kernel: vit_forward.1
$region0: #{vit_forward.1}
  #allocation0 [shape = 'u32[]', space=smem, size = 0x4, offset = 0x4, fixed_abs, tag = 'smem constant byte address 0x4 - core index']
  #allocation1 [shape = 'u32[144,128]{1,0:T(1,128)}', space=vmem, size = 0x12000, scoped, tag = 'internal scratch']
  %s0 = inlined_call_operand.vmem [shape: f32[34,64], index: 0, kind: input, shape index: {}]
  %s1 = inlined_call_operand.vmem [shape: f32[64,32], index: 1, kind: input, shape index: {}]
  %s2 = inlined_call_operand.vmem [shape: f32[34,32], index: 2, kind: input, shape index: {}]
  %s3 = inlined_call_operand.vmem [shape: f32[34,34], index: 3, kind: input, shape index: {}]
  %s4 = inlined_call_operand.vmem [shape: f32[2,34], index: 4, kind: input, shape index: {}]
  %s5 = inlined_call_operand.vmem [shape: f32[2,1,32], index: 5, kind: input, shape index: {}]
  %s6 = inlined_call_operand.vmem [shape: f32[2,1,32], index: 6, kind: input, shape index: {}]
  %s7 = inlined_call_operand.vmem [shape: f32[2,32,96], index: 7, kind: input, shape index: {}]
  %s8 = inlined_call_operand.vmem [shape: f32[2,1,96], index: 8, kind: input, shape index: {}]
  %s9 = inlined_call_operand.vmem [shape: f32[2,32,32], index: 9, kind: input, shape index: {}]
  %s10 = inlined_call_operand.vmem [shape: f32[2,1,32], index: 10, kind: input, shape index: {}]
  %s11 = inlined_call_operand.vmem [shape: f32[2,1,32], index: 11, kind: input, shape index: {}]
  %s12 = inlined_call_operand.vmem [shape: f32[2,1,32], index: 12, kind: input, shape index: {}]
  %s13 = inlined_call_operand.vmem [shape: f32[2,32,64], index: 13, kind: input, shape index: {}]
  %s14 = inlined_call_operand.vmem [shape: f32[2,1,64], index: 14, kind: input, shape index: {}]
  %s15 = inlined_call_operand.vmem [shape: f32[2,64,32], index: 15, kind: input, shape index: {}]
  %s16 = inlined_call_operand.vmem [shape: f32[2,1,32], index: 16, kind: input, shape index: {}]
  %s17 = inlined_call_operand.vmem [shape: f32[1,32], index: 17, kind: input, shape index: {}]
  %s18 = inlined_call_operand.vmem [shape: f32[1,32], index: 18, kind: input, shape index: {}]
  %s19 = inlined_call_operand.vmem [shape: f32[32,10], index: 19, kind: input, shape index: {}]
  %s20 = inlined_call_operand.vmem [shape: f32[1,10], index: 20, kind: input, shape index: {}]
  %s21 = inlined_call_operand.hbm [shape: f32[2,10], index: 21, kind: output, shape index: {}]
  %s22 = sld [smem:[#allocation0]]
  $region94: #{vit_forward.1} parent=0
    _
  %s24 = ssub.s32 1, %s22
  %s25 = scalar_select 0, %s24, %s22
  $region1: #{vit_forward.1} parent=0
    #allocation2 [shape = 'u8[1024]{0}', space=vmem, size = 0x400, scoped, tag = 'output window, operand 0, single buffered']
    #allocation3 [shape = 's32[1]{0}', space=sflag, size = 0x4, scoped, tag = 'scoped memory for vit_forward.1']
    %26 = vsyncpa [#allocation3], 0
    // Predicated region
    $region2: #{vit_forward.1} parent=1 // pred_check
      _
    $region3: #{vit_forward.1} parent=1 // pred_check_branch
      %28 = sbr.rel (0) target = $region5
    $region4: #{vit_forward.1} parent=1 // pred_region
      _
    $region5: #{vit_forward.1} parent=1 // pred_fallthru
      _
    // Predicated region
    $region6: #{vit_forward.1} parent=1 // pred_check
      _
    $region7: #{vit_forward.1} parent=1 // pred_check_branch
      %30 = sbr.rel (0) target = $region9
    $region8: #{vit_forward.1} parent=1 // pred_region
      _
    $region9: #{vit_forward.1} parent=1 // pred_fallthru
      _
    // Predicated region
    $region10: #{vit_forward.1} parent=1 // pred_check
      _
    $region11: #{vit_forward.1} parent=1 // pred_check_branch
      %32 = sbr.rel (0) target = $region13
    $region12: #{vit_forward.1} parent=1 // pred_region
      _
    $region13: #{vit_forward.1} parent=1 // pred_fallthru
      _
    // Predicated region
    $region14: #{vit_forward.1} parent=1 // pred_check
      _
    $region15: #{vit_forward.1} parent=1 // pred_check_branch
      %34 = sbr.rel (0) target = $region17
    $region16: #{vit_forward.1} parent=1 // pred_region
      _
    $region17: #{vit_forward.1} parent=1 // pred_fallthru
      _
    // Predicated region
    $region18: #{vit_forward.1} parent=1 // pred_check
      _
    $region19: #{vit_forward.1} parent=1 // pred_check_branch
      %36 = sbr.rel (0) target = $region21
    $region20: #{vit_forward.1} parent=1 // pred_region
      _
    $region21: #{vit_forward.1} parent=1 // pred_fallthru
      _
    // Predicated region
    $region22: #{vit_forward.1} parent=1 // pred_check
      _
    $region23: #{vit_forward.1} parent=1 // pred_check_branch
      %38 = sbr.rel (0) target = $region25
    $region24: #{vit_forward.1} parent=1 // pred_region
      _
    $region25: #{vit_forward.1} parent=1 // pred_fallthru
      _
    // Predicated region
    $region26: #{vit_forward.1} parent=1 // pred_check
      _
    $region27: #{vit_forward.1} parent=1 // pred_check_branch
      %40 = sbr.rel (0) target = $region29
    $region28: #{vit_forward.1} parent=1 // pred_region
      _
    $region29: #{vit_forward.1} parent=1 // pred_fallthru
      _
    // Predicated region
    $region30: #{vit_forward.1} parent=1 // pred_check
      _
    $region31: #{vit_forward.1} parent=1 // pred_check_branch
      %42 = sbr.rel (0) target = $region33
    $region32: #{vit_forward.1} parent=1 // pred_region
      _
    $region33: #{vit_forward.1} parent=1 // pred_fallthru
      _
    // Predicated region
    $region34: #{vit_forward.1} parent=1 // pred_check
      _
    $region35: #{vit_forward.1} parent=1 // pred_check_branch
      %44 = sbr.rel (0) target = $region37
    $region36: #{vit_forward.1} parent=1 // pred_region
      _
    $region37: #{vit_forward.1} parent=1 // pred_fallthru
      _
    // Predicated region
    $region38: #{vit_forward.1} parent=1 // pred_check
      _
    $region39: #{vit_forward.1} parent=1 // pred_check_branch
      %46 = sbr.rel (0) target = $region41
    $region40: #{vit_forward.1} parent=1 // pred_region
      _
    $region41: #{vit_forward.1} parent=1 // pred_fallthru
      _
    // Predicated region
    $region42: #{vit_forward.1} parent=1 // pred_check
      _
    $region43: #{vit_forward.1} parent=1 // pred_check_branch
      %48 = sbr.rel (0) target = $region45
    $region44: #{vit_forward.1} parent=1 // pred_region
      _
    $region45: #{vit_forward.1} parent=1 // pred_fallthru
      _
    // Predicated region
    $region46: #{vit_forward.1} parent=1 // pred_check
      _
    $region47: #{vit_forward.1} parent=1 // pred_check_branch
      %50 = sbr.rel (0) target = $region49
    $region48: #{vit_forward.1} parent=1 // pred_region
      _
    $region49: #{vit_forward.1} parent=1 // pred_fallthru
      _
    // Predicated region
    $region50: #{vit_forward.1} parent=1 // pred_check
      _
    $region51: #{vit_forward.1} parent=1 // pred_check_branch
      %52 = sbr.rel (0) target = $region53
    $region52: #{vit_forward.1} parent=1 // pred_region
      _
    $region53: #{vit_forward.1} parent=1 // pred_fallthru
      _
    // Predicated region
    $region54: #{vit_forward.1} parent=1 // pred_check
      _
    $region55: #{vit_forward.1} parent=1 // pred_check_branch
      %54 = sbr.rel (0) target = $region57
    $region56: #{vit_forward.1} parent=1 // pred_region
      _
    $region57: #{vit_forward.1} parent=1 // pred_fallthru
      _
    // Predicated region
    $region58: #{vit_forward.1} parent=1 // pred_check
      _
    $region59: #{vit_forward.1} parent=1 // pred_check_branch
      %56 = sbr.rel (0) target = $region61
    $region60: #{vit_forward.1} parent=1 // pred_region
      _
    $region61: #{vit_forward.1} parent=1 // pred_fallthru
      _
    // Predicated region
    $region62: #{vit_forward.1} parent=1 // pred_check
      _
    $region63: #{vit_forward.1} parent=1 // pred_check_branch
      %58 = sbr.rel (0) target = $region65
    $region64: #{vit_forward.1} parent=1 // pred_region
      _
    $region65: #{vit_forward.1} parent=1 // pred_fallthru
      _
    // Predicated region
    $region66: #{vit_forward.1} parent=1 // pred_check
      _
    $region67: #{vit_forward.1} parent=1 // pred_check_branch
      %60 = sbr.rel (0) target = $region69
    $region68: #{vit_forward.1} parent=1 // pred_region
      _
    $region69: #{vit_forward.1} parent=1 // pred_fallthru
      _
    // Predicated region
    $region70: #{vit_forward.1} parent=1 // pred_check
      _
    $region71: #{vit_forward.1} parent=1 // pred_check_branch
      %62 = sbr.rel (0) target = $region73
    $region72: #{vit_forward.1} parent=1 // pred_region
      _
    $region73: #{vit_forward.1} parent=1 // pred_fallthru
      _
    // Predicated region
    $region74: #{vit_forward.1} parent=1 // pred_check
      _
    $region75: #{vit_forward.1} parent=1 // pred_check_branch
      %64 = sbr.rel (0) target = $region77
    $region76: #{vit_forward.1} parent=1 // pred_region
      _
    $region77: #{vit_forward.1} parent=1 // pred_fallthru
      _
    // Predicated region
    $region78: #{vit_forward.1} parent=1 // pred_check
      _
    $region79: #{vit_forward.1} parent=1 // pred_check_branch
      %66 = sbr.rel (0) target = $region81
    $region80: #{vit_forward.1} parent=1 // pred_region
      _
    $region81: #{vit_forward.1} parent=1 // pred_fallthru
      _
    // Predicated region
    $region82: #{vit_forward.1} parent=1 // pred_check
      _
    $region83: #{vit_forward.1} parent=1 // pred_check_branch
      %68 = sbr.rel (0) target = $region85
    $region84: #{vit_forward.1} parent=1 // pred_region
      _
    $region85: #{vit_forward.1} parent=1 // pred_fallthru
      _
    %v69 = vld [vmem:[%s0] sm:$0xff]
    %v70 = vld [vmem:[%s0 + $0x8] sm:$0xff]
    %v71 = vld [vmem:[%s0 + $0x10] sm:$0xff]
    %v72 = vld [vmem:[%s0 + $0x18] sm:$0xff]
    %v73 = vld [vmem:[%s0 + $0x20] sm:$0x3]
    %v74 = vld [vmem:[%s1] sm:$0xff]
    %v75 = vld [vmem:[%s1 + $0x8] sm:$0xff]
    %v76 = vld [vmem:[%s1 + $0x10] sm:$0xff]
    %v77 = vld [vmem:[%s1 + $0x18] sm:$0xff]
    %v78 = vld [vmem:[%s1 + $0x20] sm:$0xff]
    %v79 = vld [vmem:[%s1 + $0x28] sm:$0xff]
    %v80 = vld [vmem:[%s1 + $0x30] sm:$0xff]
    %v81 = vld [vmem:[%s1 + $0x38] sm:$0xff]
    %v82 = vld [vmem:[%s2] sm:$0xff]
    %v83 = vld [vmem:[%s2 + $0x8] sm:$0xff]
    %v84 = vld [vmem:[%s2 + $0x10] sm:$0xff]
    %v85 = vld [vmem:[%s2 + $0x18] sm:$0xff]
    %v86 = vld [vmem:[%s2 + $0x20] sm:$0x3]
    %vm87 = vcmask 523264
    %v89 = vsel %vm87, %v69, 0
    %v92 = vsel %vm87, %v70, 0
    %v95 = vsel %vm87, %v71, 0
    %v98 = vsel %vm87, %v72, 0
    %v101 = vsel %vm87, %v73, 0
    %103 = vmatprep.subr.mxu0 0.0
    %104 = vmatpush1.msra.mxu0 %v74
    %105 = vmatprep.subr.mxu0 0.0
    %106 = vmatpush1.msra.mxu0 %v75
    %107 = vmatprep.subr.mxu0 0.0
    %108 = vmatpush1.msra.mxu0 %v76
    %109 = vmatprep.subr.mxu0 0.0
    %110 = vmatpush1.msra.mxu0 %v77
    %111 = vmatprep.subr.mxu0 0.0
    %112 = vmatpush1.msra.mxu0 %v78
    %113 = vmatprep.subr.mxu0 0.0
    %114 = vmatpush1.msra.mxu0 %v79
    %115 = vmatprep.subr.mxu0 0.0
    %116 = vmatpush1.msra.mxu0 %v80
    %117 = vmatprep.subr.mxu0 0.0
    %118 = vmatpush1.msra.mxu0 %v81
    %119 = vmatprep.subr.mxu0 0.0
    %120 = vmatpush1.msra.mxu0 0.0
    %121 = vmatprep.subr.mxu0 0.0
    %122 = vmatpush1.msra.mxu0 0.0
    %123 = vmatprep.subr.mxu0 0.0
    %124 = vmatpush1.msra.mxu0 0.0
    %125 = vmatprep.subr.mxu0 0.0
    %126 = vmatpush1.msra.mxu0 0.0
    %127 = vmatprep.subr.mxu0 0.0
    %128 = vmatpush1.msra.mxu0 0.0
    %129 = vmatprep.subr.mxu0 0.0
    %130 = vmatpush1.msra.mxu0 0.0
    %131 = vmatprep.subr.mxu0 0.0
    %132 = vmatpush1.msra.mxu0 0.0
    %133 = vmatprep.subr.mxu0 0.0
    %134 = vmatpush1.msra.mxu0 0.0
    %135 = vmatprep.subr.mxu0 0.0
    %136 = vmatpush1.msra.mxu0 0.0
    %137 = vmatprep.subr.mxu0 0.0
    %138 = vmatpush1.msra.mxu0 0.0
    %139 = vmatprep.subr.mxu0 0.0
    %140 = vmatpush1.msra.mxu0 0.0
    %141 = vmatprep.subr.mxu0 0.0
    %142 = vmatpush1.msra.mxu0 0.0
    %143 = vmatprep.subr.mxu0 0.0
    %144 = vmatpush1.msra.mxu0 0.0
    %145 = vmatprep.subr.mxu0 0.0
    %146 = vmatpush1.msra.mxu0 0.0
    %147 = vmatprep.subr.mxu0 0.0
    %148 = vmatpush1.msra.mxu0 0.0
    %149 = vmatprep.subr.mxu0 0.0
    %150 = vmatpush1.msra.mxu0 0.0
    %151 = vmatprep.subr.mxu0 0.0
    %152 = vmatpush1.msra.mxu0 0.0
    %153 = vmatprep.subr.mxu0 0.0
    %154 = vmatpush1.msra.mxu0 0.0
    %155 = vmatprep.subr.mxu0 0.0
    %156 = vmatpush1.msra.mxu0 0.0
    %157 = vmatprep.subr.mxu0 0.0
    %158 = vmatpush1.msra.mxu0 0.0
    %159 = vmatprep.subr.mxu0 0.0
    %160 = vmatpush1.msra.mxu0 0.0
    %161 = vmatprep.subr.mxu0 0.0
    %162 = vmatpush1.msra.mxu0 0.0
    %163 = vmatprep.subr.mxu0 0.0
    %164 = vmatpush1.msra.mxu0 0.0
    %165 = vmatprep.subr.mxu0 0.0
    %166 = vmatpush1.msra.mxu0 0.0
    %167 = vmatprep.mubr.f32.mxu0 0.0
    %168 = vmatmul.mubr.f32.gmra.mrb[0].mxu0 %v89
    %v169 = vpop.f32.mrb[0].mxu0
    %v170 = vadd.f32 %v82, %v169
    %v171 = vpop.f32.mrb[0].mxu0
    %172 = vmatprep.mubr.f32.mxu0 0.0
    %173 = vmatmul.mubr.f32.gmra.mrb[0].mxu0 %v92
    %v174 = vpop.f32.mrb[0].mxu0
    %v175 = vadd.f32 %v83, %v174
    %v176 = vpop.f32.mrb[0].mxu0
    %177 = vmatprep.mubr.f32.mxu0 0.0
    %178 = vmatmul.mubr.f32.gmra.mrb[0].mxu0 %v95
    %v179 = vpop.f32.mrb[0].mxu0
    %v180 = vadd.f32 %v84, %v179
    %v181 = vpop.f32.mrb[0].mxu0
    %182 = vmatprep.mubr.f32.mxu0 0.0
    %183 = vmatmul.mubr.f32.gmra.mrb[0].mxu0 %v98
    %v184 = vpop.f32.mrb[0].mxu0
    %v185 = vadd.f32 %v85, %v184
    %v186 = vpop.f32.mrb[0].mxu0
    %187 = vmatprep.mubr.f32.mxu0 0.0
    %188 = vmatmul.mubr.f32.gmra.mrb[0].mxu0 %v101
    %v189 = vpop.f32.mrb[0].mxu0
    %v190 = vadd.f32 %v86, %v189
    %v191 = vpop.f32.mrb[0].mxu0
    %192 = vdwg.mxu0
    %v193 = vld [vmem:[%s3] sm:$0xff]
    %v194 = vld [vmem:[%s3 + $0x8] sm:$0xff]
    %v195 = vld [vmem:[%s3 + $0x10] sm:$0xff]
    %v196 = vld [vmem:[%s3 + $0x18] sm:$0xff]
    %v197 = vld [vmem:[%s3 + $0x20] sm:$0x3]
    %v198 = vld [vmem:[%s5] sm:$0x1]
    %v199 = vld [vmem:[%s6] sm:$0x1]
    %vm200 = vcmask 261120
    %v201 = vsel %vm200, %v170, 0.0
    %202 = vadd.xlane.f32.xlu0 %v201
    %v203 = vpop.xlane.xlu0 %202
    %v204 = vsel %vm200, %v175, 0.0
    %205 = vadd.xlane.f32.xlu0 %v204
    %v206 = vpop.xlane.xlu0 %205
    %v207 = vsel %vm200, %v180, 0.0
    %208 = vadd.xlane.f32.xlu0 %v207
    %v209 = vpop.xlane.xlu0 %208
    %v210 = vsel %vm200, %v185, 0.0
    %211 = vadd.xlane.f32.xlu0 %v210
    %v212 = vpop.xlane.xlu0 %211
    %vm213 = vcmask 254976
    %v214 = vsel %vm213, %v190, 0.0
    %215 = vadd.xlane.f32.xlu0 %v214
    %v216 = vpop.xlane.xlu0 %215
    %v217 = vrcp.pop 32.0
    %v218 = vmul.f32 %v203, %v217
    %v219 = vmul.f32 %v206, %v217
    %v220 = vmul.f32 %v209, %v217
    %v221 = vmul.f32 %v212, %v217
    %v222 = vmul.f32 %v216, %v217
    %v223 = vsub.f32 %v170, %v218
    %v224 = vsub.f32 %v175, %v219
    %v225 = vsub.f32 %v180, %v220
    %v226 = vsub.f32 %v185, %v221
    %v227 = vsub.f32 %v190, %v222
    %v228 = vmul.f32 %v223, %v223
    %v229 = vmul.f32 %v224, %v224
    %v230 = vmul.f32 %v225, %v225
    %v231 = vmul.f32 %v226, %v226
    %v232 = vmul.f32 %v227, %v227
    %v233 = vsel %vm200, %v228, 0.0
    %234 = vadd.xlane.f32.xlu0 %v233
    %v235 = vpop.xlane.xlu0 %234
    %v236 = vsel %vm200, %v229, 0.0
    %237 = vadd.xlane.f32.xlu0 %v236
    %v238 = vpop.xlane.xlu0 %237
    %v239 = vsel %vm200, %v230, 0.0
    %240 = vadd.xlane.f32.xlu0 %v239
    %v241 = vpop.xlane.xlu0 %240
    %v242 = vsel %vm200, %v231, 0.0
    %243 = vadd.xlane.f32.xlu0 %v242
    %v244 = vpop.xlane.xlu0 %243
    %v245 = vsel %vm213, %v232, 0.0
    %246 = vadd.xlane.f32.xlu0 %v245
    %v247 = vpop.xlane.xlu0 %246
    %v248 = vmul.f32 %v235, %v217
    %v249 = vmul.f32 %v238, %v217
    %v250 = vmul.f32 %v241, %v217
    %v251 = vmul.f32 %v244, %v217
    %v252 = vmul.f32 %v247, %v217
    %v253 = vadd.f32 %v248, 1e-05
    %v254 = vadd.f32 %v249, 1e-05
    %v255 = vadd.f32 %v250, 1e-05
    %v256 = vadd.f32 %v251, 1e-05
    %v257 = vadd.f32 %v252, 1e-05
    %v258 = vrsqrt.pop %v253
    %v259 = vrsqrt.pop %v254
    %v260 = vrsqrt.pop %v255
    %v261 = vrsqrt.pop %v256
    %v262 = vrsqrt.pop %v257
    %v263 = vmul.f32 %v223, %v258
    %v264 = vmul.f32 %v224, %v259
    %v265 = vmul.f32 %v225, %v260
    %v266 = vmul.f32 %v226, %v261
    %v267 = vmul.f32 %v227, %v262
    %v269 = vlaneseq
    %v270 = vshrl.u32 %v269, 7
    %v271 = vsub.s32 0, %v270
    %v272 = vrot.slane %v198, %v271
    %v274 = vmul.f32 %v263, %v272
    %v275 = vmul.f32 %v264, %v272
    %v276 = vmul.f32 %v265, %v272
    %v277 = vmul.f32 %v266, %v272
    %v278 = vmul.f32 %v267, %v272
    %v280 = vlaneseq
    %v281 = vshrl.u32 %v280, 7
    %v282 = vsub.s32 0, %v281
    %v283 = vrot.slane %v199, %v282
    %v285 = vadd.f32 %v274, %v283
    %v286 = vadd.f32 %v275, %v283
    %v287 = vadd.f32 %v276, %v283
    %v288 = vadd.f32 %v277, %v283
    %v289 = vadd.f32 %v278, %v283
    %v290 = vld [vmem:[%s7] sm:$0xff]
    %v291 = vld [vmem:[%s7 + $0x8] sm:$0xff]
    %v292 = vld [vmem:[%s7 + $0x10] sm:$0xff]
    %v293 = vld [vmem:[%s7 + $0x18] sm:$0xff]
    %v294 = vld [vmem:[%s8] sm:$0x1]
    %v296 = vlaneseq
    %v297 = vshrl.u32 %v296, 7
    %v298 = vsub.s32 0, %v297
    %v299 = vrot.slane %v294, %v298
    %v302 = vsel %vm200, %v285, 0
    %v305 = vsel %vm200, %v286, 0
    %v308 = vsel %vm200, %v287, 0
    %v311 = vsel %vm200, %v288, 0
    %v314 = vsel %vm200, %v289, 0
    %316 = vmatprep.subr.mxu0 0.0
    %317 = vmatpush1.msra.mxu0 %v290
    %318 = vmatprep.subr.mxu0 0.0
    %319 = vmatpush1.msra.mxu0 %v291
    %320 = vmatprep.subr.mxu0 0.0
    %321 = vmatpush1.msra.mxu0 %v292
    %322 = vmatprep.subr.mxu0 0.0
    %323 = vmatpush1.msra.mxu0 %v293
    %324 = vmatprep.subr.mxu0 0.0
    %325 = vmatpush1.msra.mxu0 0.0
    %326 = vmatprep.subr.mxu0 0.0
    %327 = vmatpush1.msra.mxu0 0.0
    %328 = vmatprep.subr.mxu0 0.0
    %329 = vmatpush1.msra.mxu0 0.0
    %330 = vmatprep.subr.mxu0 0.0
    %331 = vmatpush1.msra.mxu0 0.0
    %332 = vmatprep.subr.mxu0 0.0
    %333 = vmatpush1.msra.mxu0 0.0
    %334 = vmatprep.subr.mxu0 0.0
    %335 = vmatpush1.msra.mxu0 0.0
    %336 = vmatprep.subr.mxu0 0.0
    %337 = vmatpush1.msra.mxu0 0.0
    %338 = vmatprep.subr.mxu0 0.0
    %339 = vmatpush1.msra.mxu0 0.0
    %340 = vmatprep.subr.mxu0 0.0
    %341 = vmatpush1.msra.mxu0 0.0
    %342 = vmatprep.subr.mxu0 0.0
    %343 = vmatpush1.msra.mxu0 0.0
    %344 = vmatprep.subr.mxu0 0.0
    %345 = vmatpush1.msra.mxu0 0.0
    %346 = vmatprep.subr.mxu0 0.0
    %347 = vmatpush1.msra.mxu0 0.0
    %348 = vmatprep.subr.mxu0 0.0
    %349 = vmatpush1.msra.mxu0 0.0
    %350 = vmatprep.subr.mxu0 0.0
    %351 = vmatpush1.msra.mxu0 0.0
    %352 = vmatprep.subr.mxu0 0.0
    %353 = vmatpush1.msra.mxu0 0.0
    %354 = vmatprep.subr.mxu0 0.0
    %355 = vmatpush1.msra.mxu0 0.0
    %356 = vmatprep.subr.mxu0 0.0
    %357 = vmatpush1.msra.mxu0 0.0
    %358 = vmatprep.subr.mxu0 0.0
    %359 = vmatpush1.msra.mxu0 0.0
    %360 = vmatprep.subr.mxu0 0.0
    %361 = vmatpush1.msra.mxu0 0.0
    %362 = vmatprep.subr.mxu0 0.0
    %363 = vmatpush1.msra.mxu0 0.0
    %364 = vmatprep.subr.mxu0 0.0
    %365 = vmatpush1.msra.mxu0 0.0
    %366 = vmatprep.subr.mxu0 0.0
    %367 = vmatpush1.msra.mxu0 0.0
    %368 = vmatprep.subr.mxu0 0.0
    %369 = vmatpush1.msra.mxu0 0.0
    %370 = vmatprep.subr.mxu0 0.0
    %371 = vmatpush1.msra.mxu0 0.0
    %372 = vmatprep.subr.mxu0 0.0
    %373 = vmatpush1.msra.mxu0 0.0
    %374 = vmatprep.subr.mxu0 0.0
    %375 = vmatpush1.msra.mxu0 0.0
    %376 = vmatprep.subr.mxu0 0.0
    %377 = vmatpush1.msra.mxu0 0.0
    %378 = vmatprep.subr.mxu0 0.0
    %379 = vmatpush1.msra.mxu0 0.0
    %380 = vmatprep.mubr.f32.mxu0 0.0
    %381 = vmatmul.mubr.f32.gmra.mrb[0].mxu0 %v302
    %v382 = vpop.f32.mrb[0].mxu0
    %v383 = vadd.f32 %v299, %v382
    %v384 = vpop.f32.mrb[0].mxu0
    %385 = vmatprep.mubr.f32.mxu0 0.0
    %386 = vmatmul.mubr.f32.gmra.mrb[0].mxu0 %v305
    %v387 = vpop.f32.mrb[0].mxu0
    %v388 = vadd.f32 %v299, %v387
    %v389 = vpop.f32.mrb[0].mxu0
    %390 = vmatprep.mubr.f32.mxu0 0.0
    %391 = vmatmul.mubr.f32.gmra.mrb[0].mxu0 %v308
    %v392 = vpop.f32.mrb[0].mxu0
    %v393 = vadd.f32 %v299, %v392
    %v394 = vpop.f32.mrb[0].mxu0
    %395 = vmatprep.mubr.f32.mxu0 0.0
    %396 = vmatmul.mubr.f32.gmra.mrb[0].mxu0 %v311
    %v397 = vpop.f32.mrb[0].mxu0
    %v398 = vadd.f32 %v299, %v397
    %v399 = vpop.f32.mrb[0].mxu0
    %400 = vmatprep.mubr.f32.mxu0 0.0
    %401 = vmatmul.mubr.f32.gmra.mrb[0].mxu0 %v314
    %v402 = vpop.f32.mrb[0].mxu0
    %v403 = vadd.f32 %v299, %v402
    %v404 = vpop.f32.mrb[0].mxu0
    %405 = vdwg.mxu0
    %v406 = vld [vmem:[%s9] sm:$0xff]
    %v407 = vld [vmem:[%s9 + $0x8] sm:$0xff]
    %v408 = vld [vmem:[%s9 + $0x10] sm:$0xff]
    %v409 = vld [vmem:[%s9 + $0x18] sm:$0xff]
    %415 = vrot.lane.b32.xlu0 %v383, 96
    %v416 = vpop.permute.xlu0 %415
    %417 = vrot.lane.b32.xlu0 %v388, 96
    %v418 = vpop.permute.xlu0 %417
    %419 = vrot.lane.b32.xlu0 %v393, 96
    %v420 = vpop.permute.xlu0 %419
    %421 = vrot.lane.b32.xlu0 %v398, 96
    %v422 = vpop.permute.xlu0 %421
    %423 = vrot.lane.b32.xlu0 %v403, 96
    %v424 = vpop.permute.xlu0 %423
    %vm425 = vcmask 64512
    %v426 = vsel %vm425, %v383, 0
    %v428 = vsel %vm425, %v388, 0
    %v430 = vsel %vm425, %v393, 0
    %v432 = vsel %vm425, %v398, 0
    %v434 = vsel %vm425, %v403, 0
    %v436 = vsel %vm425, %v416, 0
    %v438 = vsel %vm425, %v418, 0
    %v440 = vsel %vm425, %v420, 0
    %v442 = vsel %vm425, %v422, 0
    %v444 = vsel %vm425, %v424, 0
    %446 = vmatprep.subr.mxu0 0.0
    %447 = vmatpush1.xpose.msra.mxu0 %v436
    %448 = vmatprep.subr.mxu0 0.0
    %449 = vmatpush1.xpose.msra.mxu0 %v438
    %450 = vmatprep.subr.mxu0 0.0
    %451 = vmatpush1.xpose.msra.mxu0 %v440
    %452 = vmatprep.subr.mxu0 0.0
    %453 = vmatpush1.xpose.msra.mxu0 %v442
    %454 = vmatprep.subr.mxu0 0.0
    %455 = vmatpush1.xpose.msra.mxu0 %v444
    %456 = vmatprep.subr.mxu0 0.0
    %457 = vmatpush1.xpose.msra.mxu0 0.0
    %458 = vmatprep.subr.mxu0 0.0
    %459 = vmatpush1.xpose.msra.mxu0 0.0
    %460 = vmatprep.subr.mxu0 0.0
    %461 = vmatpush1.xpose.msra.mxu0 0.0
    %462 = vmatprep.subr.mxu0 0.0
    %463 = vmatpush1.xpose.msra.mxu0 0.0
    %464 = vmatprep.subr.mxu0 0.0
    %465 = vmatpush1.xpose.msra.mxu0 0.0
    %466 = vmatprep.subr.mxu0 0.0
    %467 = vmatpush1.xpose.msra.mxu0 0.0
    %468 = vmatprep.subr.mxu0 0.0
    %469 = vmatpush1.xpose.msra.mxu0 0.0
    %470 = vmatprep.subr.mxu0 0.0
    %471 = vmatpush1.xpose.msra.mxu0 0.0
    %472 = vmatprep.subr.mxu0 0.0
    %473 = vmatpush1.xpose.msra.mxu0 0.0
    %474 = vmatprep.subr.mxu0 0.0
    %475 = vmatpush1.xpose.msra.mxu0 0.0
    %476 = vmatprep.subr.mxu0 0.0
    %477 = vmatpush1.xpose.msra.mxu0 0.0
    %478 = vmatprep.subr.mxu0 0.0
    %479 = vmatpush1.xpose.msra.mxu0 0.0
    %480 = vmatprep.subr.mxu0 0.0
    %481 = vmatpush1.xpose.msra.mxu0 0.0
    %482 = vmatprep.subr.mxu0 0.0
    %483 = vmatpush1.xpose.msra.mxu0 0.0
    %484 = vmatprep.subr.mxu0 0.0
    %485 = vmatpush1.xpose.msra.mxu0 0.0
    %486 = vmatprep.subr.mxu0 0.0
    %487 = vmatpush1.xpose.msra.mxu0 0.0
    %488 = vmatprep.subr.mxu0 0.0
    %489 = vmatpush1.xpose.msra.mxu0 0.0
    %490 = vmatprep.subr.mxu0 0.0
    %491 = vmatpush1.xpose.msra.mxu0 0.0
    %492 = vmatprep.subr.mxu0 0.0
    %493 = vmatpush1.xpose.msra.mxu0 0.0
    %494 = vmatprep.subr.mxu0 0.0
    %495 = vmatpush1.xpose.msra.mxu0 0.0
    %496 = vmatprep.subr.mxu0 0.0
    %497 = vmatpush1.xpose.msra.mxu0 0.0
    %498 = vmatprep.subr.mxu0 0.0
    %499 = vmatpush1.xpose.msra.mxu0 0.0
    %500 = vmatprep.subr.mxu0 0.0
    %501 = vmatpush1.xpose.msra.mxu0 0.0
    %502 = vmatprep.subr.mxu0 0.0
    %503 = vmatpush1.xpose.msra.mxu0 0.0
    %504 = vmatprep.subr.mxu0 0.0
    %505 = vmatpush1.xpose.msra.mxu0 0.0
    %506 = vmatprep.subr.mxu0 0.0
    %507 = vmatpush1.xpose.msra.mxu0 0.0
    %508 = vmatprep.subr.mxu0 0.0
    %509 = vmatpush1.xpose.msra.mxu0 0.0
    %510 = vmatprep.mubr.f32.mxu0 0.0
    %511 = vmatmul.mubr.f32.gmra.mrb[0].mxu0 %v426
    %v512 = vpop.f32.mrb[0].mxu0
    %v513 = vadd.f32 %v193, %v512
    %v514 = vpop.f32.mrb[0].mxu0
    %515 = vmatprep.mubr.f32.mxu0 0.0
    %516 = vmatmul.mubr.f32.gmra.mrb[0].mxu0 %v428
    %v517 = vpop.f32.mrb[0].mxu0
    %v518 = vadd.f32 %v194, %v517
    %v519 = vpop.f32.mrb[0].mxu0
    %520 = vmatprep.mubr.f32.mxu0 0.0
    %521 = vmatmul.mubr.f32.gmra.mrb[0].mxu0 %v430
    %v522 = vpop.f32.mrb[0].mxu0
    %v523 = vadd.f32 %v195, %v522
    %v524 = vpop.f32.mrb[0].mxu0
    %525 = vmatprep.mubr.f32.mxu0 0.0
    %526 = vmatmul.mubr.f32.gmra.mrb[0].mxu0 %v432
    %v527 = vpop.f32.mrb[0].mxu0
    %v528 = vadd.f32 %v196, %v527
    %v529 = vpop.f32.mrb[0].mxu0
    %530 = vmatprep.mubr.f32.mxu0 0.0
    %531 = vmatmul.mubr.f32.gmra.mrb[0].mxu0 %v434
    %v532 = vpop.f32.mrb[0].mxu0
    %v533 = vadd.f32 %v197, %v532
    %v534 = vpop.f32.mrb[0].mxu0
    %535 = vdwg.mxu0
    %vm536 = vcmask 277504
    %v537 = vsel %vm536, %v513, -inf
    %538 = vmax.xlane.f32.xlu0 %v537
    %v539 = vpop.xlane.xlu0 %538
    %v540 = vsel %vm536, %v518, -inf
    %541 = vmax.xlane.f32.xlu0 %v540
    %v542 = vpop.xlane.xlu0 %541
    %v543 = vsel %vm536, %v523, -inf
    %544 = vmax.xlane.f32.xlu0 %v543
    %v545 = vpop.xlane.xlu0 %544
    %v546 = vsel %vm536, %v528, -inf
    %547 = vmax.xlane.f32.xlu0 %v546
    %v548 = vpop.xlane.xlu0 %547
    %vm549 = vcmask 271360
    %v550 = vsel %vm549, %v533, -inf
    %551 = vmax.xlane.f32.xlu0 %v550
    %v552 = vpop.xlane.xlu0 %551
    %v553 = vsub.f32 %v513, %v539
    %v554 = vsub.f32 %v518, %v542
    %v555 = vsub.f32 %v523, %v545
    %v556 = vsub.f32 %v528, %v548
    %v557 = vsub.f32 %v533, %v552
    %v558 = vmul.f32 %v553, 1.442695
    %v559 = vpow.pop %v558
    %v560 = vmul.f32 %v554, 1.442695
    %v561 = vpow.pop %v560
    %v562 = vmul.f32 %v555, 1.442695
    %v563 = vpow.pop %v562
    %v564 = vmul.f32 %v556, 1.442695
    %v565 = vpow.pop %v564
    %v566 = vmul.f32 %v557, 1.442695
    %v567 = vpow.pop %v566
    %v568 = vsel %vm536, %v559, 0.0
    %569 = vadd.xlane.f32.xlu0 %v568
    %v570 = vpop.xlane.xlu0 %569
    %v571 = vsel %vm536, %v561, 0.0
    %572 = vadd.xlane.f32.xlu0 %v571
    %v573 = vpop.xlane.xlu0 %572
    %v574 = vsel %vm536, %v563, 0.0
    %575 = vadd.xlane.f32.xlu0 %v574
    %v576 = vpop.xlane.xlu0 %575
    %v577 = vsel %vm536, %v565, 0.0
    %578 = vadd.xlane.f32.xlu0 %v577
    %v579 = vpop.xlane.xlu0 %578
    %v580 = vsel %vm549, %v567, 0.0
    %581 = vadd.xlane.f32.xlu0 %v580
    %v582 = vpop.xlane.xlu0 %581
    %v583 = vrcp.pop %v570
    %v584 = vmul.f32 %v559, %v583
    %v585 = vrcp.pop %v573
    %v586 = vmul.f32 %v561, %v585
    %v587 = vrcp.pop %v576
    %v588 = vmul.f32 %v563, %v587
    %v589 = vrcp.pop %v579
    %v590 = vmul.f32 %v565, %v589
    %v591 = vrcp.pop %v582
    %v592 = vmul.f32 %v567, %v591
    %593 = vrot.lane.b32.xlu0 %v383, 64
    %v594 = vpop.permute.xlu0 %593
    %595 = vrot.lane.b32.xlu0 %v388, 64
    %v596 = vpop.permute.xlu0 %595
    %597 = vrot.lane.b32.xlu0 %v393, 64
    %v598 = vpop.permute.xlu0 %597
    %599 = vrot.lane.b32.xlu0 %v398, 64
    %v600 = vpop.permute.xlu0 %599
    %601 = vrot.lane.b32.xlu0 %v403, 64
    %v602 = vpop.permute.xlu0 %601
    %v608 = vsel %vm536, %v584, 0
    %v611 = vsel %vm536, %v586, 0
    %v614 = vsel %vm536, %v588, 0
    %v617 = vsel %vm536, %v590, 0
    %v620 = vsel %vm536, %v592, 0
    %vm622 = vcmask 1041408
    %v623 = vsel %vm622, %v602, 0
    %625 = vmatprep.subr.mxu0 0.0
    %626 = vmatpush1.msra.mxu0 %v594
    %627 = vmatprep.subr.mxu0 0.0
    %628 = vmatpush1.msra.mxu0 %v596
    %629 = vmatprep.subr.mxu0 0.0
    %630 = vmatpush1.msra.mxu0 %v598
    %631 = vmatprep.subr.mxu0 0.0
    %632 = vmatpush1.msra.mxu0 %v600
    %633 = vmatprep.subr.mxu0 0.0
    %634 = vmatpush1.msra.mxu0 %v623
    %635 = vmatprep.subr.mxu0 0.0
    %636 = vmatpush1.msra.mxu0 0.0
    %637 = vmatprep.subr.mxu0 0.0
    %638 = vmatpush1.msra.mxu0 0.0
    %639 = vmatprep.subr.mxu0 0.0
    %640 = vmatpush1.msra.mxu0 0.0
    %641 = vmatprep.subr.mxu0 0.0
    %642 = vmatpush1.msra.mxu0 0.0
    %643 = vmatprep.subr.mxu0 0.0
    %644 = vmatpush1.msra.mxu0 0.0
    %645 = vmatprep.subr.mxu0 0.0
    %646 = vmatpush1.msra.mxu0 0.0
    %647 = vmatprep.subr.mxu0 0.0
    %648 = vmatpush1.msra.mxu0 0.0
    %649 = vmatprep.subr.mxu0 0.0
    %650 = vmatpush1.msra.mxu0 0.0
    %651 = vmatprep.subr.mxu0 0.0
    %652 = vmatpush1.msra.mxu0 0.0
    %653 = vmatprep.subr.mxu0 0.0
    %654 = vmatpush1.msra.mxu0 0.0
    %655 = vmatprep.subr.mxu0 0.0
    %656 = vmatpush1.msra.mxu0 0.0
    %657 = vmatprep.subr.mxu0 0.0
    %658 = vmatpush1.msra.mxu0 0.0
    %659 = vmatprep.subr.mxu0 0.0
    %660 = vmatpush1.msra.mxu0 0.0
    %661 = vmatprep.subr.mxu0 0.0
    %662 = vmatpush1.msra.mxu0 0.0
    %663 = vmatprep.subr.mxu0 0.0
    %664 = vmatpush1.msra.mxu0 0.0
    %665 = vmatprep.subr.mxu0 0.0
    %666 = vmatpush1.msra.mxu0 0.0
    %667 = vmatprep.subr.mxu0 0.0
    %668 = vmatpush1.msra.mxu0 0.0
    %669 = vmatprep.subr.mxu0 0.0
    %670 = vmatpush1.msra.mxu0 0.0
    %671 = vmatprep.subr.mxu0 0.0
    %672 = vmatpush1.msra.mxu0 0.0
    %673 = vmatprep.subr.mxu0 0.0
    %674 = vmatpush1.msra.mxu0 0.0
    %675 = vmatprep.subr.mxu0 0.0
    %676 = vmatpush1.msra.mxu0 0.0
    %677 = vmatprep.subr.mxu0 0.0
    %678 = vmatpush1.msra.mxu0 0.0
    %679 = vmatprep.subr.mxu0 0.0
    %680 = vmatpush1.msra.mxu0 0.0
    %681 = vmatprep.subr.mxu0 0.0
    %682 = vmatpush1.msra.mxu0 0.0
    %683 = vmatprep.subr.mxu0 0.0
    %684 = vmatpush1.msra.mxu0 0.0
    %685 = vmatprep.subr.mxu0 0.0
    %686 = vmatpush1.msra.mxu0 0.0
    %687 = vmatprep.subr.mxu0 0.0
    %688 = vmatpush1.msra.mxu0 0.0
    %689 = vmatprep.mubr.f32.mxu0 0.0
    %690 = vmatmul.mubr.f32.gmra.mrb[0].mxu0 %v608
    %v691 = vpop.f32.mrb[0].mxu0
    %v692 = vadd.f32 0.0, %v691
    %v693 = vpop.f32.mrb[0].mxu0
    %694 = vmatprep.mubr.f32.mxu0 0.0
    %695 = vmatmul.mubr.f32.gmra.mrb[0].mxu0 %v611
    %v696 = vpop.f32.mrb[0].mxu0
    %v697 = vadd.f32 0.0, %v696
    %v698 = vpop.f32.mrb[0].mxu0
    %699 = vmatprep.mubr.f32.mxu0 0.0
    %700 = vmatmul.mubr.f32.gmra.mrb[0].mxu0 %v614
    %v701 = vpop.f32.mrb[0].mxu0
    %v702 = vadd.f32 0.0, %v701
    %v703 = vpop.f32.mrb[0].mxu0
    %704 = vmatprep.mubr.f32.mxu0 0.0
    %705 = vmatmul.mubr.f32.gmra.mrb[0].mxu0 %v617
    %v706 = vpop.f32.mrb[0].mxu0
    %v707 = vadd.f32 0.0, %v706
    %v708 = vpop.f32.mrb[0].mxu0
    %709 = vmatprep.mubr.f32.mxu0 0.0
    %710 = vmatmul.mubr.f32.gmra.mrb[0].mxu0 %v620
    %v711 = vpop.f32.mrb[0].mxu0
    %v712 = vadd.f32 0.0, %v711
    %v713 = vpop.f32.mrb[0].mxu0
    %714 = vdwg.mxu0
    %715 = vrot.lane.b32.xlu0 %v383, 120
    %v716 = vpop.permute.xlu0 %715
    %717 = vrot.lane.b32.xlu0 %v388, 120
    %v718 = vpop.permute.xlu0 %717
    %719 = vrot.lane.b32.xlu0 %v393, 120
    %v720 = vpop.permute.xlu0 %719
    %721 = vrot.lane.b32.xlu0 %v398, 120
    %v722 = vpop.permute.xlu0 %721
    %723 = vrot.lane.b32.xlu0 %v403, 120
    %v724 = vpop.permute.xlu0 %723
    %725 = vrot.lane.b32.xlu0 %v383, 88
    %v726 = vpop.permute.xlu0 %725
    %727 = vrot.lane.b32.xlu0 %v388, 88
    %v728 = vpop.permute.xlu0 %727
    %729 = vrot.lane.b32.xlu0 %v393, 88
    %v730 = vpop.permute.xlu0 %729
    %731 = vrot.lane.b32.xlu0 %v398, 88
    %v732 = vpop.permute.xlu0 %731
    %733 = vrot.lane.b32.xlu0 %v403, 88
    %v734 = vpop.permute.xlu0 %733
    %v735 = vsel %vm425, %v716, 0
    %v737 = vsel %vm425, %v718, 0
    %v739 = vsel %vm425, %v720, 0
    %v741 = vsel %vm425, %v722, 0
    %v743 = vsel %vm425, %v724, 0
    %v745 = vsel %vm425, %v726, 0
    %v747 = vsel %vm425, %v728, 0
    %v749 = vsel %vm425, %v730, 0
    %v751 = vsel %vm425, %v732, 0
    %v753 = vsel %vm425, %v734, 0
    %755 = vmatprep.subr.mxu0 0.0
    %756 = vmatpush1.xpose.msra.mxu0 %v745
    %757 = vmatprep.subr.mxu0 0.0
    %758 = vmatpush1.xpose.msra.mxu0 %v747
    %759 = vmatprep.subr.mxu0 0.0
    %760 = vmatpush1.xpose.msra.mxu0 %v749
    %761 = vmatprep.subr.mxu0 0.0
    %762 = vmatpush1.xpose.msra.mxu0 %v751
    %763 = vmatprep.subr.mxu0 0.0
    %764 = vmatpush1.xpose.msra.mxu0 %v753
    %765 = vmatprep.subr.mxu0 0.0
    %766 = vmatpush1.xpose.msra.mxu0 0.0
    %767 = vmatprep.subr.mxu0 0.0
    %768 = vmatpush1.xpose.msra.mxu0 0.0
    %769 = vmatprep.subr.mxu0 0.0
    %770 = vmatpush1.xpose.msra.mxu0 0.0
    %771 = vmatprep.subr.mxu0 0.0
    %772 = vmatpush1.xpose.msra.mxu0 0.0
    %773 = vmatprep.subr.mxu0 0.0
    %774 = vmatpush1.xpose.msra.mxu0 0.0
    %775 = vmatprep.subr.mxu0 0.0
    %776 = vmatpush1.xpose.msra.mxu0 0.0
    %777 = vmatprep.subr.mxu0 0.0
    %778 = vmatpush1.xpose.msra.mxu0 0.0
    %779 = vmatprep.subr.mxu0 0.0
    %780 = vmatpush1.xpose.msra.mxu0 0.0
    %781 = vmatprep.subr.mxu0 0.0
    %782 = vmatpush1.xpose.msra.mxu0 0.0
    %783 = vmatprep.subr.mxu0 0.0
    %784 = vmatpush1.xpose.msra.mxu0 0.0
    %785 = vmatprep.subr.mxu0 0.0
    %786 = vmatpush1.xpose.msra.mxu0 0.0
    %787 = vmatprep.subr.mxu0 0.0
    %788 = vmatpush1.xpose.msra.mxu0 0.0
    %789 = vmatprep.subr.mxu0 0.0
    %790 = vmatpush1.xpose.msra.mxu0 0.0
    %791 = vmatprep.subr.mxu0 0.0
    %792 = vmatpush1.xpose.msra.mxu0 0.0
    %793 = vmatprep.subr.mxu0 0.0
    %794 = vmatpush1.xpose.msra.mxu0 0.0
    %795 = vmatprep.subr.mxu0 0.0
    %796 = vmatpush1.xpose.msra.mxu0 0.0
    %797 = vmatprep.subr.mxu0 0.0
    %798 = vmatpush1.xpose.msra.mxu0 0.0
    %799 = vmatprep.subr.mxu0 0.0
    %800 = vmatpush1.xpose.msra.mxu0 0.0
    %801 = vmatprep.subr.mxu0 0.0
    %802 = vmatpush1.xpose.msra.mxu0 0.0
    %803 = vmatprep.subr.mxu0 0.0
    %804 = vmatpush1.xpose.msra.mxu0 0.0
    %805 = vmatprep.subr.mxu0 0.0
    %806 = vmatpush1.xpose.msra.mxu0 0.0
    %807 = vmatprep.subr.mxu0 0.0
    %808 = vmatpush1.xpose.msra.mxu0 0.0
    %809 = vmatprep.subr.mxu0 0.0
    %810 = vmatpush1.xpose.msra.mxu0 0.0
    %811 = vmatprep.subr.mxu0 0.0
    %812 = vmatpush1.xpose.msra.mxu0 0.0
    %813 = vmatprep.subr.mxu0 0.0
    %814 = vmatpush1.xpose.msra.mxu0 0.0
    %815 = vmatprep.subr.mxu0 0.0
    %816 = vmatpush1.xpose.msra.mxu0 0.0
    %817 = vmatprep.subr.mxu0 0.0
    %818 = vmatpush1.xpose.msra.mxu0 0.0
    %819 = vmatprep.mubr.f32.mxu0 0.0
    %820 = vmatmul.mubr.f32.gmra.mrb[0].mxu0 %v735
    %v821 = vpop.f32.mrb[0].mxu0
    %v822 = vadd.f32 %v193, %v821
    %v823 = vpop.f32.mrb[0].mxu0
    %824 = vmatprep.mubr.f32.mxu0 0.0
    %825 = vmatmul.mubr.f32.gmra.mrb[0].mxu0 %v737
    %v826 = vpop.f32.mrb[0].mxu0
    %v827 = vadd.f32 %v194, %v826
    %v828 = vpop.f32.mrb[0].mxu0
    %829 = vmatprep.mubr.f32.mxu0 0.0
    %830 = vmatmul.mubr.f32.gmra.mrb[0].mxu0 %v739
    %v831 = vpop.f32.mrb[0].mxu0
    %v832 = vadd.f32 %v195, %v831
    %v833 = vpop.f32.mrb[0].mxu0
    %834 = vmatprep.mubr.f32.mxu0 0.0
    %835 = vmatmul.mubr.f32.gmra.mrb[0].mxu0 %v741
    %v836 = vpop.f32.mrb[0].mxu0
    %v837 = vadd.f32 %v196, %v836
    %v838 = vpop.f32.mrb[0].mxu0
    %839 = vmatprep.mubr.f32.mxu0 0.0
    %840 = vmatmul.mubr.f32.gmra.mrb[0].mxu0 %v743
    %v841 = vpop.f32.mrb[0].mxu0
    %v842 = vadd.f32 %v197, %v841
    %v843 = vpop.f32.mrb[0].mxu0
    %844 = vdwg.mxu0
    %v845 = vsel %vm536, %v822, -inf
    %846 = vmax.xlane.f32.xlu0 %v845
    %v847 = vpop.xlane.xlu0 %846
    %v848 = vsel %vm536, %v827, -inf
    %849 = vmax.xlane.f32.xlu0 %v848
    %v850 = vpop.xlane.xlu0 %849
    %v851 = vsel %vm536, %v832, -inf
    %852 = vmax.xlane.f32.xlu0 %v851
    %v853 = vpop.xlane.xlu0 %852
    %v854 = vsel %vm536, %v837, -inf
    %855 = vmax.xlane.f32.xlu0 %v854
    %v856 = vpop.xlane.xlu0 %855
    %v857 = vsel %vm549, %v842, -inf
    %858 = vmax.xlane.f32.xlu0 %v857
    %v859 = vpop.xlane.xlu0 %858
    %v860 = vsub.f32 %v822, %v847
    %v861 = vsub.f32 %v827, %v850
    %v862 = vsub.f32 %v832, %v853
    %v863 = vsub.f32 %v837, %v856
    %v864 = vsub.f32 %v842, %v859
    %v865 = vmul.f32 %v860, 1.442695
    %v866 = vpow.pop %v865
    %v867 = vmul.f32 %v861, 1.442695
    %v868 = vpow.pop %v867
    %v869 = vmul.f32 %v862, 1.442695
    %v870 = vpow.pop %v869
    %v871 = vmul.f32 %v863, 1.442695
    %v872 = vpow.pop %v871
    %v873 = vmul.f32 %v864, 1.442695
    %v874 = vpow.pop %v873
    %v875 = vsel %vm536, %v866, 0.0
    %876 = vadd.xlane.f32.xlu0 %v875
    %v877 = vpop.xlane.xlu0 %876
    %v878 = vsel %vm536, %v868, 0.0
    %879 = vadd.xlane.f32.xlu0 %v878
    %v880 = vpop.xlane.xlu0 %879
    %v881 = vsel %vm536, %v870, 0.0
    %882 = vadd.xlane.f32.xlu0 %v881
    %v883 = vpop.xlane.xlu0 %882
    %v884 = vsel %vm536, %v872, 0.0
    %885 = vadd.xlane.f32.xlu0 %v884
    %v886 = vpop.xlane.xlu0 %885
    %v887 = vsel %vm549, %v874, 0.0
    %888 = vadd.xlane.f32.xlu0 %v887
    %v889 = vpop.xlane.xlu0 %888
    %v890 = vrcp.pop %v877
    %v891 = vmul.f32 %v866, %v890
    %v892 = vrcp.pop %v880
    %v893 = vmul.f32 %v868, %v892
    %v894 = vrcp.pop %v883
    %v895 = vmul.f32 %v870, %v894
    %v896 = vrcp.pop %v886
    %v897 = vmul.f32 %v872, %v896
    %v898 = vrcp.pop %v889
    %v899 = vmul.f32 %v874, %v898
    %900 = vrot.lane.b32.xlu0 %v383, 56
    %v901 = vpop.permute.xlu0 %900
    %902 = vrot.lane.b32.xlu0 %v388, 56
    %v903 = vpop.permute.xlu0 %902
    %904 = vrot.lane.b32.xlu0 %v393, 56
    %v905 = vpop.permute.xlu0 %904
    %906 = vrot.lane.b32.xlu0 %v398, 56
    %v907 = vpop.permute.xlu0 %906
    %908 = vrot.lane.b32.xlu0 %v403, 56
    %v909 = vpop.permute.xlu0 %908
    %v915 = vsel %vm536, %v891, 0
    %v918 = vsel %vm536, %v893, 0
    %v921 = vsel %vm536, %v895, 0
    %v924 = vsel %vm536, %v897, 0
    %v927 = vsel %vm536, %v899, 0
    %v929 = vsel %vm622, %v909, 0
    %931 = vmatprep.subr.mxu0 0.0
    %932 = vmatpush1.msra.mxu0 %v901
    %933 = vmatprep.subr.mxu0 0.0
    %934 = vmatpush1.msra.mxu0 %v903
    %935 = vmatprep.subr.mxu0 0.0
    %936 = vmatpush1.msra.mxu0 %v905
    %937 = vmatprep.subr.mxu0 0.0
    %938 = vmatpush1.msra.mxu0 %v907
    %939 = vmatprep.subr.mxu0 0.0
    %940 = vmatpush1.msra.mxu0 %v929
    %941 = vmatprep.subr.mxu0 0.0
    %942 = vmatpush1.msra.mxu0 0.0
    %943 = vmatprep.subr.mxu0 0.0
    %944 = vmatpush1.msra.mxu0 0.0
    %945 = vmatprep.subr.mxu0 0.0
    %946 = vmatpush1.msra.mxu0 0.0
    %947 = vmatprep.subr.mxu0 0.0
    %948 = vmatpush1.msra.mxu0 0.0
    %949 = vmatprep.subr.mxu0 0.0
    %950 = vmatpush1.msra.mxu0 0.0
    %951 = vmatprep.subr.mxu0 0.0
    %952 = vmatpush1.msra.mxu0 0.0
    %953 = vmatprep.subr.mxu0 0.0
    %954 = vmatpush1.msra.mxu0 0.0
    %955 = vmatprep.subr.mxu0 0.0
    %956 = vmatpush1.msra.mxu0 0.0
    %957 = vmatprep.subr.mxu0 0.0
    %958 = vmatpush1.msra.mxu0 0.0
    %959 = vmatprep.subr.mxu0 0.0
    %960 = vmatpush1.msra.mxu0 0.0
    %961 = vmatprep.subr.mxu0 0.0
    %962 = vmatpush1.msra.mxu0 0.0
    %963 = vmatprep.subr.mxu0 0.0
    %964 = vmatpush1.msra.mxu0 0.0
    %965 = vmatprep.subr.mxu0 0.0
    %966 = vmatpush1.msra.mxu0 0.0
    %967 = vmatprep.subr.mxu0 0.0
    %968 = vmatpush1.msra.mxu0 0.0
    %969 = vmatprep.subr.mxu0 0.0
    %970 = vmatpush1.msra.mxu0 0.0
    %971 = vmatprep.subr.mxu0 0.0
    %972 = vmatpush1.msra.mxu0 0.0
    %973 = vmatprep.subr.mxu0 0.0
    %974 = vmatpush1.msra.mxu0 0.0
    %975 = vmatprep.subr.mxu0 0.0
    %976 = vmatpush1.msra.mxu0 0.0
    %977 = vmatprep.subr.mxu0 0.0
    %978 = vmatpush1.msra.mxu0 0.0
    %979 = vmatprep.subr.mxu0 0.0
    %980 = vmatpush1.msra.mxu0 0.0
    %981 = vmatprep.subr.mxu0 0.0
    %982 = vmatpush1.msra.mxu0 0.0
    %983 = vmatprep.subr.mxu0 0.0
    %984 = vmatpush1.msra.mxu0 0.0
    %985 = vmatprep.subr.mxu0 0.0
    %986 = vmatpush1.msra.mxu0 0.0
    %987 = vmatprep.subr.mxu0 0.0
    %988 = vmatpush1.msra.mxu0 0.0
    %989 = vmatprep.subr.mxu0 0.0
    %990 = vmatpush1.msra.mxu0 0.0
    %991 = vmatprep.subr.mxu0 0.0
    %992 = vmatpush1.msra.mxu0 0.0
    %993 = vmatprep.subr.mxu0 0.0
    %994 = vmatpush1.msra.mxu0 0.0
    %995 = vmatprep.mubr.f32.mxu0 0.0
    %996 = vmatmul.mubr.f32.gmra.mrb[0].mxu0 %v915
    %v997 = vpop.f32.mrb[0].mxu0
    %v998 = vadd.f32 0.0, %v997
    %v999 = vpop.f32.mrb[0].mxu0
    %1000 = vmatprep.mubr.f32.mxu0 0.0
    %1001 = vmatmul.mubr.f32.gmra.mrb[0].mxu0 %v918
    %v1002 = vpop.f32.mrb[0].mxu0
    %v1003 = vadd.f32 0.0, %v1002
    %v1004 = vpop.f32.mrb[0].mxu0
    %1005 = vmatprep.mubr.f32.mxu0 0.0
    %1006 = vmatmul.mubr.f32.gmra.mrb[0].mxu0 %v921
    %v1007 = vpop.f32.mrb[0].mxu0
    %v1008 = vadd.f32 0.0, %v1007
    %v1009 = vpop.f32.mrb[0].mxu0
    %1010 = vmatprep.mubr.f32.mxu0 0.0
    %1011 = vmatmul.mubr.f32.gmra.mrb[0].mxu0 %v924
    %v1012 = vpop.f32.mrb[0].mxu0
    %v1013 = vadd.f32 0.0, %v1012
    %v1014 = vpop.f32.mrb[0].mxu0
    %1015 = vmatprep.mubr.f32.mxu0 0.0
    %1016 = vmatmul.mubr.f32.gmra.mrb[0].mxu0 %v927
    %v1017 = vpop.f32.mrb[0].mxu0
    %v1018 = vadd.f32 0.0, %v1017
    %v1019 = vpop.f32.mrb[0].mxu0
    %1020 = vdwg.mxu0
    %v1022 = vsel %vm425, %v998, 0
    %v1025 = vsel %vm425, %v1003, 0
    %v1028 = vsel %vm425, %v1008, 0
    %v1031 = vsel %vm425, %v1013, 0
    %v1034 = vsel %vm425, %v1018, 0
    %1036 = vmatprep.subr.mxu0 0.0
    %1037 = vmatpush1.msra.mxu0 %v407
    %1038 = vmatprep.subr.mxu0 0.0
    %1039 = vmatpush1.msra.mxu0 0.0
    %1040 = vmatprep.subr.mxu0 0.0
    %1041 = vmatpush1.msra.mxu0 0.0
    %1042 = vmatprep.subr.mxu0 0.0
    %1043 = vmatpush1.msra.mxu0 0.0
    %1044 = vmatprep.subr.mxu0 0.0
    %1045 = vmatpush1.msra.mxu0 0.0
    %1046 = vmatprep.subr.mxu0 0.0
    %1047 = vmatpush1.msra.mxu0 0.0
    %1048 = vmatprep.subr.mxu0 0.0
    %1049 = vmatpush1.msra.mxu0 0.0
    %1050 = vmatprep.subr.mxu0 0.0
    %1051 = vmatpush1.msra.mxu0 0.0
    %1052 = vmatprep.subr.mxu0 0.0
    %1053 = vmatpush1.msra.mxu0 0.0
    %1054 = vmatprep.subr.mxu0 0.0
    %1055 = vmatpush1.msra.mxu0 0.0
    %1056 = vmatprep.subr.mxu0 0.0
    %1057 = vmatpush1.msra.mxu0 0.0
    %1058 = vmatprep.subr.mxu0 0.0
    %1059 = vmatpush1.msra.mxu0 0.0
    %1060 = vmatprep.subr.mxu0 0.0
    %1061 = vmatpush1.msra.mxu0 0.0
    %1062 = vmatprep.subr.mxu0 0.0
    %1063 = vmatpush1.msra.mxu0 0.0
    %1064 = vmatprep.subr.mxu0 0.0
    %1065 = vmatpush1.msra.mxu0 0.0
    %1066 = vmatprep.subr.mxu0 0.0
    %1067 = vmatpush1.msra.mxu0 0.0
    %1068 = vmatprep.subr.mxu0 0.0
    %1069 = vmatpush1.msra.mxu0 0.0
    %1070 = vmatprep.subr.mxu0 0.0
    %1071 = vmatpush1.msra.mxu0 0.0
    %1072 = vmatprep.subr.mxu0 0.0
    %1073 = vmatpush1.msra.mxu0 0.0
    %1074 = vmatprep.subr.mxu0 0.0
    %1075 = vmatpush1.msra.mxu0 0.0
    %1076 = vmatprep.subr.mxu0 0.0
    %1077 = vmatpush1.msra.mxu0 0.0
    %1078 = vmatprep.subr.mxu0 0.0
    %1079 = vmatpush1.msra.mxu0 0.0
    %1080 = vmatprep.subr.mxu0 0.0
    %1081 = vmatpush1.msra.mxu0 0.0
    %1082 = vmatprep.subr.mxu0 0.0
    %1083 = vmatpush1.msra.mxu0 0.0
    %1084 = vmatprep.subr.mxu0 0.0
    %1085 = vmatpush1.msra.mxu0 0.0
    %1086 = vmatprep.subr.mxu0 0.0
    %1087 = vmatpush1.msra.mxu0 0.0
    %1088 = vmatprep.subr.mxu0 0.0
    %1089 = vmatpush1.msra.mxu0 0.0
    %1090 = vmatprep.subr.mxu0 0.0
    %1091 = vmatpush1.msra.mxu0 0.0
    %1092 = vmatprep.subr.mxu0 0.0
    %1093 = vmatpush1.msra.mxu0 0.0
    %1094 = vmatprep.subr.mxu0 0.0
    %1095 = vmatpush1.msra.mxu0 0.0
    %1096 = vmatprep.subr.mxu0 0.0
    %1097 = vmatpush1.msra.mxu0 0.0
    %1098 = vmatprep.subr.mxu0 0.0
    %1099 = vmatpush1.msra.mxu0 0.0
    %1100 = vmatprep.mubr.f32.mxu0 0.0
    %1101 = vmatmul.mubr.f32.gmra.mrb[0].mxu0 %v1022
    %v1102 = vpop.f32.mrb[0].mxu0
    %v1103 = vadd.f32 0.0, %v1102
    %v1104 = vpop.f32.mrb[0].mxu0
    %1105 = vmatprep.mubr.f32.mxu0 0.0
    %1106 = vmatmul.mubr.f32.gmra.mrb[0].mxu0 %v1025
    %v1107 = vpop.f32.mrb[0].mxu0
    %v1108 = vadd.f32 0.0, %v1107
    %v1109 = vpop.f32.mrb[0].mxu0
    %1110 = vmatprep.mubr.f32.mxu0 0.0
    %1111 = vmatmul.mubr.f32.gmra.mrb[0].mxu0 %v1028
    %v1112 = vpop.f32.mrb[0].mxu0
    %v1113 = vadd.f32 0.0, %v1112
    %v1114 = vpop.f32.mrb[0].mxu0
    %1115 = vmatprep.mubr.f32.mxu0 0.0
    %1116 = vmatmul.mubr.f32.gmra.mrb[0].mxu0 %v1031
    %v1117 = vpop.f32.mrb[0].mxu0
    %v1118 = vadd.f32 0.0, %v1117
    %v1119 = vpop.f32.mrb[0].mxu0
    %1120 = vmatprep.mubr.f32.mxu0 0.0
    %1121 = vmatmul.mubr.f32.gmra.mrb[0].mxu0 %v1034
    %v1122 = vpop.f32.mrb[0].mxu0
    %v1123 = vadd.f32 0.0, %v1122
    %v1124 = vpop.f32.mrb[0].mxu0
    %1125 = vdwg.mxu0
    %v1127 = vsel %vm425, %v692, 0
    %v1130 = vsel %vm425, %v697, 0
    %v1133 = vsel %vm425, %v702, 0
    %v1136 = vsel %vm425, %v707, 0
    %v1139 = vsel %vm425, %v712, 0
    %1141 = vmatprep.subr.mxu0 0.0
    %1142 = vmatpush1.msra.mxu0 %v406
    %1143 = vmatprep.subr.mxu0 0.0
    %1144 = vmatpush1.msra.mxu0 0.0
    %1145 = vmatprep.subr.mxu0 0.0
    %1146 = vmatpush1.msra.mxu0 0.0
    %1147 = vmatprep.subr.mxu0 0.0
    %1148 = vmatpush1.msra.mxu0 0.0
    %1149 = vmatprep.subr.mxu0 0.0
    %1150 = vmatpush1.msra.mxu0 0.0
    %1151 = vmatprep.subr.mxu0 0.0
    %1152 = vmatpush1.msra.mxu0 0.0
    %1153 = vmatprep.subr.mxu0 0.0
    %1154 = vmatpush1.msra.mxu0 0.0
    %1155 = vmatprep.subr.mxu0 0.0
    %1156 = vmatpush1.msra.mxu0 0.0
    %1157 = vmatprep.subr.mxu0 0.0
    %1158 = vmatpush1.msra.mxu0 0.0
    %1159 = vmatprep.subr.mxu0 0.0
    %1160 = vmatpush1.msra.mxu0 0.0
    %1161 = vmatprep.subr.mxu0 0.0
    %1162 = vmatpush1.msra.mxu0 0.0
    %1163 = vmatprep.subr.mxu0 0.0
    %1164 = vmatpush1.msra.mxu0 0.0
    %1165 = vmatprep.subr.mxu0 0.0
    %1166 = vmatpush1.msra.mxu0 0.0
    %1167 = vmatprep.subr.mxu0 0.0
    %1168 = vmatpush1.msra.mxu0 0.0
    %1169 = vmatprep.subr.mxu0 0.0
    %1170 = vmatpush1.msra.mxu0 0.0
    %1171 = vmatprep.subr.mxu0 0.0
    %1172 = vmatpush1.msra.mxu0 0.0
    %1173 = vmatprep.subr.mxu0 0.0
    %1174 = vmatpush1.msra.mxu0 0.0
    %1175 = vmatprep.subr.mxu0 0.0
    %1176 = vmatpush1.msra.mxu0 0.0
    %1177 = vmatprep.subr.mxu0 0.0
    %1178 = vmatpush1.msra.mxu0 0.0
    %1179 = vmatprep.subr.mxu0 0.0
    %1180 = vmatpush1.msra.mxu0 0.0
    %1181 = vmatprep.subr.mxu0 0.0
    %1182 = vmatpush1.msra.mxu0 0.0
    %1183 = vmatprep.subr.mxu0 0.0
    %1184 = vmatpush1.msra.mxu0 0.0
    %1185 = vmatprep.subr.mxu0 0.0
    %1186 = vmatpush1.msra.mxu0 0.0
    %1187 = vmatprep.subr.mxu0 0.0
    %1188 = vmatpush1.msra.mxu0 0.0
    %1189 = vmatprep.subr.mxu0 0.0
    %1190 = vmatpush1.msra.mxu0 0.0
    %1191 = vmatprep.subr.mxu0 0.0
    %1192 = vmatpush1.msra.mxu0 0.0
    %1193 = vmatprep.subr.mxu0 0.0
    %1194 = vmatpush1.msra.mxu0 0.0
    %1195 = vmatprep.subr.mxu0 0.0
    %1196 = vmatpush1.msra.mxu0 0.0
    %1197 = vmatprep.subr.mxu0 0.0
    %1198 = vmatpush1.msra.mxu0 0.0
    %1199 = vmatprep.subr.mxu0 0.0
    %1200 = vmatpush1.msra.mxu0 0.0
    %1201 = vmatprep.subr.mxu0 0.0
    %1202 = vmatpush1.msra.mxu0 0.0
    %1203 = vmatprep.subr.mxu0 0.0
    %1204 = vmatpush1.msra.mxu0 0.0
    %1205 = vmatprep.mubr.f32.mxu0 0.0
    %1206 = vmatmul.mubr.f32.gmra.mrb[0].mxu0 %v1127
    %v1207 = vpop.f32.mrb[0].mxu0
    %v1208 = vadd.f32 %v1103, %v1207
    %v1209 = vpop.f32.mrb[0].mxu0
    %1210 = vmatprep.mubr.f32.mxu0 0.0
    %1211 = vmatmul.mubr.f32.gmra.mrb[0].mxu0 %v1130
    %v1212 = vpop.f32.mrb[0].mxu0
    %v1213 = vadd.f32 %v1108, %v1212
    %v1214 = vpop.f32.mrb[0].mxu0
    %1215 = vmatprep.mubr.f32.mxu0 0.0
    %1216 = vmatmul.mubr.f32.gmra.mrb[0].mxu0 %v1133
    %v1217 = vpop.f32.mrb[0].mxu0
    %v1218 = vadd.f32 %v1113, %v1217
    %v1219 = vpop.f32.mrb[0].mxu0
    %1220 = vmatprep.mubr.f32.mxu0 0.0
    %1221 = vmatmul.mubr.f32.gmra.mrb[0].mxu0 %v1136
    %v1222 = vpop.f32.mrb[0].mxu0
    %v1223 = vadd.f32 %v1118, %v1222
    %v1224 = vpop.f32.mrb[0].mxu0
    %1225 = vmatprep.mubr.f32.mxu0 0.0
    %1226 = vmatmul.mubr.f32.gmra.mrb[0].mxu0 %v1139
    %v1227 = vpop.f32.mrb[0].mxu0
    %v1228 = vadd.f32 %v1123, %v1227
    %v1229 = vpop.f32.mrb[0].mxu0
    %1230 = vdwg.mxu0
    %1231 = vrot.lane.b32.xlu0 %v383, 112
    %v1232 = vpop.permute.xlu0 %1231
    %1233 = vrot.lane.b32.xlu0 %v388, 112
    %v1234 = vpop.permute.xlu0 %1233
    %1235 = vrot.lane.b32.xlu0 %v393, 112
    %v1236 = vpop.permute.xlu0 %1235
    %1237 = vrot.lane.b32.xlu0 %v398, 112
    %v1238 = vpop.permute.xlu0 %1237
    %1239 = vrot.lane.b32.xlu0 %v403, 112
    %v1240 = vpop.permute.xlu0 %1239
    %1241 = vrot.lane.b32.xlu0 %v383, 80
    %v1242 = vpop.permute.xlu0 %1241
    %1243 = vrot.lane.b32.xlu0 %v388, 80
    %v1244 = vpop.permute.xlu0 %1243
    %1245 = vrot.lane.b32.xlu0 %v393, 80
    %v1246 = vpop.permute.xlu0 %1245
    %1247 = vrot.lane.b32.xlu0 %v398, 80
    %v1248 = vpop.permute.xlu0 %1247
    %1249 = vrot.lane.b32.xlu0 %v403, 80
    %v1250 = vpop.permute.xlu0 %1249
    %v1251 = vsel %vm425, %v1232, 0
    %v1253 = vsel %vm425, %v1234, 0
    %v1255 = vsel %vm425, %v1236, 0
    %v1257 = vsel %vm425, %v1238, 0
    %v1259 = vsel %vm425, %v1240, 0
    %v1261 = vsel %vm425, %v1242, 0
    %v1263 = vsel %vm425, %v1244, 0
    %v1265 = vsel %vm425, %v1246, 0
    %v1267 = vsel %vm425, %v1248, 0
    %v1269 = vsel %vm425, %v1250, 0
    %1271 = vmatprep.subr.mxu0 0.0
    %1272 = vmatpush1.xpose.msra.mxu0 %v1261
    %1273 = vmatprep.subr.mxu0 0.0
    %1274 = vmatpush1.xpose.msra.mxu0 %v1263
    %1275 = vmatprep.subr.mxu0 0.0
    %1276 = vmatpush1.xpose.msra.mxu0 %v1265
    %1277 = vmatprep.subr.mxu0 0.0
    %1278 = vmatpush1.xpose.msra.mxu0 %v1267
    %1279 = vmatprep.subr.mxu0 0.0
    %1280 = vmatpush1.xpose.msra.mxu0 %v1269
    %1281 = vmatprep.subr.mxu0 0.0
    %1282 = vmatpush1.xpose.msra.mxu0 0.0
    %1283 = vmatprep.subr.mxu0 0.0
    %1284 = vmatpush1.xpose.msra.mxu0 0.0
    %1285 = vmatprep.subr.mxu0 0.0
    %1286 = vmatpush1.xpose.msra.mxu0 0.0
    %1287 = vmatprep.subr.mxu0 0.0
    %1288 = vmatpush1.xpose.msra.mxu0 0.0
    %1289 = vmatprep.subr.mxu0 0.0
    %1290 = vmatpush1.xpose.msra.mxu0 0.0
    %1291 = vmatprep.subr.mxu0 0.0
    %1292 = vmatpush1.xpose.msra.mxu0 0.0
    %1293 = vmatprep.subr.mxu0 0.0
    %1294 = vmatpush1.xpose.msra.mxu0 0.0
    %1295 = vmatprep.subr.mxu0 0.0
    %1296 = vmatpush1.xpose.msra.mxu0 0.0
    %1297 = vmatprep.subr.mxu0 0.0
    %1298 = vmatpush1.xpose.msra.mxu0 0.0
    %1299 = vmatprep.subr.mxu0 0.0
    %1300 = vmatpush1.xpose.msra.mxu0 0.0
    %1301 = vmatprep.subr.mxu0 0.0
    %1302 = vmatpush1.xpose.msra.mxu0 0.0
    %1303 = vmatprep.subr.mxu0 0.0
    %1304 = vmatpush1.xpose.msra.mxu0 0.0
    %1305 = vmatprep.subr.mxu0 0.0
    %1306 = vmatpush1.xpose.msra.mxu0 0.0
    %1307 = vmatprep.subr.mxu0 0.0
    %1308 = vmatpush1.xpose.msra.mxu0 0.0
    %1309 = vmatprep.subr.mxu0 0.0
    %1310 = vmatpush1.xpose.msra.mxu0 0.0
    %1311 = vmatprep.subr.mxu0 0.0
    %1312 = vmatpush1.xpose.msra.mxu0 0.0
    %1313 = vmatprep.subr.mxu0 0.0
    %1314 = vmatpush1.xpose.msra.mxu0 0.0
    %1315 = vmatprep.subr.mxu0 0.0
    %1316 = vmatpush1.xpose.msra.mxu0 0.0
    %1317 = vmatprep.subr.mxu0 0.0
    %1318 = vmatpush1.xpose.msra.mxu0 0.0
    %1319 = vmatprep.subr.mxu0 0.0
    %1320 = vmatpush1.xpose.msra.mxu0 0.0
    %1321 = vmatprep.subr.mxu0 0.0
    %1322 = vmatpush1.xpose.msra.mxu0 0.0
    %1323 = vmatprep.subr.mxu0 0.0
    %1324 = vmatpush1.xpose.msra.mxu0 0.0
    %1325 = vmatprep.subr.mxu0 0.0
    %1326 = vmatpush1.xpose.msra.mxu0 0.0
    %1327 = vmatprep.subr.mxu0 0.0
    %1328 = vmatpush1.xpose.msra.mxu0 0.0
    %1329 = vmatprep.subr.mxu0 0.0
    %1330 = vmatpush1.xpose.msra.mxu0 0.0
    %1331 = vmatprep.subr.mxu0 0.0
    %1332 = vmatpush1.xpose.msra.mxu0 0.0
    %1333 = vmatprep.subr.mxu0 0.0
    %1334 = vmatpush1.xpose.msra.mxu0 0.0
    %1335 = vmatprep.mubr.f32.mxu0 0.0
    %1336 = vmatmul.mubr.f32.gmra.mrb[0].mxu0 %v1251
    %v1337 = vpop.f32.mrb[0].mxu0
    %v1338 = vadd.f32 %v193, %v1337
    %v1339 = vpop.f32.mrb[0].mxu0
    %1340 = vmatprep.mubr.f32.mxu0 0.0
    %1341 = vmatmul.mubr.f32.gmra.mrb[0].mxu0 %v1253
    %v1342 = vpop.f32.mrb[0].mxu0
    %v1343 = vadd.f32 %v194, %v1342
    %v1344 = vpop.f32.mrb[0].mxu0
    %1345 = vmatprep.mubr.f32.mxu0 0.0
    %1346 = vmatmul.mubr.f32.gmra.mrb[0].mxu0 %v1255
    %v1347 = vpop.f32.mrb[0].mxu0
    %v1348 = vadd.f32 %v195, %v1347
    %v1349 = vpop.f32.mrb[0].mxu0
    %1350 = vmatprep.mubr.f32.mxu0 0.0
    %1351 = vmatmul.mubr.f32.gmra.mrb[0].mxu0 %v1257
    %v1352 = vpop.f32.mrb[0].mxu0
    %v1353 = vadd.f32 %v196, %v1352
    %v1354 = vpop.f32.mrb[0].mxu0
    %1355 = vmatprep.mubr.f32.mxu0 0.0
    %1356 = vmatmul.mubr.f32.gmra.mrb[0].mxu0 %v1259
    %v1357 = vpop.f32.mrb[0].mxu0
    %v1358 = vadd.f32 %v197, %v1357
    %v1359 = vpop.f32.mrb[0].mxu0
    %1360 = vdwg.mxu0
    %v1361 = vsel %vm536, %v1338, -inf
    %1362 = vmax.xlane.f32.xlu0 %v1361
    %v1363 = vpop.xlane.xlu0 %1362
    %v1364 = vsel %vm536, %v1343, -inf
    %1365 = vmax.xlane.f32.xlu0 %v1364
    %v1366 = vpop.xlane.xlu0 %1365
    %v1367 = vsel %vm536, %v1348, -inf
    %1368 = vmax.xlane.f32.xlu0 %v1367
    %v1369 = vpop.xlane.xlu0 %1368
    %v1370 = vsel %vm536, %v1353, -inf
    %1371 = vmax.xlane.f32.xlu0 %v1370
    %v1372 = vpop.xlane.xlu0 %1371
    %v1373 = vsel %vm549, %v1358, -inf
    %1374 = vmax.xlane.f32.xlu0 %v1373
    %v1375 = vpop.xlane.xlu0 %1374
    %v1376 = vsub.f32 %v1338, %v1363
    %v1377 = vsub.f32 %v1343, %v1366
    %v1378 = vsub.f32 %v1348, %v1369
    %v1379 = vsub.f32 %v1353, %v1372
    %v1380 = vsub.f32 %v1358, %v1375
    %v1381 = vmul.f32 %v1376, 1.442695
    %v1382 = vpow.pop %v1381
    %v1383 = vmul.f32 %v1377, 1.442695
    %v1384 = vpow.pop %v1383
    %v1385 = vmul.f32 %v1378, 1.442695
    %v1386 = vpow.pop %v1385
    %v1387 = vmul.f32 %v1379, 1.442695
    %v1388 = vpow.pop %v1387
    %v1389 = vmul.f32 %v1380, 1.442695
    %v1390 = vpow.pop %v1389
    %v1391 = vsel %vm536, %v1382, 0.0
    %1392 = vadd.xlane.f32.xlu0 %v1391
    %v1393 = vpop.xlane.xlu0 %1392
    %v1394 = vsel %vm536, %v1384, 0.0
    %1395 = vadd.xlane.f32.xlu0 %v1394
    %v1396 = vpop.xlane.xlu0 %1395
    %v1397 = vsel %vm536, %v1386, 0.0
    %1398 = vadd.xlane.f32.xlu0 %v1397
    %v1399 = vpop.xlane.xlu0 %1398
    %v1400 = vsel %vm536, %v1388, 0.0
    %1401 = vadd.xlane.f32.xlu0 %v1400
    %v1402 = vpop.xlane.xlu0 %1401
    %v1403 = vsel %vm549, %v1390, 0.0
    %1404 = vadd.xlane.f32.xlu0 %v1403
    %v1405 = vpop.xlane.xlu0 %1404
    %v1406 = vrcp.pop %v1393
    %v1407 = vmul.f32 %v1382, %v1406
    %v1408 = vrcp.pop %v1396
    %v1409 = vmul.f32 %v1384, %v1408
    %v1410 = vrcp.pop %v1399
    %v1411 = vmul.f32 %v1386, %v1410
    %v1412 = vrcp.pop %v1402
    %v1413 = vmul.f32 %v1388, %v1412
    %v1414 = vrcp.pop %v1405
    %v1415 = vmul.f32 %v1390, %v1414
    %1416 = vrot.lane.b32.xlu0 %v383, 48
    %v1417 = vpop.permute.xlu0 %1416
    %1418 = vrot.lane.b32.xlu0 %v388, 48
    %v1419 = vpop.permute.xlu0 %1418
    %1420 = vrot.lane.b32.xlu0 %v393, 48
    %v1421 = vpop.permute.xlu0 %1420
    %1422 = vrot.lane.b32.xlu0 %v398, 48
    %v1423 = vpop.permute.xlu0 %1422
    %1424 = vrot.lane.b32.xlu0 %v403, 48
    %v1425 = vpop.permute.xlu0 %1424
    %v1431 = vsel %vm536, %v1407, 0
    %v1434 = vsel %vm536, %v1409, 0
    %v1437 = vsel %vm536, %v1411, 0
    %v1440 = vsel %vm536, %v1413, 0
    %v1443 = vsel %vm536, %v1415, 0
    %v1445 = vsel %vm622, %v1425, 0
    %1447 = vmatprep.subr.mxu0 0.0
    %1448 = vmatpush1.msra.mxu0 %v1417
    %1449 = vmatprep.subr.mxu0 0.0
    %1450 = vmatpush1.msra.mxu0 %v1419
    %1451 = vmatprep.subr.mxu0 0.0
    %1452 = vmatpush1.msra.mxu0 %v1421
    %1453 = vmatprep.subr.mxu0 0.0
    %1454 = vmatpush1.msra.mxu0 %v1423
    %1455 = vmatprep.subr.mxu0 0.0
    %1456 = vmatpush1.msra.mxu0 %v1445
    %1457 = vmatprep.subr.mxu0 0.0
    %1458 = vmatpush1.msra.mxu0 0.0
    %1459 = vmatprep.subr.mxu0 0.0
    %1460 = vmatpush1.msra.mxu0 0.0
    %1461 = vmatprep.subr.mxu0 0.0
    %1462 = vmatpush1.msra.mxu0 0.0
    %1463 = vmatprep.subr.mxu0 0.0
    %1464 = vmatpush1.msra.mxu0 0.0
    %1465 = vmatprep.subr.mxu0 0.0
    %1466 = vmatpush1.msra.mxu0 0.0
    %1467 = vmatprep.subr.mxu0 0.0
    %1468 = vmatpush1.msra.mxu0 0.0
    %1469 = vmatprep.subr.mxu0 0.0
    %1470 = vmatpush1.msra.mxu0 0.0
    %1471 = vmatprep.subr.mxu0 0.0
    %1472 = vmatpush1.msra.mxu0 0.0
    %1473 = vmatprep.subr.mxu0 0.0
    %1474 = vmatpush1.msra.mxu0 0.0
    %1475 = vmatprep.subr.mxu0 0.0
    %1476 = vmatpush1.msra.mxu0 0.0
    %1477 = vmatprep.subr.mxu0 0.0
    %1478 = vmatpush1.msra.mxu0 0.0
    %1479 = vmatprep.subr.mxu0 0.0
    %1480 = vmatpush1.msra.mxu0 0.0
    %1481 = vmatprep.subr.mxu0 0.0
    %1482 = vmatpush1.msra.mxu0 0.0
    %1483 = vmatprep.subr.mxu0 0.0
    %1484 = vmatpush1.msra.mxu0 0.0
    %1485 = vmatprep.subr.mxu0 0.0
    %1486 = vmatpush1.msra.mxu0 0.0
    %1487 = vmatprep.subr.mxu0 0.0
    %1488 = vmatpush1.msra.mxu0 0.0
    %1489 = vmatprep.subr.mxu0 0.0
    %1490 = vmatpush1.msra.mxu0 0.0
    %1491 = vmatprep.subr.mxu0 0.0
    %1492 = vmatpush1.msra.mxu0 0.0
    %1493 = vmatprep.subr.mxu0 0.0
    %1494 = vmatpush1.msra.mxu0 0.0
    %1495 = vmatprep.subr.mxu0 0.0
    %1496 = vmatpush1.msra.mxu0 0.0
    %1497 = vmatprep.subr.mxu0 0.0
    %1498 = vmatpush1.msra.mxu0 0.0
    %1499 = vmatprep.subr.mxu0 0.0
    %1500 = vmatpush1.msra.mxu0 0.0
    %1501 = vmatprep.subr.mxu0 0.0
    %1502 = vmatpush1.msra.mxu0 0.0
    %1503 = vmatprep.subr.mxu0 0.0
    %1504 = vmatpush1.msra.mxu0 0.0
    %1505 = vmatprep.subr.mxu0 0.0
    %1506 = vmatpush1.msra.mxu0 0.0
    %1507 = vmatprep.subr.mxu0 0.0
    %1508 = vmatpush1.msra.mxu0 0.0
    %1509 = vmatprep.subr.mxu0 0.0
    %1510 = vmatpush1.msra.mxu0 0.0
    %1511 = vmatprep.mubr.f32.mxu0 0.0
    %1512 = vmatmul.mubr.f32.gmra.mrb[0].mxu0 %v1431
    %v1513 = vpop.f32.mrb[0].mxu0
    %v1514 = vadd.f32 0.0, %v1513
    %v1515 = vpop.f32.mrb[0].mxu0
    %1516 = vmatprep.mubr.f32.mxu0 0.0
    %1517 = vmatmul.mubr.f32.gmra.mrb[0].mxu0 %v1434
    %v1518 = vpop.f32.mrb[0].mxu0
    %v1519 = vadd.f32 0.0, %v1518
    %v1520 = vpop.f32.mrb[0].mxu0
    %1521 = vmatprep.mubr.f32.mxu0 0.0
    %1522 = vmatmul.mubr.f32.gmra.mrb[0].mxu0 %v1437
    %v1523 = vpop.f32.mrb[0].mxu0
    %v1524 = vadd.f32 0.0, %v1523
    %v1525 = vpop.f32.mrb[0].mxu0
    %1526 = vmatprep.mubr.f32.mxu0 0.0
    %1527 = vmatmul.mubr.f32.gmra.mrb[0].mxu0 %v1440
    %v1528 = vpop.f32.mrb[0].mxu0
    %v1529 = vadd.f32 0.0, %v1528
    %v1530 = vpop.f32.mrb[0].mxu0
    %1531 = vmatprep.mubr.f32.mxu0 0.0
    %1532 = vmatmul.mubr.f32.gmra.mrb[0].mxu0 %v1443
    %v1533 = vpop.f32.mrb[0].mxu0
    %v1534 = vadd.f32 0.0, %v1533
    %v1535 = vpop.f32.mrb[0].mxu0
    %1536 = vdwg.mxu0
    %v1538 = vsel %vm425, %v1514, 0
    %v1541 = vsel %vm425, %v1519, 0
    %v1544 = vsel %vm425, %v1524, 0
    %v1547 = vsel %vm425, %v1529, 0
    %v1550 = vsel %vm425, %v1534, 0
    %1552 = vmatprep.subr.mxu0 0.0
    %1553 = vmatpush1.msra.mxu0 %v408
    %1554 = vmatprep.subr.mxu0 0.0
    %1555 = vmatpush1.msra.mxu0 0.0
    %1556 = vmatprep.subr.mxu0 0.0
    %1557 = vmatpush1.msra.mxu0 0.0
    %1558 = vmatprep.subr.mxu0 0.0
    %1559 = vmatpush1.msra.mxu0 0.0
    %1560 = vmatprep.subr.mxu0 0.0
    %1561 = vmatpush1.msra.mxu0 0.0
    %1562 = vmatprep.subr.mxu0 0.0
    %1563 = vmatpush1.msra.mxu0 0.0
    %1564 = vmatprep.subr.mxu0 0.0
    %1565 = vmatpush1.msra.mxu0 0.0
    %1566 = vmatprep.subr.mxu0 0.0
    %1567 = vmatpush1.msra.mxu0 0.0
    %1568 = vmatprep.subr.mxu0 0.0
    %1569 = vmatpush1.msra.mxu0 0.0
    %1570 = vmatprep.subr.mxu0 0.0
    %1571 = vmatpush1.msra.mxu0 0.0
    %1572 = vmatprep.subr.mxu0 0.0
    %1573 = vmatpush1.msra.mxu0 0.0
    %1574 = vmatprep.subr.mxu0 0.0
    %1575 = vmatpush1.msra.mxu0 0.0
    %1576 = vmatprep.subr.mxu0 0.0
    %1577 = vmatpush1.msra.mxu0 0.0
    %1578 = vmatprep.subr.mxu0 0.0
    %1579 = vmatpush1.msra.mxu0 0.0
    %1580 = vmatprep.subr.mxu0 0.0
    %1581 = vmatpush1.msra.mxu0 0.0
    %1582 = vmatprep.subr.mxu0 0.0
    %1583 = vmatpush1.msra.mxu0 0.0
    %1584 = vmatprep.subr.mxu0 0.0
    %1585 = vmatpush1.msra.mxu0 0.0
    %1586 = vmatprep.subr.mxu0 0.0
    %1587 = vmatpush1.msra.mxu0 0.0
    %1588 = vmatprep.subr.mxu0 0.0
    %1589 = vmatpush1.msra.mxu0 0.0
    %1590 = vmatprep.subr.mxu0 0.0
    %1591 = vmatpush1.msra.mxu0 0.0
    %1592 = vmatprep.subr.mxu0 0.0
    %1593 = vmatpush1.msra.mxu0 0.0
    %1594 = vmatprep.subr.mxu0 0.0
    %1595 = vmatpush1.msra.mxu0 0.0
    %1596 = vmatprep.subr.mxu0 0.0
    %1597 = vmatpush1.msra.mxu0 0.0
    %1598 = vmatprep.subr.mxu0 0.0
    %1599 = vmatpush1.msra.mxu0 0.0
    %1600 = vmatprep.subr.mxu0 0.0
    %1601 = vmatpush1.msra.mxu0 0.0
    %1602 = vmatprep.subr.mxu0 0.0
    %1603 = vmatpush1.msra.mxu0 0.0
    %1604 = vmatprep.subr.mxu0 0.0
    %1605 = vmatpush1.msra.mxu0 0.0
    %1606 = vmatprep.subr.mxu0 0.0
    %1607 = vmatpush1.msra.mxu0 0.0
    %1608 = vmatprep.subr.mxu0 0.0
    %1609 = vmatpush1.msra.mxu0 0.0
    %1610 = vmatprep.subr.mxu0 0.0
    %1611 = vmatpush1.msra.mxu0 0.0
    %1612 = vmatprep.subr.mxu0 0.0
    %1613 = vmatpush1.msra.mxu0 0.0
    %1614 = vmatprep.subr.mxu0 0.0
    %1615 = vmatpush1.msra.mxu0 0.0
    %1616 = vmatprep.mubr.f32.mxu0 0.0
    %1617 = vmatmul.mubr.f32.gmra.mrb[0].mxu0 %v1538
    %v1618 = vpop.f32.mrb[0].mxu0
    %v1619 = vadd.f32 0.0, %v1618
    %v1620 = vpop.f32.mrb[0].mxu0
    %1621 = vmatprep.mubr.f32.mxu0 0.0
    %1622 = vmatmul.mubr.f32.gmra.mrb[0].mxu0 %v1541
    %v1623 = vpop.f32.mrb[0].mxu0
    %v1624 = vadd.f32 0.0, %v1623
    %v1625 = vpop.f32.mrb[0].mxu0
    %1626 = vmatprep.mubr.f32.mxu0 0.0
    %1627 = vmatmul.mubr.f32.gmra.mrb[0].mxu0 %v1544
    %v1628 = vpop.f32.mrb[0].mxu0
    %v1629 = vadd.f32 0.0, %v1628
    %v1630 = vpop.f32.mrb[0].mxu0
    %1631 = vmatprep.mubr.f32.mxu0 0.0
    %1632 = vmatmul.mubr.f32.gmra.mrb[0].mxu0 %v1547
    %v1633 = vpop.f32.mrb[0].mxu0
    %v1634 = vadd.f32 0.0, %v1633
    %v1635 = vpop.f32.mrb[0].mxu0
    %1636 = vmatprep.mubr.f32.mxu0 0.0
    %1637 = vmatmul.mubr.f32.gmra.mrb[0].mxu0 %v1550
    %v1638 = vpop.f32.mrb[0].mxu0
    %v1639 = vadd.f32 0.0, %v1638
    %v1640 = vpop.f32.mrb[0].mxu0
    %1641 = vdwg.mxu0
    %v1642 = vadd.f32 %v1208, %v1619
    %v1643 = vadd.f32 %v1213, %v1624
    %v1644 = vadd.f32 %v1218, %v1629
    %v1645 = vadd.f32 %v1223, %v1634
    %v1646 = vadd.f32 %v1228, %v1639
    %1647 = vrot.lane.b32.xlu0 %v383, 104
    %v1648 = vpop.permute.xlu0 %1647
    %1649 = vrot.lane.b32.xlu0 %v388, 104
    %v1650 = vpop.permute.xlu0 %1649
    %1651 = vrot.lane.b32.xlu0 %v393, 104
    %v1652 = vpop.permute.xlu0 %1651
    %1653 = vrot.lane.b32.xlu0 %v398, 104
    %v1654 = vpop.permute.xlu0 %1653
    %1655 = vrot.lane.b32.xlu0 %v403, 104
    %v1656 = vpop.permute.xlu0 %1655
    %1657 = vrot.lane.b32.xlu0 %v383, 72
    %v1658 = vpop.permute.xlu0 %1657
    %1659 = vrot.lane.b32.xlu0 %v388, 72
    %v1660 = vpop.permute.xlu0 %1659
    %1661 = vrot.lane.b32.xlu0 %v393, 72
    %v1662 = vpop.permute.xlu0 %1661
    %1663 = vrot.lane.b32.xlu0 %v398, 72
    %v1664 = vpop.permute.xlu0 %1663
    %1665 = vrot.lane.b32.xlu0 %v403, 72
    %v1666 = vpop.permute.xlu0 %1665
    %v1667 = vsel %vm425, %v1648, 0
    %v1669 = vsel %vm425, %v1650, 0
    %v1671 = vsel %vm425, %v1652, 0
    %v1673 = vsel %vm425, %v1654, 0
    %v1675 = vsel %vm425, %v1656, 0
    %v1677 = vsel %vm425, %v1658, 0
    %v1679 = vsel %vm425, %v1660, 0
    %v1681 = vsel %vm425, %v1662, 0
    %v1683 = vsel %vm425, %v1664, 0
    %v1685 = vsel %vm425, %v1666, 0
    %1687 = vmatprep.subr.mxu0 0.0
    %1688 = vmatpush1.xpose.msra.mxu0 %v1677
    %1689 = vmatprep.subr.mxu0 0.0
    %1690 = vmatpush1.xpose.msra.mxu0 %v1679
    %1691 = vmatprep.subr.mxu0 0.0
    %1692 = vmatpush1.xpose.msra.mxu0 %v1681
    %1693 = vmatprep.subr.mxu0 0.0
    %1694 = vmatpush1.xpose.msra.mxu0 %v1683
    %1695 = vmatprep.subr.mxu0 0.0
    %1696 = vmatpush1.xpose.msra.mxu0 %v1685
    %1697 = vmatprep.subr.mxu0 0.0
    %1698 = vmatpush1.xpose.msra.mxu0 0.0
    %1699 = vmatprep.subr.mxu0 0.0
    %1700 = vmatpush1.xpose.msra.mxu0 0.0
    %1701 = vmatprep.subr.mxu0 0.0
    %1702 = vmatpush1.xpose.msra.mxu0 0.0
    %1703 = vmatprep.subr.mxu0 0.0
    %1704 = vmatpush1.xpose.msra.mxu0 0.0
    %1705 = vmatprep.subr.mxu0 0.0
    %1706 = vmatpush1.xpose.msra.mxu0 0.0
    %1707 = vmatprep.subr.mxu0 0.0
    %1708 = vmatpush1.xpose.msra.mxu0 0.0
    %1709 = vmatprep.subr.mxu0 0.0
    %1710 = vmatpush1.xpose.msra.mxu0 0.0
    %1711 = vmatprep.subr.mxu0 0.0
    %1712 = vmatpush1.xpose.msra.mxu0 0.0
    %1713 = vmatprep.subr.mxu0 0.0
    %1714 = vmatpush1.xpose.msra.mxu0 0.0
    %1715 = vmatprep.subr.mxu0 0.0
    %1716 = vmatpush1.xpose.msra.mxu0 0.0
    %1717 = vmatprep.subr.mxu0 0.0
    %1718 = vmatpush1.xpose.msra.mxu0 0.0
    %1719 = vmatprep.subr.mxu0 0.0
    %1720 = vmatpush1.xpose.msra.mxu0 0.0
    %1721 = vmatprep.subr.mxu0 0.0
    %1722 = vmatpush1.xpose.msra.mxu0 0.0
    %1723 = vmatprep.subr.mxu0 0.0
    %1724 = vmatpush1.xpose.msra.mxu0 0.0
    %1725 = vmatprep.subr.mxu0 0.0
    %1726 = vmatpush1.xpose.msra.mxu0 0.0
    %1727 = vmatprep.subr.mxu0 0.0
    %1728 = vmatpush1.xpose.msra.mxu0 0.0
    %1729 = vmatprep.subr.mxu0 0.0
    %1730 = vmatpush1.xpose.msra.mxu0 0.0
    %1731 = vmatprep.subr.mxu0 0.0
    %1732 = vmatpush1.xpose.msra.mxu0 0.0
    %1733 = vmatprep.subr.mxu0 0.0
    %1734 = vmatpush1.xpose.msra.mxu0 0.0
    %1735 = vmatprep.subr.mxu0 0.0
    %1736 = vmatpush1.xpose.msra.mxu0 0.0
    %1737 = vmatprep.subr.mxu0 0.0
    %1738 = vmatpush1.xpose.msra.mxu0 0.0
    %1739 = vmatprep.subr.mxu0 0.0
    %1740 = vmatpush1.xpose.msra.mxu0 0.0
    %1741 = vmatprep.subr.mxu0 0.0
    %1742 = vmatpush1.xpose.msra.mxu0 0.0
    %1743 = vmatprep.subr.mxu0 0.0
    %1744 = vmatpush1.xpose.msra.mxu0 0.0
    %1745 = vmatprep.subr.mxu0 0.0
    %1746 = vmatpush1.xpose.msra.mxu0 0.0
    %1747 = vmatprep.subr.mxu0 0.0
    %1748 = vmatpush1.xpose.msra.mxu0 0.0
    %1749 = vmatprep.subr.mxu0 0.0
    %1750 = vmatpush1.xpose.msra.mxu0 0.0
    %1751 = vmatprep.mubr.f32.mxu0 0.0
    %1752 = vmatmul.mubr.f32.gmra.mrb[0].mxu0 %v1667
    %v1753 = vpop.f32.mrb[0].mxu0
    %v1754 = vadd.f32 %v193, %v1753
    %v1755 = vpop.f32.mrb[0].mxu0
    %1756 = vmatprep.mubr.f32.mxu0 0.0
    %1757 = vmatmul.mubr.f32.gmra.mrb[0].mxu0 %v1669
    %v1758 = vpop.f32.mrb[0].mxu0
    %v1759 = vadd.f32 %v194, %v1758
    %v1760 = vpop.f32.mrb[0].mxu0
    %1761 = vmatprep.mubr.f32.mxu0 0.0
    %1762 = vmatmul.mubr.f32.gmra.mrb[0].mxu0 %v1671
    %v1763 = vpop.f32.mrb[0].mxu0
    %v1764 = vadd.f32 %v195, %v1763
    %v1765 = vpop.f32.mrb[0].mxu0
    %1766 = vmatprep.mubr.f32.mxu0 0.0
    %1767 = vmatmul.mubr.f32.gmra.mrb[0].mxu0 %v1673
    %v1768 = vpop.f32.mrb[0].mxu0
    %v1769 = vadd.f32 %v196, %v1768
    %v1770 = vpop.f32.mrb[0].mxu0
    %1771 = vmatprep.mubr.f32.mxu0 0.0
    %1772 = vmatmul.mubr.f32.gmra.mrb[0].mxu0 %v1675
    %v1773 = vpop.f32.mrb[0].mxu0
    %v1774 = vadd.f32 %v197, %v1773
    %v1775 = vpop.f32.mrb[0].mxu0
    %1776 = vdwg.mxu0
    %v1777 = vsel %vm536, %v1754, -inf
    %1778 = vmax.xlane.f32.xlu0 %v1777
    %v1779 = vpop.xlane.xlu0 %1778
    %v1780 = vsel %vm536, %v1759, -inf
    %1781 = vmax.xlane.f32.xlu0 %v1780
    %v1782 = vpop.xlane.xlu0 %1781
    %v1783 = vsel %vm536, %v1764, -inf
    %1784 = vmax.xlane.f32.xlu0 %v1783
    %v1785 = vpop.xlane.xlu0 %1784
    %v1786 = vsel %vm536, %v1769, -inf
    %1787 = vmax.xlane.f32.xlu0 %v1786
    %v1788 = vpop.xlane.xlu0 %1787
    %v1789 = vsel %vm549, %v1774, -inf
    %1790 = vmax.xlane.f32.xlu0 %v1789
    %v1791 = vpop.xlane.xlu0 %1790
    %v1792 = vsub.f32 %v1754, %v1779
    %v1793 = vsub.f32 %v1759, %v1782
    %v1794 = vsub.f32 %v1764, %v1785
    %v1795 = vsub.f32 %v1769, %v1788
    %v1796 = vsub.f32 %v1774, %v1791
    %v1797 = vmul.f32 %v1792, 1.442695
    %v1798 = vpow.pop %v1797
    %v1799 = vmul.f32 %v1793, 1.442695
    %v1800 = vpow.pop %v1799
    %v1801 = vmul.f32 %v1794, 1.442695
    %v1802 = vpow.pop %v1801
    %v1803 = vmul.f32 %v1795, 1.442695
    %v1804 = vpow.pop %v1803
    %v1805 = vmul.f32 %v1796, 1.442695
    %v1806 = vpow.pop %v1805
    %v1807 = vsel %vm536, %v1798, 0.0
    %1808 = vadd.xlane.f32.xlu0 %v1807
    %v1809 = vpop.xlane.xlu0 %1808
    %v1810 = vsel %vm536, %v1800, 0.0
    %1811 = vadd.xlane.f32.xlu0 %v1810
    %v1812 = vpop.xlane.xlu0 %1811
    %v1813 = vsel %vm536, %v1802, 0.0
    %1814 = vadd.xlane.f32.xlu0 %v1813
    %v1815 = vpop.xlane.xlu0 %1814
    %v1816 = vsel %vm536, %v1804, 0.0
    %1817 = vadd.xlane.f32.xlu0 %v1816
    %v1818 = vpop.xlane.xlu0 %1817
    %v1819 = vsel %vm549, %v1806, 0.0
    %1820 = vadd.xlane.f32.xlu0 %v1819
    %v1821 = vpop.xlane.xlu0 %1820
    %v1822 = vrcp.pop %v1809
    %v1823 = vmul.f32 %v1798, %v1822
    %v1824 = vrcp.pop %v1812
    %v1825 = vmul.f32 %v1800, %v1824
    %v1826 = vrcp.pop %v1815
    %v1827 = vmul.f32 %v1802, %v1826
    %v1828 = vrcp.pop %v1818
    %v1829 = vmul.f32 %v1804, %v1828
    %v1830 = vrcp.pop %v1821
    %v1831 = vmul.f32 %v1806, %v1830
    %1832 = vrot.lane.b32.xlu0 %v383, 40
    %v1833 = vpop.permute.xlu0 %1832
    %1834 = vrot.lane.b32.xlu0 %v388, 40
    %v1835 = vpop.permute.xlu0 %1834
    %1836 = vrot.lane.b32.xlu0 %v393, 40
    %v1837 = vpop.permute.xlu0 %1836
    %1838 = vrot.lane.b32.xlu0 %v398, 40
    %v1839 = vpop.permute.xlu0 %1838
    %1840 = vrot.lane.b32.xlu0 %v403, 40
    %v1841 = vpop.permute.xlu0 %1840
    %v1847 = vsel %vm536, %v1823, 0
    %v1850 = vsel %vm536, %v1825, 0
    %v1853 = vsel %vm536, %v1827, 0
    %v1856 = vsel %vm536, %v1829, 0
    %v1859 = vsel %vm536, %v1831, 0
    %v1861 = vsel %vm622, %v1841, 0
    %1863 = vmatprep.subr.mxu0 0.0
    %1864 = vmatpush1.msra.mxu0 %v1833
    %1865 = vmatprep.subr.mxu0 0.0
    %1866 = vmatpush1.msra.mxu0 %v1835
    %1867 = vmatprep.subr.mxu0 0.0
    %1868 = vmatpush1.msra.mxu0 %v1837
    %1869 = vmatprep.subr.mxu0 0.0
    %1870 = vmatpush1.msra.mxu0 %v1839
    %1871 = vmatprep.subr.mxu0 0.0
    %1872 = vmatpush1.msra.mxu0 %v1861
    %1873 = vmatprep.subr.mxu0 0.0
    %1874 = vmatpush1.msra.mxu0 0.0
    %1875 = vmatprep.subr.mxu0 0.0
    %1876 = vmatpush1.msra.mxu0 0.0
    %1877 = vmatprep.subr.mxu0 0.0
    %1878 = vmatpush1.msra.mxu0 0.0
    %1879 = vmatprep.subr.mxu0 0.0
    %1880 = vmatpush1.msra.mxu0 0.0
    %1881 = vmatprep.subr.mxu0 0.0
    %1882 = vmatpush1.msra.mxu0 0.0
    %1883 = vmatprep.subr.mxu0 0.0
    %1884 = vmatpush1.msra.mxu0 0.0
    %1885 = vmatprep.subr.mxu0 0.0
    %1886 = vmatpush1.msra.mxu0 0.0
    %1887 = vmatprep.subr.mxu0 0.0
    %1888 = vmatpush1.msra.mxu0 0.0
    %1889 = vmatprep.subr.mxu0 0.0
    %1890 = vmatpush1.msra.mxu0 0.0
    %1891 = vmatprep.subr.mxu0 0.0
    %1892 = vmatpush1.msra.mxu0 0.0
    %1893 = vmatprep.subr.mxu0 0.0
    %1894 = vmatpush1.msra.mxu0 0.0
    %1895 = vmatprep.subr.mxu0 0.0
    %1896 = vmatpush1.msra.mxu0 0.0
    %1897 = vmatprep.subr.mxu0 0.0
    %1898 = vmatpush1.msra.mxu0 0.0
    %1899 = vmatprep.subr.mxu0 0.0
    %1900 = vmatpush1.msra.mxu0 0.0
    %1901 = vmatprep.subr.mxu0 0.0
    %1902 = vmatpush1.msra.mxu0 0.0
    %1903 = vmatprep.subr.mxu0 0.0
    %1904 = vmatpush1.msra.mxu0 0.0
    %1905 = vmatprep.subr.mxu0 0.0
    %1906 = vmatpush1.msra.mxu0 0.0
    %1907 = vmatprep.subr.mxu0 0.0
    %1908 = vmatpush1.msra.mxu0 0.0
    %1909 = vmatprep.subr.mxu0 0.0
    %1910 = vmatpush1.msra.mxu0 0.0
    %1911 = vmatprep.subr.mxu0 0.0
    %1912 = vmatpush1.msra.mxu0 0.0
    %1913 = vmatprep.subr.mxu0 0.0
    %1914 = vmatpush1.msra.mxu0 0.0
    %1915 = vmatprep.subr.mxu0 0.0
    %1916 = vmatpush1.msra.mxu0 0.0
    %1917 = vmatprep.subr.mxu0 0.0
    %1918 = vmatpush1.msra.mxu0 0.0
    %1919 = vmatprep.subr.mxu0 0.0
    %1920 = vmatpush1.msra.mxu0 0.0
    %1921 = vmatprep.subr.mxu0 0.0
    %1922 = vmatpush1.msra.mxu0 0.0
    %1923 = vmatprep.subr.mxu0 0.0
    %1924 = vmatpush1.msra.mxu0 0.0
    %1925 = vmatprep.subr.mxu0 0.0
    %1926 = vmatpush1.msra.mxu0 0.0
    %1927 = vmatprep.mubr.f32.mxu0 0.0
    %1928 = vmatmul.mubr.f32.gmra.mrb[0].mxu0 %v1847
    %v1929 = vpop.f32.mrb[0].mxu0
    %v1930 = vadd.f32 0.0, %v1929
    %v1931 = vpop.f32.mrb[0].mxu0
    %1932 = vmatprep.mubr.f32.mxu0 0.0
    %1933 = vmatmul.mubr.f32.gmra.mrb[0].mxu0 %v1850
    %v1934 = vpop.f32.mrb[0].mxu0
    %v1935 = vadd.f32 0.0, %v1934
    %v1936 = vpop.f32.mrb[0].mxu0
    %1937 = vmatprep.mubr.f32.mxu0 0.0
    %1938 = vmatmul.mubr.f32.gmra.mrb[0].mxu0 %v1853
    %v1939 = vpop.f32.mrb[0].mxu0
    %v1940 = vadd.f32 0.0, %v1939
    %v1941 = vpop.f32.mrb[0].mxu0
    %1942 = vmatprep.mubr.f32.mxu0 0.0
    %1943 = vmatmul.mubr.f32.gmra.mrb[0].mxu0 %v1856
    %v1944 = vpop.f32.mrb[0].mxu0
    %v1945 = vadd.f32 0.0, %v1944
    %v1946 = vpop.f32.mrb[0].mxu0
    %1947 = vmatprep.mubr.f32.mxu0 0.0
    %1948 = vmatmul.mubr.f32.gmra.mrb[0].mxu0 %v1859
    %v1949 = vpop.f32.mrb[0].mxu0
    %v1950 = vadd.f32 0.0, %v1949
    %v1951 = vpop.f32.mrb[0].mxu0
    %1952 = vdwg.mxu0
    %v1954 = vsel %vm425, %v1930, 0
    %v1957 = vsel %vm425, %v1935, 0
    %v1960 = vsel %vm425, %v1940, 0
    %v1963 = vsel %vm425, %v1945, 0
    %v1966 = vsel %vm425, %v1950, 0
    %1968 = vmatprep.subr.mxu0 0.0
    %1969 = vmatpush1.msra.mxu0 %v409
    %1970 = vmatprep.subr.mxu0 0.0
    %1971 = vmatpush1.msra.mxu0 0.0
    %1972 = vmatprep.subr.mxu0 0.0
    %1973 = vmatpush1.msra.mxu0 0.0
    %1974 = vmatprep.subr.mxu0 0.0
    %1975 = vmatpush1.msra.mxu0 0.0
    %1976 = vmatprep.subr.mxu0 0.0
    %1977 = vmatpush1.msra.mxu0 0.0
    %1978 = vmatprep.subr.mxu0 0.0
    %1979 = vmatpush1.msra.mxu0 0.0
    %1980 = vmatprep.subr.mxu0 0.0
    %1981 = vmatpush1.msra.mxu0 0.0
    %1982 = vmatprep.subr.mxu0 0.0
    %1983 = vmatpush1.msra.mxu0 0.0
    %1984 = vmatprep.subr.mxu0 0.0
    %1985 = vmatpush1.msra.mxu0 0.0
    %1986 = vmatprep.subr.mxu0 0.0
    %1987 = vmatpush1.msra.mxu0 0.0
    %1988 = vmatprep.subr.mxu0 0.0
    %1989 = vmatpush1.msra.mxu0 0.0
    %1990 = vmatprep.subr.mxu0 0.0
    %1991 = vmatpush1.msra.mxu0 0.0
    %1992 = vmatprep.subr.mxu0 0.0
    %1993 = vmatpush1.msra.mxu0 0.0
    %1994 = vmatprep.subr.mxu0 0.0
    %1995 = vmatpush1.msra.mxu0 0.0
    %1996 = vmatprep.subr.mxu0 0.0
    %1997 = vmatpush1.msra.mxu0 0.0
    %1998 = vmatprep.subr.mxu0 0.0
    %1999 = vmatpush1.msra.mxu0 0.0
    %2000 = vmatprep.subr.mxu0 0.0
    %2001 = vmatpush1.msra.mxu0 0.0
    %2002 = vmatprep.subr.mxu0 0.0
    %2003 = vmatpush1.msra.mxu0 0.0
    %2004 = vmatprep.subr.mxu0 0.0
    %2005 = vmatpush1.msra.mxu0 0.0
    %2006 = vmatprep.subr.mxu0 0.0
    %2007 = vmatpush1.msra.mxu0 0.0
    %2008 = vmatprep.subr.mxu0 0.0
    %2009 = vmatpush1.msra.mxu0 0.0
    %2010 = vmatprep.subr.mxu0 0.0
    %2011 = vmatpush1.msra.mxu0 0.0
    %2012 = vmatprep.subr.mxu0 0.0
    %2013 = vmatpush1.msra.mxu0 0.0
    %2014 = vmatprep.subr.mxu0 0.0
    %2015 = vmatpush1.msra.mxu0 0.0
    %2016 = vmatprep.subr.mxu0 0.0
    %2017 = vmatpush1.msra.mxu0 0.0
    %2018 = vmatprep.subr.mxu0 0.0
    %2019 = vmatpush1.msra.mxu0 0.0
    %2020 = vmatprep.subr.mxu0 0.0
    %2021 = vmatpush1.msra.mxu0 0.0
    %2022 = vmatprep.subr.mxu0 0.0
    %2023 = vmatpush1.msra.mxu0 0.0
    %2024 = vmatprep.subr.mxu0 0.0
    %2025 = vmatpush1.msra.mxu0 0.0
    %2026 = vmatprep.subr.mxu0 0.0
    %2027 = vmatpush1.msra.mxu0 0.0
    %2028 = vmatprep.subr.mxu0 0.0
    %2029 = vmatpush1.msra.mxu0 0.0
    %2030 = vmatprep.subr.mxu0 0.0
    %2031 = vmatpush1.msra.mxu0 0.0
    %2032 = vmatprep.mubr.f32.mxu0 0.0
    %2033 = vmatmul.mubr.f32.gmra.mrb[0].mxu0 %v1954
    %v2034 = vpop.f32.mrb[0].mxu0
    %v2035 = vadd.f32 0.0, %v2034
    %v2036 = vpop.f32.mrb[0].mxu0
    %2037 = vmatprep.mubr.f32.mxu0 0.0
    %2038 = vmatmul.mubr.f32.gmra.mrb[0].mxu0 %v1957
    %v2039 = vpop.f32.mrb[0].mxu0
    %v2040 = vadd.f32 0.0, %v2039
    %v2041 = vpop.f32.mrb[0].mxu0
    %2042 = vmatprep.mubr.f32.mxu0 0.0
    %2043 = vmatmul.mubr.f32.gmra.mrb[0].mxu0 %v1960
    %v2044 = vpop.f32.mrb[0].mxu0
    %v2045 = vadd.f32 0.0, %v2044
    %v2046 = vpop.f32.mrb[0].mxu0
    %2047 = vmatprep.mubr.f32.mxu0 0.0
    %2048 = vmatmul.mubr.f32.gmra.mrb[0].mxu0 %v1963
    %v2049 = vpop.f32.mrb[0].mxu0
    %v2050 = vadd.f32 0.0, %v2049
    %v2051 = vpop.f32.mrb[0].mxu0
    %2052 = vmatprep.mubr.f32.mxu0 0.0
    %2053 = vmatmul.mubr.f32.gmra.mrb[0].mxu0 %v1966
    %v2054 = vpop.f32.mrb[0].mxu0
    %v2055 = vadd.f32 0.0, %v2054
    %v2056 = vpop.f32.mrb[0].mxu0
    %2057 = vdwg.mxu0
    %v2058 = vadd.f32 %v1642, %v2035
    %v2059 = vadd.f32 %v1643, %v2040
    %v2060 = vadd.f32 %v1644, %v2045
    %v2061 = vadd.f32 %v1645, %v2050
    %v2062 = vadd.f32 %v1646, %v2055
    %v2063 = vld [vmem:[%s10] sm:$0x1]
    %v2065 = vlaneseq
    %v2066 = vshrl.u32 %v2065, 7
    %v2067 = vsub.s32 0, %v2066
    %v2068 = vrot.slane %v2063, %v2067
    %v2070 = vadd.f32 %v2058, %v2068
    %v2071 = vadd.f32 %v2059, %v2068
    %v2072 = vadd.f32 %v2060, %v2068
    %v2073 = vadd.f32 %v2061, %v2068
    %v2074 = vadd.f32 %v2062, %v2068
    %v2075 = vadd.f32 %v170, %v2070
    %v2076 = vadd.f32 %v175, %v2071
    %v2077 = vadd.f32 %v180, %v2072
    %v2078 = vadd.f32 %v185, %v2073
    %v2079 = vadd.f32 %v190, %v2074
    %v2080 = vld [vmem:[%s11] sm:$0x1]
    %v2081 = vld [vmem:[%s12] sm:$0x1]
    %v2082 = vsel %vm200, %v2075, 0.0
    %2083 = vadd.xlane.f32.xlu0 %v2082
    %v2084 = vpop.xlane.xlu0 %2083
    %v2085 = vsel %vm200, %v2076, 0.0
    %2086 = vadd.xlane.f32.xlu0 %v2085
    %v2087 = vpop.xlane.xlu0 %2086
    %v2088 = vsel %vm200, %v2077, 0.0
    %2089 = vadd.xlane.f32.xlu0 %v2088
    %v2090 = vpop.xlane.xlu0 %2089
    %v2091 = vsel %vm200, %v2078, 0.0
    %2092 = vadd.xlane.f32.xlu0 %v2091
    %v2093 = vpop.xlane.xlu0 %2092
    %v2094 = vsel %vm213, %v2079, 0.0
    %2095 = vadd.xlane.f32.xlu0 %v2094
    %v2096 = vpop.xlane.xlu0 %2095
    %v2097 = vmul.f32 %v2084, %v217
    %v2098 = vmul.f32 %v2087, %v217
    %v2099 = vmul.f32 %v2090, %v217
    %v2100 = vmul.f32 %v2093, %v217
    %v2101 = vmul.f32 %v2096, %v217
    %v2102 = vsub.f32 %v2075, %v2097
    %v2103 = vsub.f32 %v2076, %v2098
    %v2104 = vsub.f32 %v2077, %v2099
    %v2105 = vsub.f32 %v2078, %v2100
    %v2106 = vsub.f32 %v2079, %v2101
    %v2107 = vmul.f32 %v2102, %v2102
    %v2108 = vmul.f32 %v2103, %v2103
    %v2109 = vmul.f32 %v2104, %v2104
    %v2110 = vmul.f32 %v2105, %v2105
    %v2111 = vmul.f32 %v2106, %v2106
    %v2112 = vsel %vm200, %v2107, 0.0
    %2113 = vadd.xlane.f32.xlu0 %v2112
    %v2114 = vpop.xlane.xlu0 %2113
    %v2115 = vsel %vm200, %v2108, 0.0
    %2116 = vadd.xlane.f32.xlu0 %v2115
    %v2117 = vpop.xlane.xlu0 %2116
    %v2118 = vsel %vm200, %v2109, 0.0
    %2119 = vadd.xlane.f32.xlu0 %v2118
    %v2120 = vpop.xlane.xlu0 %2119
    %v2121 = vsel %vm200, %v2110, 0.0
    %2122 = vadd.xlane.f32.xlu0 %v2121
    %v2123 = vpop.xlane.xlu0 %2122
    %v2124 = vsel %vm213, %v2111, 0.0
    %2125 = vadd.xlane.f32.xlu0 %v2124
    %v2126 = vpop.xlane.xlu0 %2125
    %v2127 = vmul.f32 %v2114, %v217
    %v2128 = vmul.f32 %v2117, %v217
    %v2129 = vmul.f32 %v2120, %v217
    %v2130 = vmul.f32 %v2123, %v217
    %v2131 = vmul.f32 %v2126, %v217
    %v2132 = vadd.f32 %v2127, 1e-05
    %v2133 = vadd.f32 %v2128, 1e-05
    %v2134 = vadd.f32 %v2129, 1e-05
    %v2135 = vadd.f32 %v2130, 1e-05
    %v2136 = vadd.f32 %v2131, 1e-05
    %v2137 = vrsqrt.pop %v2132
    %v2138 = vrsqrt.pop %v2133
    %v2139 = vrsqrt.pop %v2134
    %v2140 = vrsqrt.pop %v2135
    %v2141 = vrsqrt.pop %v2136
    %v2142 = vmul.f32 %v2102, %v2137
    %v2143 = vmul.f32 %v2103, %v2138
    %v2144 = vmul.f32 %v2104, %v2139
    %v2145 = vmul.f32 %v2105, %v2140
    %v2146 = vmul.f32 %v2106, %v2141
    %v2148 = vlaneseq
    %v2149 = vshrl.u32 %v2148, 7
    %v2150 = vsub.s32 0, %v2149
    %v2151 = vrot.slane %v2080, %v2150
    %v2153 = vmul.f32 %v2142, %v2151
    %v2154 = vmul.f32 %v2143, %v2151
    %v2155 = vmul.f32 %v2144, %v2151
    %v2156 = vmul.f32 %v2145, %v2151
    %v2157 = vmul.f32 %v2146, %v2151
    %v2159 = vlaneseq
    %v2160 = vshrl.u32 %v2159, 7
    %v2161 = vsub.s32 0, %v2160
    %v2162 = vrot.slane %v2081, %v2161
    %v2164 = vadd.f32 %v2153, %v2162
    %v2165 = vadd.f32 %v2154, %v2162
    %v2166 = vadd.f32 %v2155, %v2162
    %v2167 = vadd.f32 %v2156, %v2162
    %v2168 = vadd.f32 %v2157, %v2162
    %v2169 = vld [vmem:[%s13] sm:$0xff]
    %v2170 = vld [vmem:[%s13 + $0x8] sm:$0xff]
    %v2171 = vld [vmem:[%s13 + $0x10] sm:$0xff]
    %v2172 = vld [vmem:[%s13 + $0x18] sm:$0xff]
    %v2173 = vld [vmem:[%s14] sm:$0x1]
    %v2175 = vlaneseq
    %v2176 = vshrl.u32 %v2175, 7
    %v2177 = vsub.s32 0, %v2176
    %v2178 = vrot.slane %v2173, %v2177
    %v2181 = vsel %vm200, %v2164, 0
    %v2184 = vsel %vm200, %v2165, 0
    %v2187 = vsel %vm200, %v2166, 0
    %v2190 = vsel %vm200, %v2167, 0
    %v2193 = vsel %vm200, %v2168, 0
    %2195 = vmatprep.subr.mxu0 0.0
    %2196 = vmatpush1.msra.mxu0 %v2169
    %2197 = vmatprep.subr.mxu0 0.0
    %2198 = vmatpush1.msra.mxu0 %v2170
    %2199 = vmatprep.subr.mxu0 0.0
    %2200 = vmatpush1.msra.mxu0 %v2171
    %2201 = vmatprep.subr.mxu0 0.0
    %2202 = vmatpush1.msra.mxu0 %v2172
    %2203 = vmatprep.subr.mxu0 0.0
    %2204 = vmatpush1.msra.mxu0 0.0
    %2205 = vmatprep.subr.mxu0 0.0
    %2206 = vmatpush1.msra.mxu0 0.0
    %2207 = vmatprep.subr.mxu0 0.0
    %2208 = vmatpush1.msra.mxu0 0.0
    %2209 = vmatprep.subr.mxu0 0.0
    %2210 = vmatpush1.msra.mxu0 0.0
    %2211 = vmatprep.subr.mxu0 0.0
    %2212 = vmatpush1.msra.mxu0 0.0
    %2213 = vmatprep.subr.mxu0 0.0
    %2214 = vmatpush1.msra.mxu0 0.0
    %2215 = vmatprep.subr.mxu0 0.0
    %2216 = vmatpush1.msra.mxu0 0.0
    %2217 = vmatprep.subr.mxu0 0.0
    %2218 = vmatpush1.msra.mxu0 0.0
    %2219 = vmatprep.subr.mxu0 0.0
    %2220 = vmatpush1.msra.mxu0 0.0
    %2221 = vmatprep.subr.mxu0 0.0
    %2222 = vmatpush1.msra.mxu0 0.0
    %2223 = vmatprep.subr.mxu0 0.0
    %2224 = vmatpush1.msra.mxu0 0.0
    %2225 = vmatprep.subr.mxu0 0.0
    %2226 = vmatpush1.msra.mxu0 0.0
    %2227 = vmatprep.subr.mxu0 0.0
    %2228 = vmatpush1.msra.mxu0 0.0
    %2229 = vmatprep.subr.mxu0 0.0
    %2230 = vmatpush1.msra.mxu0 0.0
    %2231 = vmatprep.subr.mxu0 0.0
    %2232 = vmatpush1.msra.mxu0 0.0
    %2233 = vmatprep.subr.mxu0 0.0
    %2234 = vmatpush1.msra.mxu0 0.0
    %2235 = vmatprep.subr.mxu0 0.0
    %2236 = vmatpush1.msra.mxu0 0.0
    %2237 = vmatprep.subr.mxu0 0.0
    %2238 = vmatpush1.msra.mxu0 0.0
    %2239 = vmatprep.subr.mxu0 0.0
    %2240 = vmatpush1.msra.mxu0 0.0
    %2241 = vmatprep.subr.mxu0 0.0
    %2242 = vmatpush1.msra.mxu0 0.0
    %2243 = vmatprep.subr.mxu0 0.0
    %2244 = vmatpush1.msra.mxu0 0.0
    %2245 = vmatprep.subr.mxu0 0.0
    %2246 = vmatpush1.msra.mxu0 0.0
    %2247 = vmatprep.subr.mxu0 0.0
    %2248 = vmatpush1.msra.mxu0 0.0
    %2249 = vmatprep.subr.mxu0 0.0
    %2250 = vmatpush1.msra.mxu0 0.0
    %2251 = vmatprep.subr.mxu0 0.0
    %2252 = vmatpush1.msra.mxu0 0.0
    %2253 = vmatprep.subr.mxu0 0.0
    %2254 = vmatpush1.msra.mxu0 0.0
    %2255 = vmatprep.subr.mxu0 0.0
    %2256 = vmatpush1.msra.mxu0 0.0
    %2257 = vmatprep.subr.mxu0 0.0
    %2258 = vmatpush1.msra.mxu0 0.0
    %2259 = vmatprep.mubr.f32.mxu0 0.0
    %2260 = vmatmul.mubr.f32.gmra.mrb[0].mxu0 %v2181
    %v2261 = vpop.f32.mrb[0].mxu0
    %v2262 = vadd.f32 %v2178, %v2261
    %v2263 = vpop.f32.mrb[0].mxu0
    %2264 = vmatprep.mubr.f32.mxu0 0.0
    %2265 = vmatmul.mubr.f32.gmra.mrb[0].mxu0 %v2184
    %v2266 = vpop.f32.mrb[0].mxu0
    %v2267 = vadd.f32 %v2178, %v2266
    %v2268 = vpop.f32.mrb[0].mxu0
    %2269 = vmatprep.mubr.f32.mxu0 0.0
    %2270 = vmatmul.mubr.f32.gmra.mrb[0].mxu0 %v2187
    %v2271 = vpop.f32.mrb[0].mxu0
    %v2272 = vadd.f32 %v2178, %v2271
    %v2273 = vpop.f32.mrb[0].mxu0
    %2274 = vmatprep.mubr.f32.mxu0 0.0
    %2275 = vmatmul.mubr.f32.gmra.mrb[0].mxu0 %v2190
    %v2276 = vpop.f32.mrb[0].mxu0
    %v2277 = vadd.f32 %v2178, %v2276
    %v2278 = vpop.f32.mrb[0].mxu0
    %2279 = vmatprep.mubr.f32.mxu0 0.0
    %2280 = vmatmul.mubr.f32.gmra.mrb[0].mxu0 %v2193
    %v2281 = vpop.f32.mrb[0].mxu0
    %v2282 = vadd.f32 %v2178, %v2281
    %v2283 = vpop.f32.mrb[0].mxu0
    %2284 = vdwg.mxu0
    %v2285 = vmul.f32 %v2262, 0.5
    %v2286 = vmul.f32 %v2267, 0.5
    %v2287 = vmul.f32 %v2272, 0.5
    %v2288 = vmul.f32 %v2277, 0.5
    %v2289 = vmul.f32 %v2282, 0.5
    %v2290 = vmul.f32 %v2262, 0.70710677
    %v2291 = vmul.f32 %v2267, 0.70710677
    %v2292 = vmul.f32 %v2272, 0.70710677
    %v2293 = vmul.f32 %v2277, 0.70710677
    %v2294 = vmul.f32 %v2282, 0.70710677
    %vm2295 = vcmp.ge.f32.partialorder %v2290, 0.0
    %vm2296 = vcmp.ge.f32.partialorder %v2291, 0.0
    %vm2297 = vcmp.ge.f32.partialorder %v2292, 0.0
    %vm2298 = vcmp.ge.f32.partialorder %v2293, 0.0
    %vm2299 = vcmp.ge.f32.partialorder %v2294, 0.0
    %v2300 = vsel %vm2295, 1.0, -1.0
    %v2301 = vsel %vm2296, 1.0, -1.0
    %v2302 = vsel %vm2297, 1.0, -1.0
    %v2303 = vsel %vm2298, 1.0, -1.0
    %v2304 = vsel %vm2299, 1.0, -1.0
    %v2305 = vand.u32 2147483647, %v2290
    %v2306 = vand.u32 2147483647, %v2291
    %v2307 = vand.u32 2147483647, %v2292
    %v2308 = vand.u32 2147483647, %v2293
    %v2309 = vand.u32 2147483647, %v2294
    %v2310 = vmul.f32 %v2305, 0.3275911
    %v2311 = vmul.f32 %v2306, 0.3275911
    %v2312 = vmul.f32 %v2307, 0.3275911
    %v2313 = vmul.f32 %v2308, 0.3275911
    %v2314 = vmul.f32 %v2309, 0.3275911
    %v2315 = vadd.f32 %v2310, 1.0
    %v2316 = vadd.f32 %v2311, 1.0
    %v2317 = vadd.f32 %v2312, 1.0
    %v2318 = vadd.f32 %v2313, 1.0
    %v2319 = vadd.f32 %v2314, 1.0
    %v2320 = vrcp.pop %v2315
    %v2321 = vmul.f32 1.0, %v2320
    %v2322 = vrcp.pop %v2316
    %v2323 = vmul.f32 1.0, %v2322
    %v2324 = vrcp.pop %v2317
    %v2325 = vmul.f32 1.0, %v2324
    %v2326 = vrcp.pop %v2318
    %v2327 = vmul.f32 1.0, %v2326
    %v2328 = vrcp.pop %v2319
    %v2329 = vmul.f32 1.0, %v2328
    %v2330 = vmul.f32 %v2321, 1.0614054
    %v2331 = vmul.f32 %v2323, 1.0614054
    %v2332 = vmul.f32 %v2325, 1.0614054
    %v2333 = vmul.f32 %v2327, 1.0614054
    %v2334 = vmul.f32 %v2329, 1.0614054
    %v2335 = vadd.f32 %v2330, -1.4531521
    %v2336 = vadd.f32 %v2331, -1.4531521
    %v2337 = vadd.f32 %v2332, -1.4531521
    %v2338 = vadd.f32 %v2333, -1.4531521
    %v2339 = vadd.f32 %v2334, -1.4531521
    %v2340 = vmul.f32 %v2335, %v2321
    %v2341 = vmul.f32 %v2336, %v2323
    %v2342 = vmul.f32 %v2337, %v2325
    %v2343 = vmul.f32 %v2338, %v2327
    %v2344 = vmul.f32 %v2339, %v2329
    %v2345 = vadd.f32 %v2340, 1.4214138
    %v2346 = vadd.f32 %v2341, 1.4214138
    %v2347 = vadd.f32 %v2342, 1.4214138
    %v2348 = vadd.f32 %v2343, 1.4214138
    %v2349 = vadd.f32 %v2344, 1.4214138
    %v2350 = vmul.f32 %v2345, %v2321
    %v2351 = vmul.f32 %v2346, %v2323
    %v2352 = vmul.f32 %v2347, %v2325
    %v2353 = vmul.f32 %v2348, %v2327
    %v2354 = vmul.f32 %v2349, %v2329
    %v2355 = vadd.f32 %v2350, -0.28449672
    %v2356 = vadd.f32 %v2351, -0.28449672
    %v2357 = vadd.f32 %v2352, -0.28449672
    %v2358 = vadd.f32 %v2353, -0.28449672
    %v2359 = vadd.f32 %v2354, -0.28449672
    %v2360 = vmul.f32 %v2355, %v2321
    %v2361 = vmul.f32 %v2356, %v2323
    %v2362 = vmul.f32 %v2357, %v2325
    %v2363 = vmul.f32 %v2358, %v2327
    %v2364 = vmul.f32 %v2359, %v2329
    %v2365 = vadd.f32 %v2360, 0.2548296
    %v2366 = vadd.f32 %v2361, 0.2548296
    %v2367 = vadd.f32 %v2362, 0.2548296
    %v2368 = vadd.f32 %v2363, 0.2548296
    %v2369 = vadd.f32 %v2364, 0.2548296
    %v2370 = vmul.f32 %v2365, %v2321
    %v2371 = vmul.f32 %v2366, %v2323
    %v2372 = vmul.f32 %v2367, %v2325
    %v2373 = vmul.f32 %v2368, %v2327
    %v2374 = vmul.f32 %v2369, %v2329
    %v2375 = vsub.f32 0.0, %v2305
    %v2376 = vsub.f32 0.0, %v2306
    %v2377 = vsub.f32 0.0, %v2307
    %v2378 = vsub.f32 0.0, %v2308
    %v2379 = vsub.f32 0.0, %v2309
    %v2380 = vmul.f32 %v2375, %v2305
    %v2381 = vmul.f32 %v2376, %v2306
    %v2382 = vmul.f32 %v2377, %v2307
    %v2383 = vmul.f32 %v2378, %v2308
    %v2384 = vmul.f32 %v2379, %v2309
    %v2385 = vmul.f32 %v2380, 1.442695
    %v2386 = vpow.pop %v2385
    %v2387 = vmul.f32 %v2381, 1.442695
    %v2388 = vpow.pop %v2387
    %v2389 = vmul.f32 %v2382, 1.442695
    %v2390 = vpow.pop %v2389
    %v2391 = vmul.f32 %v2383, 1.442695
    %v2392 = vpow.pop %v2391
    %v2393 = vmul.f32 %v2384, 1.442695
    %v2394 = vpow.pop %v2393
    %v2395 = vmul.f32 %v2370, %v2386
    %v2396 = vmul.f32 %v2371, %v2388
    %v2397 = vmul.f32 %v2372, %v2390
    %v2398 = vmul.f32 %v2373, %v2392
    %v2399 = vmul.f32 %v2374, %v2394
    %v2400 = vsub.f32 1.0, %v2395
    %v2401 = vsub.f32 1.0, %v2396
    %v2402 = vsub.f32 1.0, %v2397
    %v2403 = vsub.f32 1.0, %v2398
    %v2404 = vsub.f32 1.0, %v2399
    %v2405 = vmul.f32 %v2300, %v2400
    %v2406 = vmul.f32 %v2301, %v2401
    %v2407 = vmul.f32 %v2302, %v2402
    %v2408 = vmul.f32 %v2303, %v2403
    %v2409 = vmul.f32 %v2304, %v2404
    %v2410 = vadd.f32 %v2405, 1.0
    %v2411 = vadd.f32 %v2406, 1.0
    %v2412 = vadd.f32 %v2407, 1.0
    %v2413 = vadd.f32 %v2408, 1.0
    %v2414 = vadd.f32 %v2409, 1.0
    %v2415 = vmul.f32 %v2285, %v2410
    %v2416 = vmul.f32 %v2286, %v2411
    %v2417 = vmul.f32 %v2287, %v2412
    %v2418 = vmul.f32 %v2288, %v2413
    %v2419 = vmul.f32 %v2289, %v2414
    %v2420 = vld [vmem:[%s15] sm:$0xff]
    %v2421 = vld [vmem:[%s15 + $0x8] sm:$0xff]
    %v2422 = vld [vmem:[%s15 + $0x10] sm:$0xff]
    %v2423 = vld [vmem:[%s15 + $0x18] sm:$0xff]
    %v2424 = vld [vmem:[%s15 + $0x20] sm:$0xff]
    %v2425 = vld [vmem:[%s15 + $0x28] sm:$0xff]
    %v2426 = vld [vmem:[%s15 + $0x30] sm:$0xff]
    %v2427 = vld [vmem:[%s15 + $0x38] sm:$0xff]
    %v2428 = vld [vmem:[%s16] sm:$0x1]
    %v2430 = vlaneseq
    %v2431 = vshrl.u32 %v2430, 7
    %v2432 = vsub.s32 0, %v2431
    %v2433 = vrot.slane %v2428, %v2432
    %v2436 = vsel %vm87, %v2415, 0
    %v2439 = vsel %vm87, %v2416, 0
    %v2442 = vsel %vm87, %v2417, 0
    %v2445 = vsel %vm87, %v2418, 0
    %v2448 = vsel %vm87, %v2419, 0
    %2450 = vmatprep.subr.mxu0 0.0
    %2451 = vmatpush1.msra.mxu0 %v2420
    %2452 = vmatprep.subr.mxu0 0.0
    %2453 = vmatpush1.msra.mxu0 %v2421
    %2454 = vmatprep.subr.mxu0 0.0
    %2455 = vmatpush1.msra.mxu0 %v2422
    %2456 = vmatprep.subr.mxu0 0.0
    %2457 = vmatpush1.msra.mxu0 %v2423
    %2458 = vmatprep.subr.mxu0 0.0
    %2459 = vmatpush1.msra.mxu0 %v2424
    %2460 = vmatprep.subr.mxu0 0.0
    %2461 = vmatpush1.msra.mxu0 %v2425
    %2462 = vmatprep.subr.mxu0 0.0
    %2463 = vmatpush1.msra.mxu0 %v2426
    %2464 = vmatprep.subr.mxu0 0.0
    %2465 = vmatpush1.msra.mxu0 %v2427
    %2466 = vmatprep.subr.mxu0 0.0
    %2467 = vmatpush1.msra.mxu0 0.0
    %2468 = vmatprep.subr.mxu0 0.0
    %2469 = vmatpush1.msra.mxu0 0.0
    %2470 = vmatprep.subr.mxu0 0.0
    %2471 = vmatpush1.msra.mxu0 0.0
    %2472 = vmatprep.subr.mxu0 0.0
    %2473 = vmatpush1.msra.mxu0 0.0
    %2474 = vmatprep.subr.mxu0 0.0
    %2475 = vmatpush1.msra.mxu0 0.0
    %2476 = vmatprep.subr.mxu0 0.0
    %2477 = vmatpush1.msra.mxu0 0.0
    %2478 = vmatprep.subr.mxu0 0.0
    %2479 = vmatpush1.msra.mxu0 0.0
    %2480 = vmatprep.subr.mxu0 0.0
    %2481 = vmatpush1.msra.mxu0 0.0
    %2482 = vmatprep.subr.mxu0 0.0
    %2483 = vmatpush1.msra.mxu0 0.0
    %2484 = vmatprep.subr.mxu0 0.0
    %2485 = vmatpush1.msra.mxu0 0.0
    %2486 = vmatprep.subr.mxu0 0.0
    %2487 = vmatpush1.msra.mxu0 0.0
    %2488 = vmatprep.subr.mxu0 0.0
    %2489 = vmatpush1.msra.mxu0 0.0
    %2490 = vmatprep.subr.mxu0 0.0
    %2491 = vmatpush1.msra.mxu0 0.0
    %2492 = vmatprep.subr.mxu0 0.0
    %2493 = vmatpush1.msra.mxu0 0.0
    %2494 = vmatprep.subr.mxu0 0.0
    %2495 = vmatpush1.msra.mxu0 0.0
    %2496 = vmatprep.subr.mxu0 0.0
    %2497 = vmatpush1.msra.mxu0 0.0
    %2498 = vmatprep.subr.mxu0 0.0
    %2499 = vmatpush1.msra.mxu0 0.0
    %2500 = vmatprep.subr.mxu0 0.0
    %2501 = vmatpush1.msra.mxu0 0.0
    %2502 = vmatprep.subr.mxu0 0.0
    %2503 = vmatpush1.msra.mxu0 0.0
    %2504 = vmatprep.subr.mxu0 0.0
    %2505 = vmatpush1.msra.mxu0 0.0
    %2506 = vmatprep.subr.mxu0 0.0
    %2507 = vmatpush1.msra.mxu0 0.0
    %2508 = vmatprep.subr.mxu0 0.0
    %2509 = vmatpush1.msra.mxu0 0.0
    %2510 = vmatprep.subr.mxu0 0.0
    %2511 = vmatpush1.msra.mxu0 0.0
    %2512 = vmatprep.subr.mxu0 0.0
    %2513 = vmatpush1.msra.mxu0 0.0
    %2514 = vmatprep.mubr.f32.mxu0 0.0
    %2515 = vmatmul.mubr.f32.gmra.mrb[0].mxu0 %v2436
    %v2516 = vpop.f32.mrb[0].mxu0
    %v2517 = vadd.f32 %v2433, %v2516
    %v2518 = vpop.f32.mrb[0].mxu0
    %2519 = vmatprep.mubr.f32.mxu0 0.0
    %2520 = vmatmul.mubr.f32.gmra.mrb[0].mxu0 %v2439
    %v2521 = vpop.f32.mrb[0].mxu0
    %v2522 = vadd.f32 %v2433, %v2521
    %v2523 = vpop.f32.mrb[0].mxu0
    %2524 = vmatprep.mubr.f32.mxu0 0.0
    %2525 = vmatmul.mubr.f32.gmra.mrb[0].mxu0 %v2442
    %v2526 = vpop.f32.mrb[0].mxu0
    %v2527 = vadd.f32 %v2433, %v2526
    %v2528 = vpop.f32.mrb[0].mxu0
    %2529 = vmatprep.mubr.f32.mxu0 0.0
    %2530 = vmatmul.mubr.f32.gmra.mrb[0].mxu0 %v2445
    %v2531 = vpop.f32.mrb[0].mxu0
    %v2532 = vadd.f32 %v2433, %v2531
    %v2533 = vpop.f32.mrb[0].mxu0
    %2534 = vmatprep.mubr.f32.mxu0 0.0
    %2535 = vmatmul.mubr.f32.gmra.mrb[0].mxu0 %v2448
    %v2536 = vpop.f32.mrb[0].mxu0
    %v2537 = vadd.f32 %v2433, %v2536
    %v2538 = vpop.f32.mrb[0].mxu0
    %2539 = vdwg.mxu0
    %v2540 = vadd.f32 %v2075, %v2517
    %v2541 = vadd.f32 %v2076, %v2522
    %v2542 = vadd.f32 %v2077, %v2527
    %v2543 = vadd.f32 %v2078, %v2532
    %v2544 = vadd.f32 %v2079, %v2537
    %s2545 = scalar_lea.vmem %s5, 1
    %v2546 = vld [vmem:[%s2545] sm:$0x1]
    %s2547 = scalar_lea.vmem %s6, 1
    %v2548 = vld [vmem:[%s2547] sm:$0x1]
    %v2549 = vsel %vm200, %v2540, 0.0
    %2550 = vadd.xlane.f32.xlu0 %v2549
    %v2551 = vpop.xlane.xlu0 %2550
    %v2552 = vsel %vm200, %v2541, 0.0
    %2553 = vadd.xlane.f32.xlu0 %v2552
    %v2554 = vpop.xlane.xlu0 %2553
    %v2555 = vsel %vm200, %v2542, 0.0
    %2556 = vadd.xlane.f32.xlu0 %v2555
    %v2557 = vpop.xlane.xlu0 %2556
    %v2558 = vsel %vm200, %v2543, 0.0
    %2559 = vadd.xlane.f32.xlu0 %v2558
    %v2560 = vpop.xlane.xlu0 %2559
    %v2561 = vsel %vm213, %v2544, 0.0
    %2562 = vadd.xlane.f32.xlu0 %v2561
    %v2563 = vpop.xlane.xlu0 %2562
    %v2564 = vmul.f32 %v2551, %v217
    %v2565 = vmul.f32 %v2554, %v217
    %v2566 = vmul.f32 %v2557, %v217
    %v2567 = vmul.f32 %v2560, %v217
    %v2568 = vmul.f32 %v2563, %v217
    %v2569 = vsub.f32 %v2540, %v2564
    %v2570 = vsub.f32 %v2541, %v2565
    %v2571 = vsub.f32 %v2542, %v2566
    %v2572 = vsub.f32 %v2543, %v2567
    %v2573 = vsub.f32 %v2544, %v2568
    %v2574 = vmul.f32 %v2569, %v2569
    %v2575 = vmul.f32 %v2570, %v2570
    %v2576 = vmul.f32 %v2571, %v2571
    %v2577 = vmul.f32 %v2572, %v2572
    %v2578 = vmul.f32 %v2573, %v2573
    %v2579 = vsel %vm200, %v2574, 0.0
    %2580 = vadd.xlane.f32.xlu0 %v2579
    %v2581 = vpop.xlane.xlu0 %2580
    %v2582 = vsel %vm200, %v2575, 0.0
    %2583 = vadd.xlane.f32.xlu0 %v2582
    %v2584 = vpop.xlane.xlu0 %2583
    %v2585 = vsel %vm200, %v2576, 0.0
    %2586 = vadd.xlane.f32.xlu0 %v2585
    %v2587 = vpop.xlane.xlu0 %2586
    %v2588 = vsel %vm200, %v2577, 0.0
    %2589 = vadd.xlane.f32.xlu0 %v2588
    %v2590 = vpop.xlane.xlu0 %2589
    %v2591 = vsel %vm213, %v2578, 0.0
    %2592 = vadd.xlane.f32.xlu0 %v2591
    %v2593 = vpop.xlane.xlu0 %2592
    %v2594 = vmul.f32 %v2581, %v217
    %v2595 = vmul.f32 %v2584, %v217
    %v2596 = vmul.f32 %v2587, %v217
    %v2597 = vmul.f32 %v2590, %v217
    %v2598 = vmul.f32 %v2593, %v217
    %v2599 = vadd.f32 %v2594, 1e-05
    %v2600 = vadd.f32 %v2595, 1e-05
    %v2601 = vadd.f32 %v2596, 1e-05
    %v2602 = vadd.f32 %v2597, 1e-05
    %v2603 = vadd.f32 %v2598, 1e-05
    %v2604 = vrsqrt.pop %v2599
    %v2605 = vrsqrt.pop %v2600
    %v2606 = vrsqrt.pop %v2601
    %v2607 = vrsqrt.pop %v2602
    %v2608 = vrsqrt.pop %v2603
    %v2609 = vmul.f32 %v2569, %v2604
    %v2610 = vmul.f32 %v2570, %v2605
    %v2611 = vmul.f32 %v2571, %v2606
    %v2612 = vmul.f32 %v2572, %v2607
    %v2613 = vmul.f32 %v2573, %v2608
    %v2615 = vlaneseq
    %v2616 = vshrl.u32 %v2615, 7
    %v2617 = vsub.s32 0, %v2616
    %v2618 = vrot.slane %v2546, %v2617
    %v2620 = vmul.f32 %v2609, %v2618
    %v2621 = vmul.f32 %v2610, %v2618
    %v2622 = vmul.f32 %v2611, %v2618
    %v2623 = vmul.f32 %v2612, %v2618
    %v2624 = vmul.f32 %v2613, %v2618
    %v2626 = vlaneseq
    %v2627 = vshrl.u32 %v2626, 7
    %v2628 = vsub.s32 0, %v2627
    %v2629 = vrot.slane %v2548, %v2628
    %v2631 = vadd.f32 %v2620, %v2629
    %v2632 = vadd.f32 %v2621, %v2629
    %v2633 = vadd.f32 %v2622, %v2629
    %v2634 = vadd.f32 %v2623, %v2629
    %v2635 = vadd.f32 %v2624, %v2629
    %s2636 = scalar_lea.vmem %s7, 32
    %v2637 = vld [vmem:[%s2636] sm:$0xff]
    %v2638 = vld [vmem:[%s2636 + $0x8] sm:$0xff]
    %v2639 = vld [vmem:[%s2636 + $0x10] sm:$0xff]
    %v2640 = vld [vmem:[%s2636 + $0x18] sm:$0xff]
    %s2641 = scalar_lea.vmem %s8, 1
    %v2642 = vld [vmem:[%s2641] sm:$0x1]
    %v2644 = vlaneseq
    %v2645 = vshrl.u32 %v2644, 7
    %v2646 = vsub.s32 0, %v2645
    %v2647 = vrot.slane %v2642, %v2646
    %v2650 = vsel %vm200, %v2631, 0
    %v2653 = vsel %vm200, %v2632, 0
    %v2656 = vsel %vm200, %v2633, 0
    %v2659 = vsel %vm200, %v2634, 0
    %v2662 = vsel %vm200, %v2635, 0
    %2664 = vmatprep.subr.mxu0 0.0
    %2665 = vmatpush1.msra.mxu0 %v2637
    %2666 = vmatprep.subr.mxu0 0.0
    %2667 = vmatpush1.msra.mxu0 %v2638
    %2668 = vmatprep.subr.mxu0 0.0
    %2669 = vmatpush1.msra.mxu0 %v2639
    %2670 = vmatprep.subr.mxu0 0.0
    %2671 = vmatpush1.msra.mxu0 %v2640
    %2672 = vmatprep.subr.mxu0 0.0
    %2673 = vmatpush1.msra.mxu0 0.0
    %2674 = vmatprep.subr.mxu0 0.0
    %2675 = vmatpush1.msra.mxu0 0.0
    %2676 = vmatprep.subr.mxu0 0.0
    %2677 = vmatpush1.msra.mxu0 0.0
    %2678 = vmatprep.subr.mxu0 0.0
    %2679 = vmatpush1.msra.mxu0 0.0
    %2680 = vmatprep.subr.mxu0 0.0
    %2681 = vmatpush1.msra.mxu0 0.0
    %2682 = vmatprep.subr.mxu0 0.0
    %2683 = vmatpush1.msra.mxu0 0.0
    %2684 = vmatprep.subr.mxu0 0.0
    %2685 = vmatpush1.msra.mxu0 0.0
    %2686 = vmatprep.subr.mxu0 0.0
    %2687 = vmatpush1.msra.mxu0 0.0
    %2688 = vmatprep.subr.mxu0 0.0
    %2689 = vmatpush1.msra.mxu0 0.0
    %2690 = vmatprep.subr.mxu0 0.0
    %2691 = vmatpush1.msra.mxu0 0.0
    %2692 = vmatprep.subr.mxu0 0.0
    %2693 = vmatpush1.msra.mxu0 0.0
    %2694 = vmatprep.subr.mxu0 0.0
    %2695 = vmatpush1.msra.mxu0 0.0
    %2696 = vmatprep.subr.mxu0 0.0
    %2697 = vmatpush1.msra.mxu0 0.0
    %2698 = vmatprep.subr.mxu0 0.0
    %2699 = vmatpush1.msra.mxu0 0.0
    %2700 = vmatprep.subr.mxu0 0.0
    %2701 = vmatpush1.msra.mxu0 0.0
    %2702 = vmatprep.subr.mxu0 0.0
    %2703 = vmatpush1.msra.mxu0 0.0
    %2704 = vmatprep.subr.mxu0 0.0
    %2705 = vmatpush1.msra.mxu0 0.0
    %2706 = vmatprep.subr.mxu0 0.0
    %2707 = vmatpush1.msra.mxu0 0.0
    %2708 = vmatprep.subr.mxu0 0.0
    %2709 = vmatpush1.msra.mxu0 0.0
    %2710 = vmatprep.subr.mxu0 0.0
    %2711 = vmatpush1.msra.mxu0 0.0
    %2712 = vmatprep.subr.mxu0 0.0
    %2713 = vmatpush1.msra.mxu0 0.0
    %2714 = vmatprep.subr.mxu0 0.0
    %2715 = vmatpush1.msra.mxu0 0.0
    %2716 = vmatprep.subr.mxu0 0.0
    %2717 = vmatpush1.msra.mxu0 0.0
    %2718 = vmatprep.subr.mxu0 0.0
    %2719 = vmatpush1.msra.mxu0 0.0
    %2720 = vmatprep.subr.mxu0 0.0
    %2721 = vmatpush1.msra.mxu0 0.0
    %2722 = vmatprep.subr.mxu0 0.0
    %2723 = vmatpush1.msra.mxu0 0.0
    %2724 = vmatprep.subr.mxu0 0.0
    %2725 = vmatpush1.msra.mxu0 0.0
    %2726 = vmatprep.subr.mxu0 0.0
    %2727 = vmatpush1.msra.mxu0 0.0
    %2728 = vmatprep.mubr.f32.mxu0 0.0
    %2729 = vmatmul.mubr.f32.gmra.mrb[0].mxu0 %v2650
    %v2730 = vpop.f32.mrb[0].mxu0
    %v2731 = vadd.f32 %v2647, %v2730
    %v2732 = vpop.f32.mrb[0].mxu0
    %2733 = vmatprep.mubr.f32.mxu0 0.0
    %2734 = vmatmul.mubr.f32.gmra.mrb[0].mxu0 %v2653
    %v2735 = vpop.f32.mrb[0].mxu0
    %v2736 = vadd.f32 %v2647, %v2735
    %v2737 = vpop.f32.mrb[0].mxu0
    %2738 = vmatprep.mubr.f32.mxu0 0.0
    %2739 = vmatmul.mubr.f32.gmra.mrb[0].mxu0 %v2656
    %v2740 = vpop.f32.mrb[0].mxu0
    %v2741 = vadd.f32 %v2647, %v2740
    %v2742 = vpop.f32.mrb[0].mxu0
    %2743 = vmatprep.mubr.f32.mxu0 0.0
    %2744 = vmatmul.mubr.f32.gmra.mrb[0].mxu0 %v2659
    %v2745 = vpop.f32.mrb[0].mxu0
    %v2746 = vadd.f32 %v2647, %v2745
    %v2747 = vpop.f32.mrb[0].mxu0
    %2748 = vmatprep.mubr.f32.mxu0 0.0
    %2749 = vmatmul.mubr.f32.gmra.mrb[0].mxu0 %v2662
    %v2750 = vpop.f32.mrb[0].mxu0
    %v2751 = vadd.f32 %v2647, %v2750
    %v2752 = vpop.f32.mrb[0].mxu0
    %2753 = vdwg.mxu0
    %s2754 = scalar_lea.vmem %s9, 32
    %v2755 = vld [vmem:[%s2754] sm:$0xff]
    %v2756 = vld [vmem:[%s2754 + $0x8] sm:$0xff]
    %v2757 = vld [vmem:[%s2754 + $0x10] sm:$0xff]
    %v2758 = vld [vmem:[%s2754 + $0x18] sm:$0xff]
    %2764 = vrot.lane.b32.xlu0 %v2731, 96
    %v2765 = vpop.permute.xlu0 %2764
    %2766 = vrot.lane.b32.xlu0 %v2736, 96
    %v2767 = vpop.permute.xlu0 %2766
    %2768 = vrot.lane.b32.xlu0 %v2741, 96
    %v2769 = vpop.permute.xlu0 %2768
    %2770 = vrot.lane.b32.xlu0 %v2746, 96
    %v2771 = vpop.permute.xlu0 %2770
    %2772 = vrot.lane.b32.xlu0 %v2751, 96
    %v2773 = vpop.permute.xlu0 %2772
    %v2774 = vsel %vm425, %v2731, 0
    %v2776 = vsel %vm425, %v2736, 0
    %v2778 = vsel %vm425, %v2741, 0
    %v2780 = vsel %vm425, %v2746, 0
    %v2782 = vsel %vm425, %v2751, 0
    %v2784 = vsel %vm425, %v2765, 0
    %v2786 = vsel %vm425, %v2767, 0
    %v2788 = vsel %vm425, %v2769, 0
    %v2790 = vsel %vm425, %v2771, 0
    %v2792 = vsel %vm425, %v2773, 0
    %2794 = vmatprep.subr.mxu0 0.0
    %2795 = vmatpush1.xpose.msra.mxu0 %v2784
    %2796 = vmatprep.subr.mxu0 0.0
    %2797 = vmatpush1.xpose.msra.mxu0 %v2786
    %2798 = vmatprep.subr.mxu0 0.0
    %2799 = vmatpush1.xpose.msra.mxu0 %v2788
    %2800 = vmatprep.subr.mxu0 0.0
    %2801 = vmatpush1.xpose.msra.mxu0 %v2790
    %2802 = vmatprep.subr.mxu0 0.0
    %2803 = vmatpush1.xpose.msra.mxu0 %v2792
    %2804 = vmatprep.subr.mxu0 0.0
    %2805 = vmatpush1.xpose.msra.mxu0 0.0
    %2806 = vmatprep.subr.mxu0 0.0
    %2807 = vmatpush1.xpose.msra.mxu0 0.0
    %2808 = vmatprep.subr.mxu0 0.0
    %2809 = vmatpush1.xpose.msra.mxu0 0.0
    %2810 = vmatprep.subr.mxu0 0.0
    %2811 = vmatpush1.xpose.msra.mxu0 0.0
    %2812 = vmatprep.subr.mxu0 0.0
    %2813 = vmatpush1.xpose.msra.mxu0 0.0
    %2814 = vmatprep.subr.mxu0 0.0
    %2815 = vmatpush1.xpose.msra.mxu0 0.0
    %2816 = vmatprep.subr.mxu0 0.0
    %2817 = vmatpush1.xpose.msra.mxu0 0.0
    %2818 = vmatprep.subr.mxu0 0.0
    %2819 = vmatpush1.xpose.msra.mxu0 0.0
    %2820 = vmatprep.subr.mxu0 0.0
    %2821 = vmatpush1.xpose.msra.mxu0 0.0
    %2822 = vmatprep.subr.mxu0 0.0
    %2823 = vmatpush1.xpose.msra.mxu0 0.0
    %2824 = vmatprep.subr.mxu0 0.0
    %2825 = vmatpush1.xpose.msra.mxu0 0.0
    %2826 = vmatprep.subr.mxu0 0.0
    %2827 = vmatpush1.xpose.msra.mxu0 0.0
    %2828 = vmatprep.subr.mxu0 0.0
    %2829 = vmatpush1.xpose.msra.mxu0 0.0
    %2830 = vmatprep.subr.mxu0 0.0
    %2831 = vmatpush1.xpose.msra.mxu0 0.0
    %2832 = vmatprep.subr.mxu0 0.0
    %2833 = vmatpush1.xpose.msra.mxu0 0.0
    %2834 = vmatprep.subr.mxu0 0.0
    %2835 = vmatpush1.xpose.msra.mxu0 0.0
    %2836 = vmatprep.subr.mxu0 0.0
    %2837 = vmatpush1.xpose.msra.mxu0 0.0
    %2838 = vmatprep.subr.mxu0 0.0
    %2839 = vmatpush1.xpose.msra.mxu0 0.0
    %2840 = vmatprep.subr.mxu0 0.0
    %2841 = vmatpush1.xpose.msra.mxu0 0.0
    %2842 = vmatprep.subr.mxu0 0.0
    %2843 = vmatpush1.xpose.msra.mxu0 0.0
    %2844 = vmatprep.subr.mxu0 0.0
    %2845 = vmatpush1.xpose.msra.mxu0 0.0
    %2846 = vmatprep.subr.mxu0 0.0
    %2847 = vmatpush1.xpose.msra.mxu0 0.0
    %2848 = vmatprep.subr.mxu0 0.0
    %2849 = vmatpush1.xpose.msra.mxu0 0.0
    %2850 = vmatprep.subr.mxu0 0.0
    %2851 = vmatpush1.xpose.msra.mxu0 0.0
    %2852 = vmatprep.subr.mxu0 0.0
    %2853 = vmatpush1.xpose.msra.mxu0 0.0
    %2854 = vmatprep.subr.mxu0 0.0
    %2855 = vmatpush1.xpose.msra.mxu0 0.0
    %2856 = vmatprep.subr.mxu0 0.0
    %2857 = vmatpush1.xpose.msra.mxu0 0.0
    %2858 = vmatprep.mubr.f32.mxu0 0.0
    %2859 = vmatmul.mubr.f32.gmra.mrb[0].mxu0 %v2774
    %v2860 = vpop.f32.mrb[0].mxu0
    %v2861 = vadd.f32 %v193, %v2860
    %v2862 = vpop.f32.mrb[0].mxu0
    %2863 = vmatprep.mubr.f32.mxu0 0.0
    %2864 = vmatmul.mubr.f32.gmra.mrb[0].mxu0 %v2776
    %v2865 = vpop.f32.mrb[0].mxu0
    %v2866 = vadd.f32 %v194, %v2865
    %v2867 = vpop.f32.mrb[0].mxu0
    %2868 = vmatprep.mubr.f32.mxu0 0.0
    %2869 = vmatmul.mubr.f32.gmra.mrb[0].mxu0 %v2778
    %v2870 = vpop.f32.mrb[0].mxu0
    %v2871 = vadd.f32 %v195, %v2870
    %v2872 = vpop.f32.mrb[0].mxu0
    %2873 = vmatprep.mubr.f32.mxu0 0.0
    %2874 = vmatmul.mubr.f32.gmra.mrb[0].mxu0 %v2780
    %v2875 = vpop.f32.mrb[0].mxu0
    %v2876 = vadd.f32 %v196, %v2875
    %v2877 = vpop.f32.mrb[0].mxu0
    %2878 = vmatprep.mubr.f32.mxu0 0.0
    %2879 = vmatmul.mubr.f32.gmra.mrb[0].mxu0 %v2782
    %v2880 = vpop.f32.mrb[0].mxu0
    %v2881 = vadd.f32 %v197, %v2880
    %v2882 = vpop.f32.mrb[0].mxu0
    %2883 = vdwg.mxu0
    %v2884 = vsel %vm536, %v2861, -inf
    %2885 = vmax.xlane.f32.xlu0 %v2884
    %v2886 = vpop.xlane.xlu0 %2885
    %v2887 = vsel %vm536, %v2866, -inf
    %2888 = vmax.xlane.f32.xlu0 %v2887
    %v2889 = vpop.xlane.xlu0 %2888
    %v2890 = vsel %vm536, %v2871, -inf
    %2891 = vmax.xlane.f32.xlu0 %v2890
    %v2892 = vpop.xlane.xlu0 %2891
    %v2893 = vsel %vm536, %v2876, -inf
    %2894 = vmax.xlane.f32.xlu0 %v2893
    %v2895 = vpop.xlane.xlu0 %2894
    %v2896 = vsel %vm549, %v2881, -inf
    %2897 = vmax.xlane.f32.xlu0 %v2896
    %v2898 = vpop.xlane.xlu0 %2897
    %v2899 = vsub.f32 %v2861, %v2886
    %v2900 = vsub.f32 %v2866, %v2889
    %v2901 = vsub.f32 %v2871, %v2892
    %v2902 = vsub.f32 %v2876, %v2895
    %v2903 = vsub.f32 %v2881, %v2898
    %v2904 = vmul.f32 %v2899, 1.442695
    %v2905 = vpow.pop %v2904
    %v2906 = vmul.f32 %v2900, 1.442695
    %v2907 = vpow.pop %v2906
    %v2908 = vmul.f32 %v2901, 1.442695
    %v2909 = vpow.pop %v2908
    %v2910 = vmul.f32 %v2902, 1.442695
    %v2911 = vpow.pop %v2910
    %v2912 = vmul.f32 %v2903, 1.442695
    %v2913 = vpow.pop %v2912
    %v2914 = vsel %vm536, %v2905, 0.0
    %2915 = vadd.xlane.f32.xlu0 %v2914
    %v2916 = vpop.xlane.xlu0 %2915
    %v2917 = vsel %vm536, %v2907, 0.0
    %2918 = vadd.xlane.f32.xlu0 %v2917
    %v2919 = vpop.xlane.xlu0 %2918
    %v2920 = vsel %vm536, %v2909, 0.0
    %2921 = vadd.xlane.f32.xlu0 %v2920
    %v2922 = vpop.xlane.xlu0 %2921
    %v2923 = vsel %vm536, %v2911, 0.0
    %2924 = vadd.xlane.f32.xlu0 %v2923
    %v2925 = vpop.xlane.xlu0 %2924
    %v2926 = vsel %vm549, %v2913, 0.0
    %2927 = vadd.xlane.f32.xlu0 %v2926
    %v2928 = vpop.xlane.xlu0 %2927
    %v2929 = vrcp.pop %v2916
    %v2930 = vmul.f32 %v2905, %v2929
    %v2931 = vrcp.pop %v2919
    %v2932 = vmul.f32 %v2907, %v2931
    %v2933 = vrcp.pop %v2922
    %v2934 = vmul.f32 %v2909, %v2933
    %v2935 = vrcp.pop %v2925
    %v2936 = vmul.f32 %v2911, %v2935
    %v2937 = vrcp.pop %v2928
    %v2938 = vmul.f32 %v2913, %v2937
    %2939 = vrot.lane.b32.xlu0 %v2731, 64
    %v2940 = vpop.permute.xlu0 %2939
    %2941 = vrot.lane.b32.xlu0 %v2736, 64
    %v2942 = vpop.permute.xlu0 %2941
    %2943 = vrot.lane.b32.xlu0 %v2741, 64
    %v2944 = vpop.permute.xlu0 %2943
    %2945 = vrot.lane.b32.xlu0 %v2746, 64
    %v2946 = vpop.permute.xlu0 %2945
    %2947 = vrot.lane.b32.xlu0 %v2751, 64
    %v2948 = vpop.permute.xlu0 %2947
    %v2954 = vsel %vm536, %v2930, 0
    %v2957 = vsel %vm536, %v2932, 0
    %v2960 = vsel %vm536, %v2934, 0
    %v2963 = vsel %vm536, %v2936, 0
    %v2966 = vsel %vm536, %v2938, 0
    %v2968 = vsel %vm622, %v2948, 0
    %2970 = vmatprep.subr.mxu0 0.0
    %2971 = vmatpush1.msra.mxu0 %v2940
    %2972 = vmatprep.subr.mxu0 0.0
    %2973 = vmatpush1.msra.mxu0 %v2942
    %2974 = vmatprep.subr.mxu0 0.0
    %2975 = vmatpush1.msra.mxu0 %v2944
    %2976 = vmatprep.subr.mxu0 0.0
    %2977 = vmatpush1.msra.mxu0 %v2946
    %2978 = vmatprep.subr.mxu0 0.0
    %2979 = vmatpush1.msra.mxu0 %v2968
    %2980 = vmatprep.subr.mxu0 0.0
    %2981 = vmatpush1.msra.mxu0 0.0
    %2982 = vmatprep.subr.mxu0 0.0
    %2983 = vmatpush1.msra.mxu0 0.0
    %2984 = vmatprep.subr.mxu0 0.0
    %2985 = vmatpush1.msra.mxu0 0.0
    %2986 = vmatprep.subr.mxu0 0.0
    %2987 = vmatpush1.msra.mxu0 0.0
    %2988 = vmatprep.subr.mxu0 0.0
    %2989 = vmatpush1.msra.mxu0 0.0
    %2990 = vmatprep.subr.mxu0 0.0
    %2991 = vmatpush1.msra.mxu0 0.0
    %2992 = vmatprep.subr.mxu0 0.0
    %2993 = vmatpush1.msra.mxu0 0.0
    %2994 = vmatprep.subr.mxu0 0.0
    %2995 = vmatpush1.msra.mxu0 0.0
    %2996 = vmatprep.subr.mxu0 0.0
    %2997 = vmatpush1.msra.mxu0 0.0
    %2998 = vmatprep.subr.mxu0 0.0
    %2999 = vmatpush1.msra.mxu0 0.0
    %3000 = vmatprep.subr.mxu0 0.0
    %3001 = vmatpush1.msra.mxu0 0.0
    %3002 = vmatprep.subr.mxu0 0.0
    %3003 = vmatpush1.msra.mxu0 0.0
    %3004 = vmatprep.subr.mxu0 0.0
    %3005 = vmatpush1.msra.mxu0 0.0
    %3006 = vmatprep.subr.mxu0 0.0
    %3007 = vmatpush1.msra.mxu0 0.0
    %3008 = vmatprep.subr.mxu0 0.0
    %3009 = vmatpush1.msra.mxu0 0.0
    %3010 = vmatprep.subr.mxu0 0.0
    %3011 = vmatpush1.msra.mxu0 0.0
    %3012 = vmatprep.subr.mxu0 0.0
    %3013 = vmatpush1.msra.mxu0 0.0
    %3014 = vmatprep.subr.mxu0 0.0
    %3015 = vmatpush1.msra.mxu0 0.0
    %3016 = vmatprep.subr.mxu0 0.0
    %3017 = vmatpush1.msra.mxu0 0.0
    %3018 = vmatprep.subr.mxu0 0.0
    %3019 = vmatpush1.msra.mxu0 0.0
    %3020 = vmatprep.subr.mxu0 0.0
    %3021 = vmatpush1.msra.mxu0 0.0
    %3022 = vmatprep.subr.mxu0 0.0
    %3023 = vmatpush1.msra.mxu0 0.0
    %3024 = vmatprep.subr.mxu0 0.0
    %3025 = vmatpush1.msra.mxu0 0.0
    %3026 = vmatprep.subr.mxu0 0.0
    %3027 = vmatpush1.msra.mxu0 0.0
    %3028 = vmatprep.subr.mxu0 0.0
    %3029 = vmatpush1.msra.mxu0 0.0
    %3030 = vmatprep.subr.mxu0 0.0
    %3031 = vmatpush1.msra.mxu0 0.0
    %3032 = vmatprep.subr.mxu0 0.0
    %3033 = vmatpush1.msra.mxu0 0.0
    %3034 = vmatprep.mubr.f32.mxu0 0.0
    %3035 = vmatmul.mubr.f32.gmra.mrb[0].mxu0 %v2954
    %v3036 = vpop.f32.mrb[0].mxu0
    %v3037 = vadd.f32 0.0, %v3036
    %v3038 = vpop.f32.mrb[0].mxu0
    %3039 = vmatprep.mubr.f32.mxu0 0.0
    %3040 = vmatmul.mubr.f32.gmra.mrb[0].mxu0 %v2957
    %v3041 = vpop.f32.mrb[0].mxu0
    %v3042 = vadd.f32 0.0, %v3041
    %v3043 = vpop.f32.mrb[0].mxu0
    %3044 = vmatprep.mubr.f32.mxu0 0.0
    %3045 = vmatmul.mubr.f32.gmra.mrb[0].mxu0 %v2960
    %v3046 = vpop.f32.mrb[0].mxu0
    %v3047 = vadd.f32 0.0, %v3046
    %v3048 = vpop.f32.mrb[0].mxu0
    %3049 = vmatprep.mubr.f32.mxu0 0.0
    %3050 = vmatmul.mubr.f32.gmra.mrb[0].mxu0 %v2963
    %v3051 = vpop.f32.mrb[0].mxu0
    %v3052 = vadd.f32 0.0, %v3051
    %v3053 = vpop.f32.mrb[0].mxu0
    %3054 = vmatprep.mubr.f32.mxu0 0.0
    %3055 = vmatmul.mubr.f32.gmra.mrb[0].mxu0 %v2966
    %v3056 = vpop.f32.mrb[0].mxu0
    %v3057 = vadd.f32 0.0, %v3056
    %v3058 = vpop.f32.mrb[0].mxu0
    %3059 = vdwg.mxu0
    %3060 = vrot.lane.b32.xlu0 %v2731, 120
    %v3061 = vpop.permute.xlu0 %3060
    %3062 = vrot.lane.b32.xlu0 %v2736, 120
    %v3063 = vpop.permute.xlu0 %3062
    %3064 = vrot.lane.b32.xlu0 %v2741, 120
    %v3065 = vpop.permute.xlu0 %3064
    %3066 = vrot.lane.b32.xlu0 %v2746, 120
    %v3067 = vpop.permute.xlu0 %3066
    %3068 = vrot.lane.b32.xlu0 %v2751, 120
    %v3069 = vpop.permute.xlu0 %3068
    %3070 = vrot.lane.b32.xlu0 %v2731, 88
    %v3071 = vpop.permute.xlu0 %3070
    %3072 = vrot.lane.b32.xlu0 %v2736, 88
    %v3073 = vpop.permute.xlu0 %3072
    %3074 = vrot.lane.b32.xlu0 %v2741, 88
    %v3075 = vpop.permute.xlu0 %3074
    %3076 = vrot.lane.b32.xlu0 %v2746, 88
    %v3077 = vpop.permute.xlu0 %3076
    %3078 = vrot.lane.b32.xlu0 %v2751, 88
    %v3079 = vpop.permute.xlu0 %3078
    %v3080 = vsel %vm425, %v3061, 0
    %v3082 = vsel %vm425, %v3063, 0
    %v3084 = vsel %vm425, %v3065, 0
    %v3086 = vsel %vm425, %v3067, 0
    %v3088 = vsel %vm425, %v3069, 0
    %v3090 = vsel %vm425, %v3071, 0
    %v3092 = vsel %vm425, %v3073, 0
    %v3094 = vsel %vm425, %v3075, 0
    %v3096 = vsel %vm425, %v3077, 0
    %v3098 = vsel %vm425, %v3079, 0
    %3100 = vmatprep.subr.mxu0 0.0
    %3101 = vmatpush1.xpose.msra.mxu0 %v3090
    %3102 = vmatprep.subr.mxu0 0.0
    %3103 = vmatpush1.xpose.msra.mxu0 %v3092
    %3104 = vmatprep.subr.mxu0 0.0
    %3105 = vmatpush1.xpose.msra.mxu0 %v3094
    %3106 = vmatprep.subr.mxu0 0.0
    %3107 = vmatpush1.xpose.msra.mxu0 %v3096
    %3108 = vmatprep.subr.mxu0 0.0
    %3109 = vmatpush1.xpose.msra.mxu0 %v3098
    %3110 = vmatprep.subr.mxu0 0.0
    %3111 = vmatpush1.xpose.msra.mxu0 0.0
    %3112 = vmatprep.subr.mxu0 0.0
    %3113 = vmatpush1.xpose.msra.mxu0 0.0
    %3114 = vmatprep.subr.mxu0 0.0
    %3115 = vmatpush1.xpose.msra.mxu0 0.0
    %3116 = vmatprep.subr.mxu0 0.0
    %3117 = vmatpush1.xpose.msra.mxu0 0.0
    %3118 = vmatprep.subr.mxu0 0.0
    %3119 = vmatpush1.xpose.msra.mxu0 0.0
    %3120 = vmatprep.subr.mxu0 0.0
    %3121 = vmatpush1.xpose.msra.mxu0 0.0
    %3122 = vmatprep.subr.mxu0 0.0
    %3123 = vmatpush1.xpose.msra.mxu0 0.0
    %3124 = vmatprep.subr.mxu0 0.0
    %3125 = vmatpush1.xpose.msra.mxu0 0.0
    %3126 = vmatprep.subr.mxu0 0.0
    %3127 = vmatpush1.xpose.msra.mxu0 0.0
    %3128 = vmatprep.subr.mxu0 0.0
    %3129 = vmatpush1.xpose.msra.mxu0 0.0
    %3130 = vmatprep.subr.mxu0 0.0
    %3131 = vmatpush1.xpose.msra.mxu0 0.0
    %3132 = vmatprep.subr.mxu0 0.0
    %3133 = vmatpush1.xpose.msra.mxu0 0.0
    %3134 = vmatprep.subr.mxu0 0.0
    %3135 = vmatpush1.xpose.msra.mxu0 0.0
    %3136 = vmatprep.subr.mxu0 0.0
    %3137 = vmatpush1.xpose.msra.mxu0 0.0
    %3138 = vmatprep.subr.mxu0 0.0
    %3139 = vmatpush1.xpose.msra.mxu0 0.0
    %3140 = vmatprep.subr.mxu0 0.0
    %3141 = vmatpush1.xpose.msra.mxu0 0.0
    %3142 = vmatprep.subr.mxu0 0.0
    %3143 = vmatpush1.xpose.msra.mxu0 0.0
    %3144 = vmatprep.subr.mxu0 0.0
    %3145 = vmatpush1.xpose.msra.mxu0 0.0
    %3146 = vmatprep.subr.mxu0 0.0
    %3147 = vmatpush1.xpose.msra.mxu0 0.0
    %3148 = vmatprep.subr.mxu0 0.0
    %3149 = vmatpush1.xpose.msra.mxu0 0.0
    %3150 = vmatprep.subr.mxu0 0.0
    %3151 = vmatpush1.xpose.msra.mxu0 0.0
    %3152 = vmatprep.subr.mxu0 0.0
    %3153 = vmatpush1.xpose.msra.mxu0 0.0
    %3154 = vmatprep.subr.mxu0 0.0
    %3155 = vmatpush1.xpose.msra.mxu0 0.0
    %3156 = vmatprep.subr.mxu0 0.0
    %3157 = vmatpush1.xpose.msra.mxu0 0.0
    %3158 = vmatprep.subr.mxu0 0.0
    %3159 = vmatpush1.xpose.msra.mxu0 0.0
    %3160 = vmatprep.subr.mxu0 0.0
    %3161 = vmatpush1.xpose.msra.mxu0 0.0
    %3162 = vmatprep.subr.mxu0 0.0
    %3163 = vmatpush1.xpose.msra.mxu0 0.0
    %3164 = vmatprep.mubr.f32.mxu0 0.0
    %3165 = vmatmul.mubr.f32.gmra.mrb[0].mxu0 %v3080
    %v3166 = vpop.f32.mrb[0].mxu0
    %v3167 = vadd.f32 %v193, %v3166
    %v3168 = vpop.f32.mrb[0].mxu0
    %3169 = vmatprep.mubr.f32.mxu0 0.0
    %3170 = vmatmul.mubr.f32.gmra.mrb[0].mxu0 %v3082
    %v3171 = vpop.f32.mrb[0].mxu0
    %v3172 = vadd.f32 %v194, %v3171
    %v3173 = vpop.f32.mrb[0].mxu0
    %3174 = vmatprep.mubr.f32.mxu0 0.0
    %3175 = vmatmul.mubr.f32.gmra.mrb[0].mxu0 %v3084
    %v3176 = vpop.f32.mrb[0].mxu0
    %v3177 = vadd.f32 %v195, %v3176
    %v3178 = vpop.f32.mrb[0].mxu0
    %3179 = vmatprep.mubr.f32.mxu0 0.0
    %3180 = vmatmul.mubr.f32.gmra.mrb[0].mxu0 %v3086
    %v3181 = vpop.f32.mrb[0].mxu0
    %v3182 = vadd.f32 %v196, %v3181
    %v3183 = vpop.f32.mrb[0].mxu0
    %3184 = vmatprep.mubr.f32.mxu0 0.0
    %3185 = vmatmul.mubr.f32.gmra.mrb[0].mxu0 %v3088
    %v3186 = vpop.f32.mrb[0].mxu0
    %v3187 = vadd.f32 %v197, %v3186
    %v3188 = vpop.f32.mrb[0].mxu0
    %3189 = vdwg.mxu0
    %v3190 = vsel %vm536, %v3167, -inf
    %3191 = vmax.xlane.f32.xlu0 %v3190
    %v3192 = vpop.xlane.xlu0 %3191
    %v3193 = vsel %vm536, %v3172, -inf
    %3194 = vmax.xlane.f32.xlu0 %v3193
    %v3195 = vpop.xlane.xlu0 %3194
    %v3196 = vsel %vm536, %v3177, -inf
    %3197 = vmax.xlane.f32.xlu0 %v3196
    %v3198 = vpop.xlane.xlu0 %3197
    %v3199 = vsel %vm536, %v3182, -inf
    %3200 = vmax.xlane.f32.xlu0 %v3199
    %v3201 = vpop.xlane.xlu0 %3200
    %v3202 = vsel %vm549, %v3187, -inf
    %3203 = vmax.xlane.f32.xlu0 %v3202
    %v3204 = vpop.xlane.xlu0 %3203
    %v3205 = vsub.f32 %v3167, %v3192
    %v3206 = vsub.f32 %v3172, %v3195
    %v3207 = vsub.f32 %v3177, %v3198
    %v3208 = vsub.f32 %v3182, %v3201
    %v3209 = vsub.f32 %v3187, %v3204
    %v3210 = vmul.f32 %v3205, 1.442695
    %v3211 = vpow.pop %v3210
    %v3212 = vmul.f32 %v3206, 1.442695
    %v3213 = vpow.pop %v3212
    %v3214 = vmul.f32 %v3207, 1.442695
    %v3215 = vpow.pop %v3214
    %v3216 = vmul.f32 %v3208, 1.442695
    %v3217 = vpow.pop %v3216
    %v3218 = vmul.f32 %v3209, 1.442695
    %v3219 = vpow.pop %v3218
    %v3220 = vsel %vm536, %v3211, 0.0
    %3221 = vadd.xlane.f32.xlu0 %v3220
    %v3222 = vpop.xlane.xlu0 %3221
    %v3223 = vsel %vm536, %v3213, 0.0
    %3224 = vadd.xlane.f32.xlu0 %v3223
    %v3225 = vpop.xlane.xlu0 %3224
    %v3226 = vsel %vm536, %v3215, 0.0
    %3227 = vadd.xlane.f32.xlu0 %v3226
    %v3228 = vpop.xlane.xlu0 %3227
    %v3229 = vsel %vm536, %v3217, 0.0
    %3230 = vadd.xlane.f32.xlu0 %v3229
    %v3231 = vpop.xlane.xlu0 %3230
    %v3232 = vsel %vm549, %v3219, 0.0
    %3233 = vadd.xlane.f32.xlu0 %v3232
    %v3234 = vpop.xlane.xlu0 %3233
    %v3235 = vrcp.pop %v3222
    %v3236 = vmul.f32 %v3211, %v3235
    %v3237 = vrcp.pop %v3225
    %v3238 = vmul.f32 %v3213, %v3237
    %v3239 = vrcp.pop %v3228
    %v3240 = vmul.f32 %v3215, %v3239
    %v3241 = vrcp.pop %v3231
    %v3242 = vmul.f32 %v3217, %v3241
    %v3243 = vrcp.pop %v3234
    %v3244 = vmul.f32 %v3219, %v3243
    %3245 = vrot.lane.b32.xlu0 %v2731, 56
    %v3246 = vpop.permute.xlu0 %3245
    %3247 = vrot.lane.b32.xlu0 %v2736, 56
    %v3248 = vpop.permute.xlu0 %3247
    %3249 = vrot.lane.b32.xlu0 %v2741, 56
    %v3250 = vpop.permute.xlu0 %3249
    %3251 = vrot.lane.b32.xlu0 %v2746, 56
    %v3252 = vpop.permute.xlu0 %3251
    %3253 = vrot.lane.b32.xlu0 %v2751, 56
    %v3254 = vpop.permute.xlu0 %3253
    %v3260 = vsel %vm536, %v3236, 0
    %v3263 = vsel %vm536, %v3238, 0
    %v3266 = vsel %vm536, %v3240, 0
    %v3269 = vsel %vm536, %v3242, 0
    %v3272 = vsel %vm536, %v3244, 0
    %v3274 = vsel %vm622, %v3254, 0
    %3276 = vmatprep.subr.mxu0 0.0
    %3277 = vmatpush1.msra.mxu0 %v3246
    %3278 = vmatprep.subr.mxu0 0.0
    %3279 = vmatpush1.msra.mxu0 %v3248
    %3280 = vmatprep.subr.mxu0 0.0
    %3281 = vmatpush1.msra.mxu0 %v3250
    %3282 = vmatprep.subr.mxu0 0.0
    %3283 = vmatpush1.msra.mxu0 %v3252
    %3284 = vmatprep.subr.mxu0 0.0
    %3285 = vmatpush1.msra.mxu0 %v3274
    %3286 = vmatprep.subr.mxu0 0.0
    %3287 = vmatpush1.msra.mxu0 0.0
    %3288 = vmatprep.subr.mxu0 0.0
    %3289 = vmatpush1.msra.mxu0 0.0
    %3290 = vmatprep.subr.mxu0 0.0
    %3291 = vmatpush1.msra.mxu0 0.0
    %3292 = vmatprep.subr.mxu0 0.0
    %3293 = vmatpush1.msra.mxu0 0.0
    %3294 = vmatprep.subr.mxu0 0.0
    %3295 = vmatpush1.msra.mxu0 0.0
    %3296 = vmatprep.subr.mxu0 0.0
    %3297 = vmatpush1.msra.mxu0 0.0
    %3298 = vmatprep.subr.mxu0 0.0
    %3299 = vmatpush1.msra.mxu0 0.0
    %3300 = vmatprep.subr.mxu0 0.0
    %3301 = vmatpush1.msra.mxu0 0.0
    %3302 = vmatprep.subr.mxu0 0.0
    %3303 = vmatpush1.msra.mxu0 0.0
    %3304 = vmatprep.subr.mxu0 0.0
    %3305 = vmatpush1.msra.mxu0 0.0
    %3306 = vmatprep.subr.mxu0 0.0
    %3307 = vmatpush1.msra.mxu0 0.0
    %3308 = vmatprep.subr.mxu0 0.0
    %3309 = vmatpush1.msra.mxu0 0.0
    %3310 = vmatprep.subr.mxu0 0.0
    %3311 = vmatpush1.msra.mxu0 0.0
    %3312 = vmatprep.subr.mxu0 0.0
    %3313 = vmatpush1.msra.mxu0 0.0
    %3314 = vmatprep.subr.mxu0 0.0
    %3315 = vmatpush1.msra.mxu0 0.0
    %3316 = vmatprep.subr.mxu0 0.0
    %3317 = vmatpush1.msra.mxu0 0.0
    %3318 = vmatprep.subr.mxu0 0.0
    %3319 = vmatpush1.msra.mxu0 0.0
    %3320 = vmatprep.subr.mxu0 0.0
    %3321 = vmatpush1.msra.mxu0 0.0
    %3322 = vmatprep.subr.mxu0 0.0
    %3323 = vmatpush1.msra.mxu0 0.0
    %3324 = vmatprep.subr.mxu0 0.0
    %3325 = vmatpush1.msra.mxu0 0.0
    %3326 = vmatprep.subr.mxu0 0.0
    %3327 = vmatpush1.msra.mxu0 0.0
    %3328 = vmatprep.subr.mxu0 0.0
    %3329 = vmatpush1.msra.mxu0 0.0
    %3330 = vmatprep.subr.mxu0 0.0
    %3331 = vmatpush1.msra.mxu0 0.0
    %3332 = vmatprep.subr.mxu0 0.0
    %3333 = vmatpush1.msra.mxu0 0.0
    %3334 = vmatprep.subr.mxu0 0.0
    %3335 = vmatpush1.msra.mxu0 0.0
    %3336 = vmatprep.subr.mxu0 0.0
    %3337 = vmatpush1.msra.mxu0 0.0
    %3338 = vmatprep.subr.mxu0 0.0
    %3339 = vmatpush1.msra.mxu0 0.0
    %3340 = vmatprep.mubr.f32.mxu0 0.0
    %3341 = vmatmul.mubr.f32.gmra.mrb[0].mxu0 %v3260
    %v3342 = vpop.f32.mrb[0].mxu0
    %v3343 = vadd.f32 0.0, %v3342
    %v3344 = vpop.f32.mrb[0].mxu0
    %3345 = vmatprep.mubr.f32.mxu0 0.0
    %3346 = vmatmul.mubr.f32.gmra.mrb[0].mxu0 %v3263
    %v3347 = vpop.f32.mrb[0].mxu0
    %v3348 = vadd.f32 0.0, %v3347
    %v3349 = vpop.f32.mrb[0].mxu0
    %3350 = vmatprep.mubr.f32.mxu0 0.0
    %3351 = vmatmul.mubr.f32.gmra.mrb[0].mxu0 %v3266
    %v3352 = vpop.f32.mrb[0].mxu0
    %v3353 = vadd.f32 0.0, %v3352
    %v3354 = vpop.f32.mrb[0].mxu0
    %3355 = vmatprep.mubr.f32.mxu0 0.0
    %3356 = vmatmul.mubr.f32.gmra.mrb[0].mxu0 %v3269
    %v3357 = vpop.f32.mrb[0].mxu0
    %v3358 = vadd.f32 0.0, %v3357
    %v3359 = vpop.f32.mrb[0].mxu0
    %3360 = vmatprep.mubr.f32.mxu0 0.0
    %3361 = vmatmul.mubr.f32.gmra.mrb[0].mxu0 %v3272
    %v3362 = vpop.f32.mrb[0].mxu0
    %v3363 = vadd.f32 0.0, %v3362
    %v3364 = vpop.f32.mrb[0].mxu0
    %3365 = vdwg.mxu0
    %v3367 = vsel %vm425, %v3343, 0
    %v3370 = vsel %vm425, %v3348, 0
    %v3373 = vsel %vm425, %v3353, 0
    %v3376 = vsel %vm425, %v3358, 0
    %v3379 = vsel %vm425, %v3363, 0
    %3381 = vmatprep.subr.mxu0 0.0
    %3382 = vmatpush1.msra.mxu0 %v2756
    %3383 = vmatprep.subr.mxu0 0.0
    %3384 = vmatpush1.msra.mxu0 0.0
    %3385 = vmatprep.subr.mxu0 0.0
    %3386 = vmatpush1.msra.mxu0 0.0
    %3387 = vmatprep.subr.mxu0 0.0
    %3388 = vmatpush1.msra.mxu0 0.0
    %3389 = vmatprep.subr.mxu0 0.0
    %3390 = vmatpush1.msra.mxu0 0.0
    %3391 = vmatprep.subr.mxu0 0.0
    %3392 = vmatpush1.msra.mxu0 0.0
    %3393 = vmatprep.subr.mxu0 0.0
    %3394 = vmatpush1.msra.mxu0 0.0
    %3395 = vmatprep.subr.mxu0 0.0
    %3396 = vmatpush1.msra.mxu0 0.0
    %3397 = vmatprep.subr.mxu0 0.0
    %3398 = vmatpush1.msra.mxu0 0.0
    %3399 = vmatprep.subr.mxu0 0.0
    %3400 = vmatpush1.msra.mxu0 0.0
    %3401 = vmatprep.subr.mxu0 0.0
    %3402 = vmatpush1.msra.mxu0 0.0
    %3403 = vmatprep.subr.mxu0 0.0
    %3404 = vmatpush1.msra.mxu0 0.0
    %3405 = vmatprep.subr.mxu0 0.0
    %3406 = vmatpush1.msra.mxu0 0.0
    %3407 = vmatprep.subr.mxu0 0.0
    %3408 = vmatpush1.msra.mxu0 0.0
    %3409 = vmatprep.subr.mxu0 0.0
    %3410 = vmatpush1.msra.mxu0 0.0
    %3411 = vmatprep.subr.mxu0 0.0
    %3412 = vmatpush1.msra.mxu0 0.0
    %3413 = vmatprep.subr.mxu0 0.0
    %3414 = vmatpush1.msra.mxu0 0.0
    %3415 = vmatprep.subr.mxu0 0.0
    %3416 = vmatpush1.msra.mxu0 0.0
    %3417 = vmatprep.subr.mxu0 0.0
    %3418 = vmatpush1.msra.mxu0 0.0
    %3419 = vmatprep.subr.mxu0 0.0
    %3420 = vmatpush1.msra.mxu0 0.0
    %3421 = vmatprep.subr.mxu0 0.0
    %3422 = vmatpush1.msra.mxu0 0.0
    %3423 = vmatprep.subr.mxu0 0.0
    %3424 = vmatpush1.msra.mxu0 0.0
    %3425 = vmatprep.subr.mxu0 0.0
    %3426 = vmatpush1.msra.mxu0 0.0
    %3427 = vmatprep.subr.mxu0 0.0
    %3428 = vmatpush1.msra.mxu0 0.0
    %3429 = vmatprep.subr.mxu0 0.0
    %3430 = vmatpush1.msra.mxu0 0.0
    %3431 = vmatprep.subr.mxu0 0.0
    %3432 = vmatpush1.msra.mxu0 0.0
    %3433 = vmatprep.subr.mxu0 0.0
    %3434 = vmatpush1.msra.mxu0 0.0
    %3435 = vmatprep.subr.mxu0 0.0
    %3436 = vmatpush1.msra.mxu0 0.0
    %3437 = vmatprep.subr.mxu0 0.0
    %3438 = vmatpush1.msra.mxu0 0.0
    %3439 = vmatprep.subr.mxu0 0.0
    %3440 = vmatpush1.msra.mxu0 0.0
    %3441 = vmatprep.subr.mxu0 0.0
    %3442 = vmatpush1.msra.mxu0 0.0
    %3443 = vmatprep.subr.mxu0 0.0
    %3444 = vmatpush1.msra.mxu0 0.0
    %3445 = vmatprep.mubr.f32.mxu0 0.0
    %3446 = vmatmul.mubr.f32.gmra.mrb[0].mxu0 %v3367
    %v3447 = vpop.f32.mrb[0].mxu0
    %v3448 = vadd.f32 0.0, %v3447
    %v3449 = vpop.f32.mrb[0].mxu0
    %3450 = vmatprep.mubr.f32.mxu0 0.0
    %3451 = vmatmul.mubr.f32.gmra.mrb[0].mxu0 %v3370
    %v3452 = vpop.f32.mrb[0].mxu0
    %v3453 = vadd.f32 0.0, %v3452
    %v3454 = vpop.f32.mrb[0].mxu0
    %3455 = vmatprep.mubr.f32.mxu0 0.0
    %3456 = vmatmul.mubr.f32.gmra.mrb[0].mxu0 %v3373
    %v3457 = vpop.f32.mrb[0].mxu0
    %v3458 = vadd.f32 0.0, %v3457
    %v3459 = vpop.f32.mrb[0].mxu0
    %3460 = vmatprep.mubr.f32.mxu0 0.0
    %3461 = vmatmul.mubr.f32.gmra.mrb[0].mxu0 %v3376
    %v3462 = vpop.f32.mrb[0].mxu0
    %v3463 = vadd.f32 0.0, %v3462
    %v3464 = vpop.f32.mrb[0].mxu0
    %3465 = vmatprep.mubr.f32.mxu0 0.0
    %3466 = vmatmul.mubr.f32.gmra.mrb[0].mxu0 %v3379
    %v3467 = vpop.f32.mrb[0].mxu0
    %v3468 = vadd.f32 0.0, %v3467
    %v3469 = vpop.f32.mrb[0].mxu0
    %3470 = vdwg.mxu0
    %v3472 = vsel %vm425, %v3037, 0
    %v3475 = vsel %vm425, %v3042, 0
    %v3478 = vsel %vm425, %v3047, 0
    %v3481 = vsel %vm425, %v3052, 0
    %v3484 = vsel %vm425, %v3057, 0
    %3486 = vmatprep.subr.mxu0 0.0
    %3487 = vmatpush1.msra.mxu0 %v2755
    %3488 = vmatprep.subr.mxu0 0.0
    %3489 = vmatpush1.msra.mxu0 0.0
    %3490 = vmatprep.subr.mxu0 0.0
    %3491 = vmatpush1.msra.mxu0 0.0
    %3492 = vmatprep.subr.mxu0 0.0
    %3493 = vmatpush1.msra.mxu0 0.0
    %3494 = vmatprep.subr.mxu0 0.0
    %3495 = vmatpush1.msra.mxu0 0.0
    %3496 = vmatprep.subr.mxu0 0.0
    %3497 = vmatpush1.msra.mxu0 0.0
    %3498 = vmatprep.subr.mxu0 0.0
    %3499 = vmatpush1.msra.mxu0 0.0
    %3500 = vmatprep.subr.mxu0 0.0
    %3501 = vmatpush1.msra.mxu0 0.0
    %3502 = vmatprep.subr.mxu0 0.0
    %3503 = vmatpush1.msra.mxu0 0.0
    %3504 = vmatprep.subr.mxu0 0.0
    %3505 = vmatpush1.msra.mxu0 0.0
    %3506 = vmatprep.subr.mxu0 0.0
    %3507 = vmatpush1.msra.mxu0 0.0
    %3508 = vmatprep.subr.mxu0 0.0
    %3509 = vmatpush1.msra.mxu0 0.0
    %3510 = vmatprep.subr.mxu0 0.0
    %3511 = vmatpush1.msra.mxu0 0.0
    %3512 = vmatprep.subr.mxu0 0.0
    %3513 = vmatpush1.msra.mxu0 0.0
    %3514 = vmatprep.subr.mxu0 0.0
    %3515 = vmatpush1.msra.mxu0 0.0
    %3516 = vmatprep.subr.mxu0 0.0
    %3517 = vmatpush1.msra.mxu0 0.0
    %3518 = vmatprep.subr.mxu0 0.0
    %3519 = vmatpush1.msra.mxu0 0.0
    %3520 = vmatprep.subr.mxu0 0.0
    %3521 = vmatpush1.msra.mxu0 0.0
    %3522 = vmatprep.subr.mxu0 0.0
    %3523 = vmatpush1.msra.mxu0 0.0
    %3524 = vmatprep.subr.mxu0 0.0
    %3525 = vmatpush1.msra.mxu0 0.0
    %3526 = vmatprep.subr.mxu0 0.0
    %3527 = vmatpush1.msra.mxu0 0.0
    %3528 = vmatprep.subr.mxu0 0.0
    %3529 = vmatpush1.msra.mxu0 0.0
    %3530 = vmatprep.subr.mxu0 0.0
    %3531 = vmatpush1.msra.mxu0 0.0
    %3532 = vmatprep.subr.mxu0 0.0
    %3533 = vmatpush1.msra.mxu0 0.0
    %3534 = vmatprep.subr.mxu0 0.0
    %3535 = vmatpush1.msra.mxu0 0.0
    %3536 = vmatprep.subr.mxu0 0.0
    %3537 = vmatpush1.msra.mxu0 0.0
    %3538 = vmatprep.subr.mxu0 0.0
    %3539 = vmatpush1.msra.mxu0 0.0
    %3540 = vmatprep.subr.mxu0 0.0
    %3541 = vmatpush1.msra.mxu0 0.0
    %3542 = vmatprep.subr.mxu0 0.0
    %3543 = vmatpush1.msra.mxu0 0.0
    %3544 = vmatprep.subr.mxu0 0.0
    %3545 = vmatpush1.msra.mxu0 0.0
    %3546 = vmatprep.subr.mxu0 0.0
    %3547 = vmatpush1.msra.mxu0 0.0
    %3548 = vmatprep.subr.mxu0 0.0
    %3549 = vmatpush1.msra.mxu0 0.0
    %3550 = vmatprep.mubr.f32.mxu0 0.0
    %3551 = vmatmul.mubr.f32.gmra.mrb[0].mxu0 %v3472
    %v3552 = vpop.f32.mrb[0].mxu0
    %v3553 = vadd.f32 %v3448, %v3552
    %v3554 = vpop.f32.mrb[0].mxu0
    %3555 = vmatprep.mubr.f32.mxu0 0.0
    %3556 = vmatmul.mubr.f32.gmra.mrb[0].mxu0 %v3475
    %v3557 = vpop.f32.mrb[0].mxu0
    %v3558 = vadd.f32 %v3453, %v3557
    %v3559 = vpop.f32.mrb[0].mxu0
    %3560 = vmatprep.mubr.f32.mxu0 0.0
    %3561 = vmatmul.mubr.f32.gmra.mrb[0].mxu0 %v3478
    %v3562 = vpop.f32.mrb[0].mxu0
    %v3563 = vadd.f32 %v3458, %v3562
    %v3564 = vpop.f32.mrb[0].mxu0
    %3565 = vmatprep.mubr.f32.mxu0 0.0
    %3566 = vmatmul.mubr.f32.gmra.mrb[0].mxu0 %v3481
    %v3567 = vpop.f32.mrb[0].mxu0
    %v3568 = vadd.f32 %v3463, %v3567
    %v3569 = vpop.f32.mrb[0].mxu0
    %3570 = vmatprep.mubr.f32.mxu0 0.0
    %3571 = vmatmul.mubr.f32.gmra.mrb[0].mxu0 %v3484
    %v3572 = vpop.f32.mrb[0].mxu0
    %v3573 = vadd.f32 %v3468, %v3572
    %v3574 = vpop.f32.mrb[0].mxu0
    %3575 = vdwg.mxu0
    %3576 = vrot.lane.b32.xlu0 %v2731, 112
    %v3577 = vpop.permute.xlu0 %3576
    %3578 = vrot.lane.b32.xlu0 %v2736, 112
    %v3579 = vpop.permute.xlu0 %3578
    %3580 = vrot.lane.b32.xlu0 %v2741, 112
    %v3581 = vpop.permute.xlu0 %3580
    %3582 = vrot.lane.b32.xlu0 %v2746, 112
    %v3583 = vpop.permute.xlu0 %3582
    %3584 = vrot.lane.b32.xlu0 %v2751, 112
    %v3585 = vpop.permute.xlu0 %3584
    %3586 = vrot.lane.b32.xlu0 %v2731, 80
    %v3587 = vpop.permute.xlu0 %3586
    %3588 = vrot.lane.b32.xlu0 %v2736, 80
    %v3589 = vpop.permute.xlu0 %3588
    %3590 = vrot.lane.b32.xlu0 %v2741, 80
    %v3591 = vpop.permute.xlu0 %3590
    %3592 = vrot.lane.b32.xlu0 %v2746, 80
    %v3593 = vpop.permute.xlu0 %3592
    %3594 = vrot.lane.b32.xlu0 %v2751, 80
    %v3595 = vpop.permute.xlu0 %3594
    %v3596 = vsel %vm425, %v3577, 0
    %v3598 = vsel %vm425, %v3579, 0
    %v3600 = vsel %vm425, %v3581, 0
    %v3602 = vsel %vm425, %v3583, 0
    %v3604 = vsel %vm425, %v3585, 0
    %v3606 = vsel %vm425, %v3587, 0
    %v3608 = vsel %vm425, %v3589, 0
    %v3610 = vsel %vm425, %v3591, 0
    %v3612 = vsel %vm425, %v3593, 0
    %v3614 = vsel %vm425, %v3595, 0
    %3616 = vmatprep.subr.mxu0 0.0
    %3617 = vmatpush1.xpose.msra.mxu0 %v3606
    %3618 = vmatprep.subr.mxu0 0.0
    %3619 = vmatpush1.xpose.msra.mxu0 %v3608
    %3620 = vmatprep.subr.mxu0 0.0
    %3621 = vmatpush1.xpose.msra.mxu0 %v3610
    %3622 = vmatprep.subr.mxu0 0.0
    %3623 = vmatpush1.xpose.msra.mxu0 %v3612
    %3624 = vmatprep.subr.mxu0 0.0
    %3625 = vmatpush1.xpose.msra.mxu0 %v3614
    %3626 = vmatprep.subr.mxu0 0.0
    %3627 = vmatpush1.xpose.msra.mxu0 0.0
    %3628 = vmatprep.subr.mxu0 0.0
    %3629 = vmatpush1.xpose.msra.mxu0 0.0
    %3630 = vmatprep.subr.mxu0 0.0
    %3631 = vmatpush1.xpose.msra.mxu0 0.0
    %3632 = vmatprep.subr.mxu0 0.0
    %3633 = vmatpush1.xpose.msra.mxu0 0.0
    %3634 = vmatprep.subr.mxu0 0.0
    %3635 = vmatpush1.xpose.msra.mxu0 0.0
    %3636 = vmatprep.subr.mxu0 0.0
    %3637 = vmatpush1.xpose.msra.mxu0 0.0
    %3638 = vmatprep.subr.mxu0 0.0
    %3639 = vmatpush1.xpose.msra.mxu0 0.0
    %3640 = vmatprep.subr.mxu0 0.0
    %3641 = vmatpush1.xpose.msra.mxu0 0.0
    %3642 = vmatprep.subr.mxu0 0.0
    %3643 = vmatpush1.xpose.msra.mxu0 0.0
    %3644 = vmatprep.subr.mxu0 0.0
    %3645 = vmatpush1.xpose.msra.mxu0 0.0
    %3646 = vmatprep.subr.mxu0 0.0
    %3647 = vmatpush1.xpose.msra.mxu0 0.0
    %3648 = vmatprep.subr.mxu0 0.0
    %3649 = vmatpush1.xpose.msra.mxu0 0.0
    %3650 = vmatprep.subr.mxu0 0.0
    %3651 = vmatpush1.xpose.msra.mxu0 0.0
    %3652 = vmatprep.subr.mxu0 0.0
    %3653 = vmatpush1.xpose.msra.mxu0 0.0
    %3654 = vmatprep.subr.mxu0 0.0
    %3655 = vmatpush1.xpose.msra.mxu0 0.0
    %3656 = vmatprep.subr.mxu0 0.0
    %3657 = vmatpush1.xpose.msra.mxu0 0.0
    %3658 = vmatprep.subr.mxu0 0.0
    %3659 = vmatpush1.xpose.msra.mxu0 0.0
    %3660 = vmatprep.subr.mxu0 0.0
    %3661 = vmatpush1.xpose.msra.mxu0 0.0
    %3662 = vmatprep.subr.mxu0 0.0
    %3663 = vmatpush1.xpose.msra.mxu0 0.0
    %3664 = vmatprep.subr.mxu0 0.0
    %3665 = vmatpush1.xpose.msra.mxu0 0.0
    %3666 = vmatprep.subr.mxu0 0.0
    %3667 = vmatpush1.xpose.msra.mxu0 0.0
    %3668 = vmatprep.subr.mxu0 0.0
    %3669 = vmatpush1.xpose.msra.mxu0 0.0
    %3670 = vmatprep.subr.mxu0 0.0
    %3671 = vmatpush1.xpose.msra.mxu0 0.0
    %3672 = vmatprep.subr.mxu0 0.0
    %3673 = vmatpush1.xpose.msra.mxu0 0.0
    %3674 = vmatprep.subr.mxu0 0.0
    %3675 = vmatpush1.xpose.msra.mxu0 0.0
    %3676 = vmatprep.subr.mxu0 0.0
    %3677 = vmatpush1.xpose.msra.mxu0 0.0
    %3678 = vmatprep.subr.mxu0 0.0
    %3679 = vmatpush1.xpose.msra.mxu0 0.0
    %3680 = vmatprep.mubr.f32.mxu0 0.0
    %3681 = vmatmul.mubr.f32.gmra.mrb[0].mxu0 %v3596
    %v3682 = vpop.f32.mrb[0].mxu0
    %v3683 = vadd.f32 %v193, %v3682
    %v3684 = vpop.f32.mrb[0].mxu0
    %3685 = vmatprep.mubr.f32.mxu0 0.0
    %3686 = vmatmul.mubr.f32.gmra.mrb[0].mxu0 %v3598
    %v3687 = vpop.f32.mrb[0].mxu0
    %v3688 = vadd.f32 %v194, %v3687
    %v3689 = vpop.f32.mrb[0].mxu0
    %3690 = vmatprep.mubr.f32.mxu0 0.0
    %3691 = vmatmul.mubr.f32.gmra.mrb[0].mxu0 %v3600
    %v3692 = vpop.f32.mrb[0].mxu0
    %v3693 = vadd.f32 %v195, %v3692
    %v3694 = vpop.f32.mrb[0].mxu0
    %3695 = vmatprep.mubr.f32.mxu0 0.0
    %3696 = vmatmul.mubr.f32.gmra.mrb[0].mxu0 %v3602
    %v3697 = vpop.f32.mrb[0].mxu0
    %v3698 = vadd.f32 %v196, %v3697
    %v3699 = vpop.f32.mrb[0].mxu0
    %3700 = vmatprep.mubr.f32.mxu0 0.0
    %3701 = vmatmul.mubr.f32.gmra.mrb[0].mxu0 %v3604
    %v3702 = vpop.f32.mrb[0].mxu0
    %v3703 = vadd.f32 %v197, %v3702
    %v3704 = vpop.f32.mrb[0].mxu0
    %3705 = vdwg.mxu0
    %v3706 = vsel %vm536, %v3683, -inf
    %3707 = vmax.xlane.f32.xlu0 %v3706
    %v3708 = vpop.xlane.xlu0 %3707
    %v3709 = vsel %vm536, %v3688, -inf
    %3710 = vmax.xlane.f32.xlu0 %v3709
    %v3711 = vpop.xlane.xlu0 %3710
    %v3712 = vsel %vm536, %v3693, -inf
    %3713 = vmax.xlane.f32.xlu0 %v3712
    %v3714 = vpop.xlane.xlu0 %3713
    %v3715 = vsel %vm536, %v3698, -inf
    %3716 = vmax.xlane.f32.xlu0 %v3715
    %v3717 = vpop.xlane.xlu0 %3716
    %v3718 = vsel %vm549, %v3703, -inf
    %3719 = vmax.xlane.f32.xlu0 %v3718
    %v3720 = vpop.xlane.xlu0 %3719
    %v3721 = vsub.f32 %v3683, %v3708
    %v3722 = vsub.f32 %v3688, %v3711
    %v3723 = vsub.f32 %v3693, %v3714
    %v3724 = vsub.f32 %v3698, %v3717
    %v3725 = vsub.f32 %v3703, %v3720
    %v3726 = vmul.f32 %v3721, 1.442695
    %v3727 = vpow.pop %v3726
    %v3728 = vmul.f32 %v3722, 1.442695
    %v3729 = vpow.pop %v3728
    %v3730 = vmul.f32 %v3723, 1.442695
    %v3731 = vpow.pop %v3730
    %v3732 = vmul.f32 %v3724, 1.442695
    %v3733 = vpow.pop %v3732
    %v3734 = vmul.f32 %v3725, 1.442695
    %v3735 = vpow.pop %v3734
    %v3736 = vsel %vm536, %v3727, 0.0
    %3737 = vadd.xlane.f32.xlu0 %v3736
    %v3738 = vpop.xlane.xlu0 %3737
    %v3739 = vsel %vm536, %v3729, 0.0
    %3740 = vadd.xlane.f32.xlu0 %v3739
    %v3741 = vpop.xlane.xlu0 %3740
    %v3742 = vsel %vm536, %v3731, 0.0
    %3743 = vadd.xlane.f32.xlu0 %v3742
    %v3744 = vpop.xlane.xlu0 %3743
    %v3745 = vsel %vm536, %v3733, 0.0
    %3746 = vadd.xlane.f32.xlu0 %v3745
    %v3747 = vpop.xlane.xlu0 %3746
    %v3748 = vsel %vm549, %v3735, 0.0
    %3749 = vadd.xlane.f32.xlu0 %v3748
    %v3750 = vpop.xlane.xlu0 %3749
    %v3751 = vrcp.pop %v3738
    %v3752 = vmul.f32 %v3727, %v3751
    %v3753 = vrcp.pop %v3741
    %v3754 = vmul.f32 %v3729, %v3753
    %v3755 = vrcp.pop %v3744
    %v3756 = vmul.f32 %v3731, %v3755
    %v3757 = vrcp.pop %v3747
    %v3758 = vmul.f32 %v3733, %v3757
    %v3759 = vrcp.pop %v3750
    %v3760 = vmul.f32 %v3735, %v3759
    %3761 = vrot.lane.b32.xlu0 %v2731, 48
    %v3762 = vpop.permute.xlu0 %3761
    %3763 = vrot.lane.b32.xlu0 %v2736, 48
    %v3764 = vpop.permute.xlu0 %3763
    %3765 = vrot.lane.b32.xlu0 %v2741, 48
    %v3766 = vpop.permute.xlu0 %3765
    %3767 = vrot.lane.b32.xlu0 %v2746, 48
    %v3768 = vpop.permute.xlu0 %3767
    %3769 = vrot.lane.b32.xlu0 %v2751, 48
    %v3770 = vpop.permute.xlu0 %3769
    %v3776 = vsel %vm536, %v3752, 0
    %v3779 = vsel %vm536, %v3754, 0
    %v3782 = vsel %vm536, %v3756, 0
    %v3785 = vsel %vm536, %v3758, 0
    %v3788 = vsel %vm536, %v3760, 0
    %v3790 = vsel %vm622, %v3770, 0
    %3792 = vmatprep.subr.mxu0 0.0
    %3793 = vmatpush1.msra.mxu0 %v3762
    %3794 = vmatprep.subr.mxu0 0.0
    %3795 = vmatpush1.msra.mxu0 %v3764
    %3796 = vmatprep.subr.mxu0 0.0
    %3797 = vmatpush1.msra.mxu0 %v3766
    %3798 = vmatprep.subr.mxu0 0.0
    %3799 = vmatpush1.msra.mxu0 %v3768
    %3800 = vmatprep.subr.mxu0 0.0
    %3801 = vmatpush1.msra.mxu0 %v3790
    %3802 = vmatprep.subr.mxu0 0.0
    %3803 = vmatpush1.msra.mxu0 0.0
    %3804 = vmatprep.subr.mxu0 0.0
    %3805 = vmatpush1.msra.mxu0 0.0
    %3806 = vmatprep.subr.mxu0 0.0
    %3807 = vmatpush1.msra.mxu0 0.0
    %3808 = vmatprep.subr.mxu0 0.0
    %3809 = vmatpush1.msra.mxu0 0.0
    %3810 = vmatprep.subr.mxu0 0.0
    %3811 = vmatpush1.msra.mxu0 0.0
    %3812 = vmatprep.subr.mxu0 0.0
    %3813 = vmatpush1.msra.mxu0 0.0
    %3814 = vmatprep.subr.mxu0 0.0
    %3815 = vmatpush1.msra.mxu0 0.0
    %3816 = vmatprep.subr.mxu0 0.0
    %3817 = vmatpush1.msra.mxu0 0.0
    %3818 = vmatprep.subr.mxu0 0.0
    %3819 = vmatpush1.msra.mxu0 0.0
    %3820 = vmatprep.subr.mxu0 0.0
    %3821 = vmatpush1.msra.mxu0 0.0
    %3822 = vmatprep.subr.mxu0 0.0
    %3823 = vmatpush1.msra.mxu0 0.0
    %3824 = vmatprep.subr.mxu0 0.0
    %3825 = vmatpush1.msra.mxu0 0.0
    %3826 = vmatprep.subr.mxu0 0.0
    %3827 = vmatpush1.msra.mxu0 0.0
    %3828 = vmatprep.subr.mxu0 0.0
    %3829 = vmatpush1.msra.mxu0 0.0
    %3830 = vmatprep.subr.mxu0 0.0
    %3831 = vmatpush1.msra.mxu0 0.0
    %3832 = vmatprep.subr.mxu0 0.0
    %3833 = vmatpush1.msra.mxu0 0.0
    %3834 = vmatprep.subr.mxu0 0.0
    %3835 = vmatpush1.msra.mxu0 0.0
    %3836 = vmatprep.subr.mxu0 0.0
    %3837 = vmatpush1.msra.mxu0 0.0
    %3838 = vmatprep.subr.mxu0 0.0
    %3839 = vmatpush1.msra.mxu0 0.0
    %3840 = vmatprep.subr.mxu0 0.0
    %3841 = vmatpush1.msra.mxu0 0.0
    %3842 = vmatprep.subr.mxu0 0.0
    %3843 = vmatpush1.msra.mxu0 0.0
    %3844 = vmatprep.subr.mxu0 0.0
    %3845 = vmatpush1.msra.mxu0 0.0
    %3846 = vmatprep.subr.mxu0 0.0
    %3847 = vmatpush1.msra.mxu0 0.0
    %3848 = vmatprep.subr.mxu0 0.0
    %3849 = vmatpush1.msra.mxu0 0.0
    %3850 = vmatprep.subr.mxu0 0.0
    %3851 = vmatpush1.msra.mxu0 0.0
    %3852 = vmatprep.subr.mxu0 0.0
    %3853 = vmatpush1.msra.mxu0 0.0
    %3854 = vmatprep.subr.mxu0 0.0
    %3855 = vmatpush1.msra.mxu0 0.0
    %3856 = vmatprep.mubr.f32.mxu0 0.0
    %3857 = vmatmul.mubr.f32.gmra.mrb[0].mxu0 %v3776
    %v3858 = vpop.f32.mrb[0].mxu0
    %v3859 = vadd.f32 0.0, %v3858
    %v3860 = vpop.f32.mrb[0].mxu0
    %3861 = vmatprep.mubr.f32.mxu0 0.0
    %3862 = vmatmul.mubr.f32.gmra.mrb[0].mxu0 %v3779
    %v3863 = vpop.f32.mrb[0].mxu0
    %v3864 = vadd.f32 0.0, %v3863
    %v3865 = vpop.f32.mrb[0].mxu0
    %3866 = vmatprep.mubr.f32.mxu0 0.0
    %3867 = vmatmul.mubr.f32.gmra.mrb[0].mxu0 %v3782
    %v3868 = vpop.f32.mrb[0].mxu0
    %v3869 = vadd.f32 0.0, %v3868
    %v3870 = vpop.f32.mrb[0].mxu0
    %3871 = vmatprep.mubr.f32.mxu0 0.0
    %3872 = vmatmul.mubr.f32.gmra.mrb[0].mxu0 %v3785
    %v3873 = vpop.f32.mrb[0].mxu0
    %v3874 = vadd.f32 0.0, %v3873
    %v3875 = vpop.f32.mrb[0].mxu0
    %3876 = vmatprep.mubr.f32.mxu0 0.0
    %3877 = vmatmul.mubr.f32.gmra.mrb[0].mxu0 %v3788
    %v3878 = vpop.f32.mrb[0].mxu0
    %v3879 = vadd.f32 0.0, %v3878
    %v3880 = vpop.f32.mrb[0].mxu0
    %3881 = vdwg.mxu0
    %v3883 = vsel %vm425, %v3859, 0
    %v3886 = vsel %vm425, %v3864, 0
    %v3889 = vsel %vm425, %v3869, 0
    %v3892 = vsel %vm425, %v3874, 0
    %v3895 = vsel %vm425, %v3879, 0
    %3897 = vmatprep.subr.mxu0 0.0
    %3898 = vmatpush1.msra.mxu0 %v2757
    %3899 = vmatprep.subr.mxu0 0.0
    %3900 = vmatpush1.msra.mxu0 0.0
    %3901 = vmatprep.subr.mxu0 0.0
    %3902 = vmatpush1.msra.mxu0 0.0
    %3903 = vmatprep.subr.mxu0 0.0
    %3904 = vmatpush1.msra.mxu0 0.0
    %3905 = vmatprep.subr.mxu0 0.0
    %3906 = vmatpush1.msra.mxu0 0.0
    %3907 = vmatprep.subr.mxu0 0.0
    %3908 = vmatpush1.msra.mxu0 0.0
    %3909 = vmatprep.subr.mxu0 0.0
    %3910 = vmatpush1.msra.mxu0 0.0
    %3911 = vmatprep.subr.mxu0 0.0
    %3912 = vmatpush1.msra.mxu0 0.0
    %3913 = vmatprep.subr.mxu0 0.0
    %3914 = vmatpush1.msra.mxu0 0.0
    %3915 = vmatprep.subr.mxu0 0.0
    %3916 = vmatpush1.msra.mxu0 0.0
    %3917 = vmatprep.subr.mxu0 0.0
    %3918 = vmatpush1.msra.mxu0 0.0
    %3919 = vmatprep.subr.mxu0 0.0
    %3920 = vmatpush1.msra.mxu0 0.0
    %3921 = vmatprep.subr.mxu0 0.0
    %3922 = vmatpush1.msra.mxu0 0.0
    %3923 = vmatprep.subr.mxu0 0.0
    %3924 = vmatpush1.msra.mxu0 0.0
    %3925 = vmatprep.subr.mxu0 0.0
    %3926 = vmatpush1.msra.mxu0 0.0
    %3927 = vmatprep.subr.mxu0 0.0
    %3928 = vmatpush1.msra.mxu0 0.0
    %3929 = vmatprep.subr.mxu0 0.0
    %3930 = vmatpush1.msra.mxu0 0.0
    %3931 = vmatprep.subr.mxu0 0.0
    %3932 = vmatpush1.msra.mxu0 0.0
    %3933 = vmatprep.subr.mxu0 0.0
    %3934 = vmatpush1.msra.mxu0 0.0
    %3935 = vmatprep.subr.mxu0 0.0
    %3936 = vmatpush1.msra.mxu0 0.0
    %3937 = vmatprep.subr.mxu0 0.0
    %3938 = vmatpush1.msra.mxu0 0.0
    %3939 = vmatprep.subr.mxu0 0.0
    %3940 = vmatpush1.msra.mxu0 0.0
    %3941 = vmatprep.subr.mxu0 0.0
    %3942 = vmatpush1.msra.mxu0 0.0
    %3943 = vmatprep.subr.mxu0 0.0
    %3944 = vmatpush1.msra.mxu0 0.0
    %3945 = vmatprep.subr.mxu0 0.0
    %3946 = vmatpush1.msra.mxu0 0.0
    %3947 = vmatprep.subr.mxu0 0.0
    %3948 = vmatpush1.msra.mxu0 0.0
    %3949 = vmatprep.subr.mxu0 0.0
    %3950 = vmatpush1.msra.mxu0 0.0
    %3951 = vmatprep.subr.mxu0 0.0
    %3952 = vmatpush1.msra.mxu0 0.0
    %3953 = vmatprep.subr.mxu0 0.0
    %3954 = vmatpush1.msra.mxu0 0.0
    %3955 = vmatprep.subr.mxu0 0.0
    %3956 = vmatpush1.msra.mxu0 0.0
    %3957 = vmatprep.subr.mxu0 0.0
    %3958 = vmatpush1.msra.mxu0 0.0
    %3959 = vmatprep.subr.mxu0 0.0
    %3960 = vmatpush1.msra.mxu0 0.0
    %3961 = vmatprep.mubr.f32.mxu0 0.0
    %3962 = vmatmul.mubr.f32.gmra.mrb[0].mxu0 %v3883
    %v3963 = vpop.f32.mrb[0].mxu0
    %v3964 = vadd.f32 0.0, %v3963
    %v3965 = vpop.f32.mrb[0].mxu0
    %3966 = vmatprep.mubr.f32.mxu0 0.0
    %3967 = vmatmul.mubr.f32.gmra.mrb[0].mxu0 %v3886
    %v3968 = vpop.f32.mrb[0].mxu0
    %v3969 = vadd.f32 0.0, %v3968
    %v3970 = vpop.f32.mrb[0].mxu0
    %3971 = vmatprep.mubr.f32.mxu0 0.0
    %3972 = vmatmul.mubr.f32.gmra.mrb[0].mxu0 %v3889
    %v3973 = vpop.f32.mrb[0].mxu0
    %v3974 = vadd.f32 0.0, %v3973
    %v3975 = vpop.f32.mrb[0].mxu0
    %3976 = vmatprep.mubr.f32.mxu0 0.0
    %3977 = vmatmul.mubr.f32.gmra.mrb[0].mxu0 %v3892
    %v3978 = vpop.f32.mrb[0].mxu0
    %v3979 = vadd.f32 0.0, %v3978
    %v3980 = vpop.f32.mrb[0].mxu0
    %3981 = vmatprep.mubr.f32.mxu0 0.0
    %3982 = vmatmul.mubr.f32.gmra.mrb[0].mxu0 %v3895
    %v3983 = vpop.f32.mrb[0].mxu0
    %v3984 = vadd.f32 0.0, %v3983
    %v3985 = vpop.f32.mrb[0].mxu0
    %3986 = vdwg.mxu0
    %v3987 = vadd.f32 %v3553, %v3964
    %v3988 = vadd.f32 %v3558, %v3969
    %v3989 = vadd.f32 %v3563, %v3974
    %v3990 = vadd.f32 %v3568, %v3979
    %v3991 = vadd.f32 %v3573, %v3984
    %3992 = vrot.lane.b32.xlu0 %v2731, 104
    %v3993 = vpop.permute.xlu0 %3992
    %3994 = vrot.lane.b32.xlu0 %v2736, 104
    %v3995 = vpop.permute.xlu0 %3994
    %3996 = vrot.lane.b32.xlu0 %v2741, 104
    %v3997 = vpop.permute.xlu0 %3996
    %3998 = vrot.lane.b32.xlu0 %v2746, 104
    %v3999 = vpop.permute.xlu0 %3998
    %4000 = vrot.lane.b32.xlu0 %v2751, 104
    %v4001 = vpop.permute.xlu0 %4000
    %4002 = vrot.lane.b32.xlu0 %v2731, 72
    %v4003 = vpop.permute.xlu0 %4002
    %4004 = vrot.lane.b32.xlu0 %v2736, 72
    %v4005 = vpop.permute.xlu0 %4004
    %4006 = vrot.lane.b32.xlu0 %v2741, 72
    %v4007 = vpop.permute.xlu0 %4006
    %4008 = vrot.lane.b32.xlu0 %v2746, 72
    %v4009 = vpop.permute.xlu0 %4008
    %4010 = vrot.lane.b32.xlu0 %v2751, 72
    %v4011 = vpop.permute.xlu0 %4010
    %v4012 = vsel %vm425, %v3993, 0
    %v4014 = vsel %vm425, %v3995, 0
    %v4016 = vsel %vm425, %v3997, 0
    %v4018 = vsel %vm425, %v3999, 0
    %v4020 = vsel %vm425, %v4001, 0
    %v4022 = vsel %vm425, %v4003, 0
    %v4024 = vsel %vm425, %v4005, 0
    %v4026 = vsel %vm425, %v4007, 0
    %v4028 = vsel %vm425, %v4009, 0
    %v4030 = vsel %vm425, %v4011, 0
    %4032 = vmatprep.subr.mxu0 0.0
    %4033 = vmatpush1.xpose.msra.mxu0 %v4022
    %4034 = vmatprep.subr.mxu0 0.0
    %4035 = vmatpush1.xpose.msra.mxu0 %v4024
    %4036 = vmatprep.subr.mxu0 0.0
    %4037 = vmatpush1.xpose.msra.mxu0 %v4026
    %4038 = vmatprep.subr.mxu0 0.0
    %4039 = vmatpush1.xpose.msra.mxu0 %v4028
    %4040 = vmatprep.subr.mxu0 0.0
    %4041 = vmatpush1.xpose.msra.mxu0 %v4030
    %4042 = vmatprep.subr.mxu0 0.0
    %4043 = vmatpush1.xpose.msra.mxu0 0.0
    %4044 = vmatprep.subr.mxu0 0.0
    %4045 = vmatpush1.xpose.msra.mxu0 0.0
    %4046 = vmatprep.subr.mxu0 0.0
    %4047 = vmatpush1.xpose.msra.mxu0 0.0
    %4048 = vmatprep.subr.mxu0 0.0
    %4049 = vmatpush1.xpose.msra.mxu0 0.0
    %4050 = vmatprep.subr.mxu0 0.0
    %4051 = vmatpush1.xpose.msra.mxu0 0.0
    %4052 = vmatprep.subr.mxu0 0.0
    %4053 = vmatpush1.xpose.msra.mxu0 0.0
    %4054 = vmatprep.subr.mxu0 0.0
    %4055 = vmatpush1.xpose.msra.mxu0 0.0
    %4056 = vmatprep.subr.mxu0 0.0
    %4057 = vmatpush1.xpose.msra.mxu0 0.0
    %4058 = vmatprep.subr.mxu0 0.0
    %4059 = vmatpush1.xpose.msra.mxu0 0.0
    %4060 = vmatprep.subr.mxu0 0.0
    %4061 = vmatpush1.xpose.msra.mxu0 0.0
    %4062 = vmatprep.subr.mxu0 0.0
    %4063 = vmatpush1.xpose.msra.mxu0 0.0
    %4064 = vmatprep.subr.mxu0 0.0
    %4065 = vmatpush1.xpose.msra.mxu0 0.0
    %4066 = vmatprep.subr.mxu0 0.0
    %4067 = vmatpush1.xpose.msra.mxu0 0.0
    %4068 = vmatprep.subr.mxu0 0.0
    %4069 = vmatpush1.xpose.msra.mxu0 0.0
    %4070 = vmatprep.subr.mxu0 0.0
    %4071 = vmatpush1.xpose.msra.mxu0 0.0
    %4072 = vmatprep.subr.mxu0 0.0
    %4073 = vmatpush1.xpose.msra.mxu0 0.0
    %4074 = vmatprep.subr.mxu0 0.0
    %4075 = vmatpush1.xpose.msra.mxu0 0.0
    %4076 = vmatprep.subr.mxu0 0.0
    %4077 = vmatpush1.xpose.msra.mxu0 0.0
    %4078 = vmatprep.subr.mxu0 0.0
    %4079 = vmatpush1.xpose.msra.mxu0 0.0
    %4080 = vmatprep.subr.mxu0 0.0
    %4081 = vmatpush1.xpose.msra.mxu0 0.0
    %4082 = vmatprep.subr.mxu0 0.0
    %4083 = vmatpush1.xpose.msra.mxu0 0.0
    %4084 = vmatprep.subr.mxu0 0.0
    %4085 = vmatpush1.xpose.msra.mxu0 0.0
    %4086 = vmatprep.subr.mxu0 0.0
    %4087 = vmatpush1.xpose.msra.mxu0 0.0
    %4088 = vmatprep.subr.mxu0 0.0
    %4089 = vmatpush1.xpose.msra.mxu0 0.0
    %4090 = vmatprep.subr.mxu0 0.0
    %4091 = vmatpush1.xpose.msra.mxu0 0.0
    %4092 = vmatprep.subr.mxu0 0.0
    %4093 = vmatpush1.xpose.msra.mxu0 0.0
    %4094 = vmatprep.subr.mxu0 0.0
    %4095 = vmatpush1.xpose.msra.mxu0 0.0
    %4096 = vmatprep.mubr.f32.mxu0 0.0
    %4097 = vmatmul.mubr.f32.gmra.mrb[0].mxu0 %v4012
    %v4098 = vpop.f32.mrb[0].mxu0
    %v4099 = vadd.f32 %v193, %v4098
    %v4100 = vpop.f32.mrb[0].mxu0
    %4101 = vmatprep.mubr.f32.mxu0 0.0
    %4102 = vmatmul.mubr.f32.gmra.mrb[0].mxu0 %v4014
    %v4103 = vpop.f32.mrb[0].mxu0
    %v4104 = vadd.f32 %v194, %v4103
    %v4105 = vpop.f32.mrb[0].mxu0
    %4106 = vmatprep.mubr.f32.mxu0 0.0
    %4107 = vmatmul.mubr.f32.gmra.mrb[0].mxu0 %v4016
    %v4108 = vpop.f32.mrb[0].mxu0
    %v4109 = vadd.f32 %v195, %v4108
    %v4110 = vpop.f32.mrb[0].mxu0
    %4111 = vmatprep.mubr.f32.mxu0 0.0
    %4112 = vmatmul.mubr.f32.gmra.mrb[0].mxu0 %v4018
    %v4113 = vpop.f32.mrb[0].mxu0
    %v4114 = vadd.f32 %v196, %v4113
    %v4115 = vpop.f32.mrb[0].mxu0
    %4116 = vmatprep.mubr.f32.mxu0 0.0
    %4117 = vmatmul.mubr.f32.gmra.mrb[0].mxu0 %v4020
    %v4118 = vpop.f32.mrb[0].mxu0
    %v4119 = vadd.f32 %v197, %v4118
    %v4120 = vpop.f32.mrb[0].mxu0
    %4121 = vdwg.mxu0
    %v4122 = vsel %vm536, %v4099, -inf
    %4123 = vmax.xlane.f32.xlu0 %v4122
    %v4124 = vpop.xlane.xlu0 %4123
    %v4125 = vsel %vm536, %v4104, -inf
    %4126 = vmax.xlane.f32.xlu0 %v4125
    %v4127 = vpop.xlane.xlu0 %4126
    %v4128 = vsel %vm536, %v4109, -inf
    %4129 = vmax.xlane.f32.xlu0 %v4128
    %v4130 = vpop.xlane.xlu0 %4129
    %v4131 = vsel %vm536, %v4114, -inf
    %4132 = vmax.xlane.f32.xlu0 %v4131
    %v4133 = vpop.xlane.xlu0 %4132
    %v4134 = vsel %vm549, %v4119, -inf
    %4135 = vmax.xlane.f32.xlu0 %v4134
    %v4136 = vpop.xlane.xlu0 %4135
    %v4137 = vsub.f32 %v4099, %v4124
    %v4138 = vsub.f32 %v4104, %v4127
    %v4139 = vsub.f32 %v4109, %v4130
    %v4140 = vsub.f32 %v4114, %v4133
    %v4141 = vsub.f32 %v4119, %v4136
    %v4142 = vmul.f32 %v4137, 1.442695
    %v4143 = vpow.pop %v4142
    %v4144 = vmul.f32 %v4138, 1.442695
    %v4145 = vpow.pop %v4144
    %v4146 = vmul.f32 %v4139, 1.442695
    %v4147 = vpow.pop %v4146
    %v4148 = vmul.f32 %v4140, 1.442695
    %v4149 = vpow.pop %v4148
    %v4150 = vmul.f32 %v4141, 1.442695
    %v4151 = vpow.pop %v4150
    %v4152 = vsel %vm536, %v4143, 0.0
    %4153 = vadd.xlane.f32.xlu0 %v4152
    %v4154 = vpop.xlane.xlu0 %4153
    %v4155 = vsel %vm536, %v4145, 0.0
    %4156 = vadd.xlane.f32.xlu0 %v4155
    %v4157 = vpop.xlane.xlu0 %4156
    %v4158 = vsel %vm536, %v4147, 0.0
    %4159 = vadd.xlane.f32.xlu0 %v4158
    %v4160 = vpop.xlane.xlu0 %4159
    %v4161 = vsel %vm536, %v4149, 0.0
    %4162 = vadd.xlane.f32.xlu0 %v4161
    %v4163 = vpop.xlane.xlu0 %4162
    %v4164 = vsel %vm549, %v4151, 0.0
    %4165 = vadd.xlane.f32.xlu0 %v4164
    %v4166 = vpop.xlane.xlu0 %4165
    %v4167 = vrcp.pop %v4154
    %v4168 = vmul.f32 %v4143, %v4167
    %v4169 = vrcp.pop %v4157
    %v4170 = vmul.f32 %v4145, %v4169
    %v4171 = vrcp.pop %v4160
    %v4172 = vmul.f32 %v4147, %v4171
    %v4173 = vrcp.pop %v4163
    %v4174 = vmul.f32 %v4149, %v4173
    %v4175 = vrcp.pop %v4166
    %v4176 = vmul.f32 %v4151, %v4175
    %4177 = vrot.lane.b32.xlu0 %v2731, 40
    %v4178 = vpop.permute.xlu0 %4177
    %4179 = vrot.lane.b32.xlu0 %v2736, 40
    %v4180 = vpop.permute.xlu0 %4179
    %4181 = vrot.lane.b32.xlu0 %v2741, 40
    %v4182 = vpop.permute.xlu0 %4181
    %4183 = vrot.lane.b32.xlu0 %v2746, 40
    %v4184 = vpop.permute.xlu0 %4183
    %4185 = vrot.lane.b32.xlu0 %v2751, 40
    %v4186 = vpop.permute.xlu0 %4185
    %v4192 = vsel %vm536, %v4168, 0
    %v4195 = vsel %vm536, %v4170, 0
    %v4198 = vsel %vm536, %v4172, 0
    %v4201 = vsel %vm536, %v4174, 0
    %v4204 = vsel %vm536, %v4176, 0
    %v4206 = vsel %vm622, %v4186, 0
    %4208 = vmatprep.subr.mxu0 0.0
    %4209 = vmatpush1.msra.mxu0 %v4178
    %4210 = vmatprep.subr.mxu0 0.0
    %4211 = vmatpush1.msra.mxu0 %v4180
    %4212 = vmatprep.subr.mxu0 0.0
    %4213 = vmatpush1.msra.mxu0 %v4182
    %4214 = vmatprep.subr.mxu0 0.0
    %4215 = vmatpush1.msra.mxu0 %v4184
    %4216 = vmatprep.subr.mxu0 0.0
    %4217 = vmatpush1.msra.mxu0 %v4206
    %4218 = vmatprep.subr.mxu0 0.0
    %4219 = vmatpush1.msra.mxu0 0.0
    %4220 = vmatprep.subr.mxu0 0.0
    %4221 = vmatpush1.msra.mxu0 0.0
    %4222 = vmatprep.subr.mxu0 0.0
    %4223 = vmatpush1.msra.mxu0 0.0
    %4224 = vmatprep.subr.mxu0 0.0
    %4225 = vmatpush1.msra.mxu0 0.0
    %4226 = vmatprep.subr.mxu0 0.0
    %4227 = vmatpush1.msra.mxu0 0.0
    %4228 = vmatprep.subr.mxu0 0.0
    %4229 = vmatpush1.msra.mxu0 0.0
    %4230 = vmatprep.subr.mxu0 0.0
    %4231 = vmatpush1.msra.mxu0 0.0
    %4232 = vmatprep.subr.mxu0 0.0
    %4233 = vmatpush1.msra.mxu0 0.0
    %4234 = vmatprep.subr.mxu0 0.0
    %4235 = vmatpush1.msra.mxu0 0.0
    %4236 = vmatprep.subr.mxu0 0.0
    %4237 = vmatpush1.msra.mxu0 0.0
    %4238 = vmatprep.subr.mxu0 0.0
    %4239 = vmatpush1.msra.mxu0 0.0
    %4240 = vmatprep.subr.mxu0 0.0
    %4241 = vmatpush1.msra.mxu0 0.0
    %4242 = vmatprep.subr.mxu0 0.0
    %4243 = vmatpush1.msra.mxu0 0.0
    %4244 = vmatprep.subr.mxu0 0.0
    %4245 = vmatpush1.msra.mxu0 0.0
    %4246 = vmatprep.subr.mxu0 0.0
    %4247 = vmatpush1.msra.mxu0 0.0
    %4248 = vmatprep.subr.mxu0 0.0
    %4249 = vmatpush1.msra.mxu0 0.0
    %4250 = vmatprep.subr.mxu0 0.0
    %4251 = vmatpush1.msra.mxu0 0.0
    %4252 = vmatprep.subr.mxu0 0.0
    %4253 = vmatpush1.msra.mxu0 0.0
    %4254 = vmatprep.subr.mxu0 0.0
    %4255 = vmatpush1.msra.mxu0 0.0
    %4256 = vmatprep.subr.mxu0 0.0
    %4257 = vmatpush1.msra.mxu0 0.0
    %4258 = vmatprep.subr.mxu0 0.0
    %4259 = vmatpush1.msra.mxu0 0.0
    %4260 = vmatprep.subr.mxu0 0.0
    %4261 = vmatpush1.msra.mxu0 0.0
    %4262 = vmatprep.subr.mxu0 0.0
    %4263 = vmatpush1.msra.mxu0 0.0
    %4264 = vmatprep.subr.mxu0 0.0
    %4265 = vmatpush1.msra.mxu0 0.0
    %4266 = vmatprep.subr.mxu0 0.0
    %4267 = vmatpush1.msra.mxu0 0.0
    %4268 = vmatprep.subr.mxu0 0.0
    %4269 = vmatpush1.msra.mxu0 0.0
    %4270 = vmatprep.subr.mxu0 0.0
    %4271 = vmatpush1.msra.mxu0 0.0
    %4272 = vmatprep.mubr.f32.mxu0 0.0
    %4273 = vmatmul.mubr.f32.gmra.mrb[0].mxu0 %v4192
    %v4274 = vpop.f32.mrb[0].mxu0
    %v4275 = vadd.f32 0.0, %v4274
    %v4276 = vpop.f32.mrb[0].mxu0
    %4277 = vmatprep.mubr.f32.mxu0 0.0
    %4278 = vmatmul.mubr.f32.gmra.mrb[0].mxu0 %v4195
    %v4279 = vpop.f32.mrb[0].mxu0
    %v4280 = vadd.f32 0.0, %v4279
    %v4281 = vpop.f32.mrb[0].mxu0
    %4282 = vmatprep.mubr.f32.mxu0 0.0
    %4283 = vmatmul.mubr.f32.gmra.mrb[0].mxu0 %v4198
    %v4284 = vpop.f32.mrb[0].mxu0
    %v4285 = vadd.f32 0.0, %v4284
    %v4286 = vpop.f32.mrb[0].mxu0
    %4287 = vmatprep.mubr.f32.mxu0 0.0
    %4288 = vmatmul.mubr.f32.gmra.mrb[0].mxu0 %v4201
    %v4289 = vpop.f32.mrb[0].mxu0
    %v4290 = vadd.f32 0.0, %v4289
    %v4291 = vpop.f32.mrb[0].mxu0
    %4292 = vmatprep.mubr.f32.mxu0 0.0
    %4293 = vmatmul.mubr.f32.gmra.mrb[0].mxu0 %v4204
    %v4294 = vpop.f32.mrb[0].mxu0
    %v4295 = vadd.f32 0.0, %v4294
    %v4296 = vpop.f32.mrb[0].mxu0
    %4297 = vdwg.mxu0
    %v4299 = vsel %vm425, %v4275, 0
    %v4302 = vsel %vm425, %v4280, 0
    %v4305 = vsel %vm425, %v4285, 0
    %v4308 = vsel %vm425, %v4290, 0
    %v4311 = vsel %vm425, %v4295, 0
    %4313 = vmatprep.subr.mxu0 0.0
    %4314 = vmatpush1.msra.mxu0 %v2758
    %4315 = vmatprep.subr.mxu0 0.0
    %4316 = vmatpush1.msra.mxu0 0.0
    %4317 = vmatprep.subr.mxu0 0.0
    %4318 = vmatpush1.msra.mxu0 0.0
    %4319 = vmatprep.subr.mxu0 0.0
    %4320 = vmatpush1.msra.mxu0 0.0
    %4321 = vmatprep.subr.mxu0 0.0
    %4322 = vmatpush1.msra.mxu0 0.0
    %4323 = vmatprep.subr.mxu0 0.0
    %4324 = vmatpush1.msra.mxu0 0.0
    %4325 = vmatprep.subr.mxu0 0.0
    %4326 = vmatpush1.msra.mxu0 0.0
    %4327 = vmatprep.subr.mxu0 0.0
    %4328 = vmatpush1.msra.mxu0 0.0
    %4329 = vmatprep.subr.mxu0 0.0
    %4330 = vmatpush1.msra.mxu0 0.0
    %4331 = vmatprep.subr.mxu0 0.0
    %4332 = vmatpush1.msra.mxu0 0.0
    %4333 = vmatprep.subr.mxu0 0.0
    %4334 = vmatpush1.msra.mxu0 0.0
    %4335 = vmatprep.subr.mxu0 0.0
    %4336 = vmatpush1.msra.mxu0 0.0
    %4337 = vmatprep.subr.mxu0 0.0
    %4338 = vmatpush1.msra.mxu0 0.0
    %4339 = vmatprep.subr.mxu0 0.0
    %4340 = vmatpush1.msra.mxu0 0.0
    %4341 = vmatprep.subr.mxu0 0.0
    %4342 = vmatpush1.msra.mxu0 0.0
    %4343 = vmatprep.subr.mxu0 0.0
    %4344 = vmatpush1.msra.mxu0 0.0
    %4345 = vmatprep.subr.mxu0 0.0
    %4346 = vmatpush1.msra.mxu0 0.0
    %4347 = vmatprep.subr.mxu0 0.0
    %4348 = vmatpush1.msra.mxu0 0.0
    %4349 = vmatprep.subr.mxu0 0.0
    %4350 = vmatpush1.msra.mxu0 0.0
    %4351 = vmatprep.subr.mxu0 0.0
    %4352 = vmatpush1.msra.mxu0 0.0
    %4353 = vmatprep.subr.mxu0 0.0
    %4354 = vmatpush1.msra.mxu0 0.0
    %4355 = vmatprep.subr.mxu0 0.0
    %4356 = vmatpush1.msra.mxu0 0.0
    %4357 = vmatprep.subr.mxu0 0.0
    %4358 = vmatpush1.msra.mxu0 0.0
    %4359 = vmatprep.subr.mxu0 0.0
    %4360 = vmatpush1.msra.mxu0 0.0
    %4361 = vmatprep.subr.mxu0 0.0
    %4362 = vmatpush1.msra.mxu0 0.0
    %4363 = vmatprep.subr.mxu0 0.0
    %4364 = vmatpush1.msra.mxu0 0.0
    %4365 = vmatprep.subr.mxu0 0.0
    %4366 = vmatpush1.msra.mxu0 0.0
    %4367 = vmatprep.subr.mxu0 0.0
    %4368 = vmatpush1.msra.mxu0 0.0
    %4369 = vmatprep.subr.mxu0 0.0
    %4370 = vmatpush1.msra.mxu0 0.0
    %4371 = vmatprep.subr.mxu0 0.0
    %4372 = vmatpush1.msra.mxu0 0.0
    %4373 = vmatprep.subr.mxu0 0.0
    %4374 = vmatpush1.msra.mxu0 0.0
    %4375 = vmatprep.subr.mxu0 0.0
    %4376 = vmatpush1.msra.mxu0 0.0
    %4377 = vmatprep.mubr.f32.mxu0 0.0
    %4378 = vmatmul.mubr.f32.gmra.mrb[0].mxu0 %v4299
    %v4379 = vpop.f32.mrb[0].mxu0
    %v4380 = vadd.f32 0.0, %v4379
    %v4381 = vpop.f32.mrb[0].mxu0
    %4382 = vmatprep.mubr.f32.mxu0 0.0
    %4383 = vmatmul.mubr.f32.gmra.mrb[0].mxu0 %v4302
    %v4384 = vpop.f32.mrb[0].mxu0
    %v4385 = vadd.f32 0.0, %v4384
    %v4386 = vpop.f32.mrb[0].mxu0
    %4387 = vmatprep.mubr.f32.mxu0 0.0
    %4388 = vmatmul.mubr.f32.gmra.mrb[0].mxu0 %v4305
    %v4389 = vpop.f32.mrb[0].mxu0
    %v4390 = vadd.f32 0.0, %v4389
    %v4391 = vpop.f32.mrb[0].mxu0
    %4392 = vmatprep.mubr.f32.mxu0 0.0
    %4393 = vmatmul.mubr.f32.gmra.mrb[0].mxu0 %v4308
    %v4394 = vpop.f32.mrb[0].mxu0
    %v4395 = vadd.f32 0.0, %v4394
    %v4396 = vpop.f32.mrb[0].mxu0
    %4397 = vmatprep.mubr.f32.mxu0 0.0
    %4398 = vmatmul.mubr.f32.gmra.mrb[0].mxu0 %v4311
    %v4399 = vpop.f32.mrb[0].mxu0
    %v4400 = vadd.f32 0.0, %v4399
    %v4401 = vpop.f32.mrb[0].mxu0
    %4402 = vdwg.mxu0
    %v4403 = vadd.f32 %v3987, %v4380
    %v4404 = vadd.f32 %v3988, %v4385
    %v4405 = vadd.f32 %v3989, %v4390
    %v4406 = vadd.f32 %v3990, %v4395
    %v4407 = vadd.f32 %v3991, %v4400
    %s4408 = scalar_lea.vmem %s10, 1
    %v4409 = vld [vmem:[%s4408] sm:$0x1]
    %v4411 = vlaneseq
    %v4412 = vshrl.u32 %v4411, 7
    %v4413 = vsub.s32 0, %v4412
    %v4414 = vrot.slane %v4409, %v4413
    %v4416 = vadd.f32 %v4403, %v4414
    %v4417 = vadd.f32 %v4404, %v4414
    %v4418 = vadd.f32 %v4405, %v4414
    %v4419 = vadd.f32 %v4406, %v4414
    %v4420 = vadd.f32 %v4407, %v4414
    %v4421 = vadd.f32 %v2540, %v4416
    %v4422 = vadd.f32 %v2541, %v4417
    %v4423 = vadd.f32 %v2542, %v4418
    %v4424 = vadd.f32 %v2543, %v4419
    %v4425 = vadd.f32 %v2544, %v4420
    %s4426 = scalar_lea.vmem %s11, 1
    %v4427 = vld [vmem:[%s4426] sm:$0x1]
    %s4428 = scalar_lea.vmem %s12, 1
    %v4429 = vld [vmem:[%s4428] sm:$0x1]
    %v4430 = vsel %vm200, %v4421, 0.0
    %4431 = vadd.xlane.f32.xlu0 %v4430
    %v4432 = vpop.xlane.xlu0 %4431
    %v4433 = vsel %vm200, %v4422, 0.0
    %4434 = vadd.xlane.f32.xlu0 %v4433
    %v4435 = vpop.xlane.xlu0 %4434
    %v4436 = vsel %vm200, %v4423, 0.0
    %4437 = vadd.xlane.f32.xlu0 %v4436
    %v4438 = vpop.xlane.xlu0 %4437
    %v4439 = vsel %vm200, %v4424, 0.0
    %4440 = vadd.xlane.f32.xlu0 %v4439
    %v4441 = vpop.xlane.xlu0 %4440
    %v4442 = vsel %vm213, %v4425, 0.0
    %4443 = vadd.xlane.f32.xlu0 %v4442
    %v4444 = vpop.xlane.xlu0 %4443
    %v4445 = vmul.f32 %v4432, %v217
    %v4446 = vmul.f32 %v4435, %v217
    %v4447 = vmul.f32 %v4438, %v217
    %v4448 = vmul.f32 %v4441, %v217
    %v4449 = vmul.f32 %v4444, %v217
    %v4450 = vsub.f32 %v4421, %v4445
    %v4451 = vsub.f32 %v4422, %v4446
    %v4452 = vsub.f32 %v4423, %v4447
    %v4453 = vsub.f32 %v4424, %v4448
    %v4454 = vsub.f32 %v4425, %v4449
    %v4455 = vmul.f32 %v4450, %v4450
    %v4456 = vmul.f32 %v4451, %v4451
    %v4457 = vmul.f32 %v4452, %v4452
    %v4458 = vmul.f32 %v4453, %v4453
    %v4459 = vmul.f32 %v4454, %v4454
    %v4460 = vsel %vm200, %v4455, 0.0
    %4461 = vadd.xlane.f32.xlu0 %v4460
    %v4462 = vpop.xlane.xlu0 %4461
    %v4463 = vsel %vm200, %v4456, 0.0
    %4464 = vadd.xlane.f32.xlu0 %v4463
    %v4465 = vpop.xlane.xlu0 %4464
    %v4466 = vsel %vm200, %v4457, 0.0
    %4467 = vadd.xlane.f32.xlu0 %v4466
    %v4468 = vpop.xlane.xlu0 %4467
    %v4469 = vsel %vm200, %v4458, 0.0
    %4470 = vadd.xlane.f32.xlu0 %v4469
    %v4471 = vpop.xlane.xlu0 %4470
    %v4472 = vsel %vm213, %v4459, 0.0
    %4473 = vadd.xlane.f32.xlu0 %v4472
    %v4474 = vpop.xlane.xlu0 %4473
    %v4475 = vmul.f32 %v4462, %v217
    %v4476 = vmul.f32 %v4465, %v217
    %v4477 = vmul.f32 %v4468, %v217
    %v4478 = vmul.f32 %v4471, %v217
    %v4479 = vmul.f32 %v4474, %v217
    %v4480 = vadd.f32 %v4475, 1e-05
    %v4481 = vadd.f32 %v4476, 1e-05
    %v4482 = vadd.f32 %v4477, 1e-05
    %v4483 = vadd.f32 %v4478, 1e-05
    %v4484 = vadd.f32 %v4479, 1e-05
    %v4485 = vrsqrt.pop %v4480
    %v4486 = vrsqrt.pop %v4481
    %v4487 = vrsqrt.pop %v4482
    %v4488 = vrsqrt.pop %v4483
    %v4489 = vrsqrt.pop %v4484
    %v4490 = vmul.f32 %v4450, %v4485
    %v4491 = vmul.f32 %v4451, %v4486
    %v4492 = vmul.f32 %v4452, %v4487
    %v4493 = vmul.f32 %v4453, %v4488
    %v4494 = vmul.f32 %v4454, %v4489
    %v4496 = vlaneseq
    %v4497 = vshrl.u32 %v4496, 7
    %v4498 = vsub.s32 0, %v4497
    %v4499 = vrot.slane %v4427, %v4498
    %v4501 = vmul.f32 %v4490, %v4499
    %v4502 = vmul.f32 %v4491, %v4499
    %v4503 = vmul.f32 %v4492, %v4499
    %v4504 = vmul.f32 %v4493, %v4499
    %v4505 = vmul.f32 %v4494, %v4499
    %v4507 = vlaneseq
    %v4508 = vshrl.u32 %v4507, 7
    %v4509 = vsub.s32 0, %v4508
    %v4510 = vrot.slane %v4429, %v4509
    %v4512 = vadd.f32 %v4501, %v4510
    %v4513 = vadd.f32 %v4502, %v4510
    %v4514 = vadd.f32 %v4503, %v4510
    %v4515 = vadd.f32 %v4504, %v4510
    %v4516 = vadd.f32 %v4505, %v4510
    %s4517 = scalar_lea.vmem %s13, 32
    %v4518 = vld [vmem:[%s4517] sm:$0xff]
    %v4519 = vld [vmem:[%s4517 + $0x8] sm:$0xff]
    %v4520 = vld [vmem:[%s4517 + $0x10] sm:$0xff]
    %v4521 = vld [vmem:[%s4517 + $0x18] sm:$0xff]
    %s4522 = scalar_lea.vmem %s14, 1
    %v4523 = vld [vmem:[%s4522] sm:$0x1]
    %v4525 = vlaneseq
    %v4526 = vshrl.u32 %v4525, 7
    %v4527 = vsub.s32 0, %v4526
    %v4528 = vrot.slane %v4523, %v4527
    %v4531 = vsel %vm200, %v4512, 0
    %v4534 = vsel %vm200, %v4513, 0
    %v4537 = vsel %vm200, %v4514, 0
    %v4540 = vsel %vm200, %v4515, 0
    %v4543 = vsel %vm200, %v4516, 0
    %4545 = vmatprep.subr.mxu0 0.0
    %4546 = vmatpush1.msra.mxu0 %v4518
    %4547 = vmatprep.subr.mxu0 0.0
    %4548 = vmatpush1.msra.mxu0 %v4519
    %4549 = vmatprep.subr.mxu0 0.0
    %4550 = vmatpush1.msra.mxu0 %v4520
    %4551 = vmatprep.subr.mxu0 0.0
    %4552 = vmatpush1.msra.mxu0 %v4521
    %4553 = vmatprep.subr.mxu0 0.0
    %4554 = vmatpush1.msra.mxu0 0.0
    %4555 = vmatprep.subr.mxu0 0.0
    %4556 = vmatpush1.msra.mxu0 0.0
    %4557 = vmatprep.subr.mxu0 0.0
    %4558 = vmatpush1.msra.mxu0 0.0
    %4559 = vmatprep.subr.mxu0 0.0
    %4560 = vmatpush1.msra.mxu0 0.0
    %4561 = vmatprep.subr.mxu0 0.0
    %4562 = vmatpush1.msra.mxu0 0.0
    %4563 = vmatprep.subr.mxu0 0.0
    %4564 = vmatpush1.msra.mxu0 0.0
    %4565 = vmatprep.subr.mxu0 0.0
    %4566 = vmatpush1.msra.mxu0 0.0
    %4567 = vmatprep.subr.mxu0 0.0
    %4568 = vmatpush1.msra.mxu0 0.0
    %4569 = vmatprep.subr.mxu0 0.0
    %4570 = vmatpush1.msra.mxu0 0.0
    %4571 = vmatprep.subr.mxu0 0.0
    %4572 = vmatpush1.msra.mxu0 0.0
    %4573 = vmatprep.subr.mxu0 0.0
    %4574 = vmatpush1.msra.mxu0 0.0
    %4575 = vmatprep.subr.mxu0 0.0
    %4576 = vmatpush1.msra.mxu0 0.0
    %4577 = vmatprep.subr.mxu0 0.0
    %4578 = vmatpush1.msra.mxu0 0.0
    %4579 = vmatprep.subr.mxu0 0.0
    %4580 = vmatpush1.msra.mxu0 0.0
    %4581 = vmatprep.subr.mxu0 0.0
    %4582 = vmatpush1.msra.mxu0 0.0
    %4583 = vmatprep.subr.mxu0 0.0
    %4584 = vmatpush1.msra.mxu0 0.0
    %4585 = vmatprep.subr.mxu0 0.0
    %4586 = vmatpush1.msra.mxu0 0.0
    %4587 = vmatprep.subr.mxu0 0.0
    %4588 = vmatpush1.msra.mxu0 0.0
    %4589 = vmatprep.subr.mxu0 0.0
    %4590 = vmatpush1.msra.mxu0 0.0
    %4591 = vmatprep.subr.mxu0 0.0
    %4592 = vmatpush1.msra.mxu0 0.0
    %4593 = vmatprep.subr.mxu0 0.0
    %4594 = vmatpush1.msra.mxu0 0.0
    %4595 = vmatprep.subr.mxu0 0.0
    %4596 = vmatpush1.msra.mxu0 0.0
    %4597 = vmatprep.subr.mxu0 0.0
    %4598 = vmatpush1.msra.mxu0 0.0
    %4599 = vmatprep.subr.mxu0 0.0
    %4600 = vmatpush1.msra.mxu0 0.0
    %4601 = vmatprep.subr.mxu0 0.0
    %4602 = vmatpush1.msra.mxu0 0.0
    %4603 = vmatprep.subr.mxu0 0.0
    %4604 = vmatpush1.msra.mxu0 0.0
    %4605 = vmatprep.subr.mxu0 0.0
    %4606 = vmatpush1.msra.mxu0 0.0
    %4607 = vmatprep.subr.mxu0 0.0
    %4608 = vmatpush1.msra.mxu0 0.0
    %4609 = vmatprep.mubr.f32.mxu0 0.0
    %4610 = vmatmul.mubr.f32.gmra.mrb[0].mxu0 %v4531
    %v4611 = vpop.f32.mrb[0].mxu0
    %v4612 = vadd.f32 %v4528, %v4611
    %v4613 = vpop.f32.mrb[0].mxu0
    %4614 = vmatprep.mubr.f32.mxu0 0.0
    %4615 = vmatmul.mubr.f32.gmra.mrb[0].mxu0 %v4534
    %v4616 = vpop.f32.mrb[0].mxu0
    %v4617 = vadd.f32 %v4528, %v4616
    %v4618 = vpop.f32.mrb[0].mxu0
    %4619 = vmatprep.mubr.f32.mxu0 0.0
    %4620 = vmatmul.mubr.f32.gmra.mrb[0].mxu0 %v4537
    %v4621 = vpop.f32.mrb[0].mxu0
    %v4622 = vadd.f32 %v4528, %v4621
    %v4623 = vpop.f32.mrb[0].mxu0
    %4624 = vmatprep.mubr.f32.mxu0 0.0
    %4625 = vmatmul.mubr.f32.gmra.mrb[0].mxu0 %v4540
    %v4626 = vpop.f32.mrb[0].mxu0
    %v4627 = vadd.f32 %v4528, %v4626
    %v4628 = vpop.f32.mrb[0].mxu0
    %4629 = vmatprep.mubr.f32.mxu0 0.0
    %4630 = vmatmul.mubr.f32.gmra.mrb[0].mxu0 %v4543
    %v4631 = vpop.f32.mrb[0].mxu0
    %v4632 = vadd.f32 %v4528, %v4631
    %v4633 = vpop.f32.mrb[0].mxu0
    %4634 = vdwg.mxu0
    %v4635 = vmul.f32 %v4612, 0.5
    %v4636 = vmul.f32 %v4617, 0.5
    %v4637 = vmul.f32 %v4622, 0.5
    %v4638 = vmul.f32 %v4627, 0.5
    %v4639 = vmul.f32 %v4632, 0.5
    %v4640 = vmul.f32 %v4612, 0.70710677
    %v4641 = vmul.f32 %v4617, 0.70710677
    %v4642 = vmul.f32 %v4622, 0.70710677
    %v4643 = vmul.f32 %v4627, 0.70710677
    %v4644 = vmul.f32 %v4632, 0.70710677
    %vm4645 = vcmp.ge.f32.partialorder %v4640, 0.0
    %vm4646 = vcmp.ge.f32.partialorder %v4641, 0.0
    %vm4647 = vcmp.ge.f32.partialorder %v4642, 0.0
    %vm4648 = vcmp.ge.f32.partialorder %v4643, 0.0
    %vm4649 = vcmp.ge.f32.partialorder %v4644, 0.0
    %v4650 = vsel %vm4645, 1.0, -1.0
    %v4651 = vsel %vm4646, 1.0, -1.0
    %v4652 = vsel %vm4647, 1.0, -1.0
    %v4653 = vsel %vm4648, 1.0, -1.0
    %v4654 = vsel %vm4649, 1.0, -1.0
    %v4655 = vand.u32 2147483647, %v4640
    %v4656 = vand.u32 2147483647, %v4641
    %v4657 = vand.u32 2147483647, %v4642
    %v4658 = vand.u32 2147483647, %v4643
    %v4659 = vand.u32 2147483647, %v4644
    %v4660 = vmul.f32 %v4655, 0.3275911
    %v4661 = vmul.f32 %v4656, 0.3275911
    %v4662 = vmul.f32 %v4657, 0.3275911
    %v4663 = vmul.f32 %v4658, 0.3275911
    %v4664 = vmul.f32 %v4659, 0.3275911
    %v4665 = vadd.f32 %v4660, 1.0
    %v4666 = vadd.f32 %v4661, 1.0
    %v4667 = vadd.f32 %v4662, 1.0
    %v4668 = vadd.f32 %v4663, 1.0
    %v4669 = vadd.f32 %v4664, 1.0
    %v4670 = vrcp.pop %v4665
    %v4671 = vmul.f32 1.0, %v4670
    %v4672 = vrcp.pop %v4666
    %v4673 = vmul.f32 1.0, %v4672
    %v4674 = vrcp.pop %v4667
    %v4675 = vmul.f32 1.0, %v4674
    %v4676 = vrcp.pop %v4668
    %v4677 = vmul.f32 1.0, %v4676
    %v4678 = vrcp.pop %v4669
    %v4679 = vmul.f32 1.0, %v4678
    %v4680 = vmul.f32 %v4671, 1.0614054
    %v4681 = vmul.f32 %v4673, 1.0614054
    %v4682 = vmul.f32 %v4675, 1.0614054
    %v4683 = vmul.f32 %v4677, 1.0614054
    %v4684 = vmul.f32 %v4679, 1.0614054
    %v4685 = vadd.f32 %v4680, -1.4531521
    %v4686 = vadd.f32 %v4681, -1.4531521
    %v4687 = vadd.f32 %v4682, -1.4531521
    %v4688 = vadd.f32 %v4683, -1.4531521
    %v4689 = vadd.f32 %v4684, -1.4531521
    %v4690 = vmul.f32 %v4685, %v4671
    %v4691 = vmul.f32 %v4686, %v4673
    %v4692 = vmul.f32 %v4687, %v4675
    %v4693 = vmul.f32 %v4688, %v4677
    %v4694 = vmul.f32 %v4689, %v4679
    %v4695 = vadd.f32 %v4690, 1.4214138
    %v4696 = vadd.f32 %v4691, 1.4214138
    %v4697 = vadd.f32 %v4692, 1.4214138
    %v4698 = vadd.f32 %v4693, 1.4214138
    %v4699 = vadd.f32 %v4694, 1.4214138
    %v4700 = vmul.f32 %v4695, %v4671
    %v4701 = vmul.f32 %v4696, %v4673
    %v4702 = vmul.f32 %v4697, %v4675
    %v4703 = vmul.f32 %v4698, %v4677
    %v4704 = vmul.f32 %v4699, %v4679
    %v4705 = vadd.f32 %v4700, -0.28449672
    %v4706 = vadd.f32 %v4701, -0.28449672
    %v4707 = vadd.f32 %v4702, -0.28449672
    %v4708 = vadd.f32 %v4703, -0.28449672
    %v4709 = vadd.f32 %v4704, -0.28449672
    %v4710 = vmul.f32 %v4705, %v4671
    %v4711 = vmul.f32 %v4706, %v4673
    %v4712 = vmul.f32 %v4707, %v4675
    %v4713 = vmul.f32 %v4708, %v4677
    %v4714 = vmul.f32 %v4709, %v4679
    %v4715 = vadd.f32 %v4710, 0.2548296
    %v4716 = vadd.f32 %v4711, 0.2548296
    %v4717 = vadd.f32 %v4712, 0.2548296
    %v4718 = vadd.f32 %v4713, 0.2548296
    %v4719 = vadd.f32 %v4714, 0.2548296
    %v4720 = vmul.f32 %v4715, %v4671
    %v4721 = vmul.f32 %v4716, %v4673
    %v4722 = vmul.f32 %v4717, %v4675
    %v4723 = vmul.f32 %v4718, %v4677
    %v4724 = vmul.f32 %v4719, %v4679
    %v4725 = vsub.f32 0.0, %v4655
    %v4726 = vsub.f32 0.0, %v4656
    %v4727 = vsub.f32 0.0, %v4657
    %v4728 = vsub.f32 0.0, %v4658
    %v4729 = vsub.f32 0.0, %v4659
    %v4730 = vmul.f32 %v4725, %v4655
    %v4731 = vmul.f32 %v4726, %v4656
    %v4732 = vmul.f32 %v4727, %v4657
    %v4733 = vmul.f32 %v4728, %v4658
    %v4734 = vmul.f32 %v4729, %v4659
    %v4735 = vmul.f32 %v4730, 1.442695
    %v4736 = vpow.pop %v4735
    %v4737 = vmul.f32 %v4731, 1.442695
    %v4738 = vpow.pop %v4737
    %v4739 = vmul.f32 %v4732, 1.442695
    %v4740 = vpow.pop %v4739
    %v4741 = vmul.f32 %v4733, 1.442695
    %v4742 = vpow.pop %v4741
    %v4743 = vmul.f32 %v4734, 1.442695
    %v4744 = vpow.pop %v4743
    %v4745 = vmul.f32 %v4720, %v4736
    %v4746 = vmul.f32 %v4721, %v4738
    %v4747 = vmul.f32 %v4722, %v4740
    %v4748 = vmul.f32 %v4723, %v4742
    %v4749 = vmul.f32 %v4724, %v4744
    %v4750 = vsub.f32 1.0, %v4745
    %v4751 = vsub.f32 1.0, %v4746
    %v4752 = vsub.f32 1.0, %v4747
    %v4753 = vsub.f32 1.0, %v4748
    %v4754 = vsub.f32 1.0, %v4749
    %v4755 = vmul.f32 %v4650, %v4750
    %v4756 = vmul.f32 %v4651, %v4751
    %v4757 = vmul.f32 %v4652, %v4752
    %v4758 = vmul.f32 %v4653, %v4753
    %v4759 = vmul.f32 %v4654, %v4754
    %v4760 = vadd.f32 %v4755, 1.0
    %v4761 = vadd.f32 %v4756, 1.0
    %v4762 = vadd.f32 %v4757, 1.0
    %v4763 = vadd.f32 %v4758, 1.0
    %v4764 = vadd.f32 %v4759, 1.0
    %v4765 = vmul.f32 %v4635, %v4760
    %v4766 = vmul.f32 %v4636, %v4761
    %v4767 = vmul.f32 %v4637, %v4762
    %v4768 = vmul.f32 %v4638, %v4763
    %v4769 = vmul.f32 %v4639, %v4764
    %s4770 = scalar_lea.vmem %s15, 64
    %v4771 = vld [vmem:[%s4770] sm:$0xff]
    %v4772 = vld [vmem:[%s4770 + $0x8] sm:$0xff]
    %v4773 = vld [vmem:[%s4770 + $0x10] sm:$0xff]
    %v4774 = vld [vmem:[%s4770 + $0x18] sm:$0xff]
    %v4775 = vld [vmem:[%s4770 + $0x20] sm:$0xff]
    %v4776 = vld [vmem:[%s4770 + $0x28] sm:$0xff]
    %v4777 = vld [vmem:[%s4770 + $0x30] sm:$0xff]
    %v4778 = vld [vmem:[%s4770 + $0x38] sm:$0xff]
    %s4779 = scalar_lea.vmem %s16, 1
    %v4780 = vld [vmem:[%s4779] sm:$0x1]
    %v4782 = vlaneseq
    %v4783 = vshrl.u32 %v4782, 7
    %v4784 = vsub.s32 0, %v4783
    %v4785 = vrot.slane %v4780, %v4784
    %v4788 = vsel %vm87, %v4765, 0
    %v4791 = vsel %vm87, %v4766, 0
    %v4794 = vsel %vm87, %v4767, 0
    %v4797 = vsel %vm87, %v4768, 0
    %v4800 = vsel %vm87, %v4769, 0
    %4802 = vmatprep.subr.mxu0 0.0
    %4803 = vmatpush1.msra.mxu0 %v4771
    %4804 = vmatprep.subr.mxu0 0.0
    %4805 = vmatpush1.msra.mxu0 %v4772
    %4806 = vmatprep.subr.mxu0 0.0
    %4807 = vmatpush1.msra.mxu0 %v4773
    %4808 = vmatprep.subr.mxu0 0.0
    %4809 = vmatpush1.msra.mxu0 %v4774
    %4810 = vmatprep.subr.mxu0 0.0
    %4811 = vmatpush1.msra.mxu0 %v4775
    %4812 = vmatprep.subr.mxu0 0.0
    %4813 = vmatpush1.msra.mxu0 %v4776
    %4814 = vmatprep.subr.mxu0 0.0
    %4815 = vmatpush1.msra.mxu0 %v4777
    %4816 = vmatprep.subr.mxu0 0.0
    %4817 = vmatpush1.msra.mxu0 %v4778
    %4818 = vmatprep.subr.mxu0 0.0
    %4819 = vmatpush1.msra.mxu0 0.0
    %4820 = vmatprep.subr.mxu0 0.0
    %4821 = vmatpush1.msra.mxu0 0.0
    %4822 = vmatprep.subr.mxu0 0.0
    %4823 = vmatpush1.msra.mxu0 0.0
    %4824 = vmatprep.subr.mxu0 0.0
    %4825 = vmatpush1.msra.mxu0 0.0
    %4826 = vmatprep.subr.mxu0 0.0
    %4827 = vmatpush1.msra.mxu0 0.0
    %4828 = vmatprep.subr.mxu0 0.0
    %4829 = vmatpush1.msra.mxu0 0.0
    %4830 = vmatprep.subr.mxu0 0.0
    %4831 = vmatpush1.msra.mxu0 0.0
    %4832 = vmatprep.subr.mxu0 0.0
    %4833 = vmatpush1.msra.mxu0 0.0
    %4834 = vmatprep.subr.mxu0 0.0
    %4835 = vmatpush1.msra.mxu0 0.0
    %4836 = vmatprep.subr.mxu0 0.0
    %4837 = vmatpush1.msra.mxu0 0.0
    %4838 = vmatprep.subr.mxu0 0.0
    %4839 = vmatpush1.msra.mxu0 0.0
    %4840 = vmatprep.subr.mxu0 0.0
    %4841 = vmatpush1.msra.mxu0 0.0
    %4842 = vmatprep.subr.mxu0 0.0
    %4843 = vmatpush1.msra.mxu0 0.0
    %4844 = vmatprep.subr.mxu0 0.0
    %4845 = vmatpush1.msra.mxu0 0.0
    %4846 = vmatprep.subr.mxu0 0.0
    %4847 = vmatpush1.msra.mxu0 0.0
    %4848 = vmatprep.subr.mxu0 0.0
    %4849 = vmatpush1.msra.mxu0 0.0
    %4850 = vmatprep.subr.mxu0 0.0
    %4851 = vmatpush1.msra.mxu0 0.0
    %4852 = vmatprep.subr.mxu0 0.0
    %4853 = vmatpush1.msra.mxu0 0.0
    %4854 = vmatprep.subr.mxu0 0.0
    %4855 = vmatpush1.msra.mxu0 0.0
    %4856 = vmatprep.subr.mxu0 0.0
    %4857 = vmatpush1.msra.mxu0 0.0
    %4858 = vmatprep.subr.mxu0 0.0
    %4859 = vmatpush1.msra.mxu0 0.0
    %4860 = vmatprep.subr.mxu0 0.0
    %4861 = vmatpush1.msra.mxu0 0.0
    %4862 = vmatprep.subr.mxu0 0.0
    %4863 = vmatpush1.msra.mxu0 0.0
    %4864 = vmatprep.subr.mxu0 0.0
    %4865 = vmatpush1.msra.mxu0 0.0
    %4866 = vmatprep.mubr.f32.mxu0 0.0
    %4867 = vmatmul.mubr.f32.gmra.mrb[0].mxu0 %v4788
    %v4868 = vpop.f32.mrb[0].mxu0
    %v4869 = vadd.f32 %v4785, %v4868
    %v4870 = vpop.f32.mrb[0].mxu0
    %4871 = vmatprep.mubr.f32.mxu0 0.0
    %4872 = vmatmul.mubr.f32.gmra.mrb[0].mxu0 %v4791
    %v4873 = vpop.f32.mrb[0].mxu0
    %v4874 = vadd.f32 %v4785, %v4873
    %v4875 = vpop.f32.mrb[0].mxu0
    %4876 = vmatprep.mubr.f32.mxu0 0.0
    %4877 = vmatmul.mubr.f32.gmra.mrb[0].mxu0 %v4794
    %v4878 = vpop.f32.mrb[0].mxu0
    %v4879 = vadd.f32 %v4785, %v4878
    %v4880 = vpop.f32.mrb[0].mxu0
    %4881 = vmatprep.mubr.f32.mxu0 0.0
    %4882 = vmatmul.mubr.f32.gmra.mrb[0].mxu0 %v4797
    %v4883 = vpop.f32.mrb[0].mxu0
    %v4884 = vadd.f32 %v4785, %v4883
    %v4885 = vpop.f32.mrb[0].mxu0
    %4886 = vmatprep.mubr.f32.mxu0 0.0
    %4887 = vmatmul.mubr.f32.gmra.mrb[0].mxu0 %v4800
    %v4888 = vpop.f32.mrb[0].mxu0
    %v4889 = vadd.f32 %v4785, %v4888
    %v4890 = vpop.f32.mrb[0].mxu0
    %4891 = vdwg.mxu0
    %v4892 = vadd.f32 %v4421, %v4869
    %v4893 = vadd.f32 %v4422, %v4874
    %v4894 = vadd.f32 %v4423, %v4879
    %v4895 = vadd.f32 %v4424, %v4884
    %v4896 = vadd.f32 %v4425, %v4889
    %v4897 = vld [vmem:[%s4] sm:$0x3]
    %v4899 = vsel %vm536, %v4897, 0
    %v4902 = vsel %vm622, %v4896, 0
    %4904 = vmatprep.subr.mxu0 0.0
    %4905 = vmatpush1.msra.mxu0 %v4892
    %4906 = vmatprep.subr.mxu0 0.0
    %4907 = vmatpush1.msra.mxu0 %v4893
    %4908 = vmatprep.subr.mxu0 0.0
    %4909 = vmatpush1.msra.mxu0 %v4894
    %4910 = vmatprep.subr.mxu0 0.0
    %4911 = vmatpush1.msra.mxu0 %v4895
    %4912 = vmatprep.subr.mxu0 0.0
    %4913 = vmatpush1.msra.mxu0 %v4902
    %4914 = vmatprep.subr.mxu0 0.0
    %4915 = vmatpush1.msra.mxu0 0.0
    %4916 = vmatprep.subr.mxu0 0.0
    %4917 = vmatpush1.msra.mxu0 0.0
    %4918 = vmatprep.subr.mxu0 0.0
    %4919 = vmatpush1.msra.mxu0 0.0
    %4920 = vmatprep.subr.mxu0 0.0
    %4921 = vmatpush1.msra.mxu0 0.0
    %4922 = vmatprep.subr.mxu0 0.0
    %4923 = vmatpush1.msra.mxu0 0.0
    %4924 = vmatprep.subr.mxu0 0.0
    %4925 = vmatpush1.msra.mxu0 0.0
    %4926 = vmatprep.subr.mxu0 0.0
    %4927 = vmatpush1.msra.mxu0 0.0
    %4928 = vmatprep.subr.mxu0 0.0
    %4929 = vmatpush1.msra.mxu0 0.0
    %4930 = vmatprep.subr.mxu0 0.0
    %4931 = vmatpush1.msra.mxu0 0.0
    %4932 = vmatprep.subr.mxu0 0.0
    %4933 = vmatpush1.msra.mxu0 0.0
    %4934 = vmatprep.subr.mxu0 0.0
    %4935 = vmatpush1.msra.mxu0 0.0
    %4936 = vmatprep.subr.mxu0 0.0
    %4937 = vmatpush1.msra.mxu0 0.0
    %4938 = vmatprep.subr.mxu0 0.0
    %4939 = vmatpush1.msra.mxu0 0.0
    %4940 = vmatprep.subr.mxu0 0.0
    %4941 = vmatpush1.msra.mxu0 0.0
    %4942 = vmatprep.subr.mxu0 0.0
    %4943 = vmatpush1.msra.mxu0 0.0
    %4944 = vmatprep.subr.mxu0 0.0
    %4945 = vmatpush1.msra.mxu0 0.0
    %4946 = vmatprep.subr.mxu0 0.0
    %4947 = vmatpush1.msra.mxu0 0.0
    %4948 = vmatprep.subr.mxu0 0.0
    %4949 = vmatpush1.msra.mxu0 0.0
    %4950 = vmatprep.subr.mxu0 0.0
    %4951 = vmatpush1.msra.mxu0 0.0
    %4952 = vmatprep.subr.mxu0 0.0
    %4953 = vmatpush1.msra.mxu0 0.0
    %4954 = vmatprep.subr.mxu0 0.0
    %4955 = vmatpush1.msra.mxu0 0.0
    %4956 = vmatprep.subr.mxu0 0.0
    %4957 = vmatpush1.msra.mxu0 0.0
    %4958 = vmatprep.subr.mxu0 0.0
    %4959 = vmatpush1.msra.mxu0 0.0
    %4960 = vmatprep.subr.mxu0 0.0
    %4961 = vmatpush1.msra.mxu0 0.0
    %4962 = vmatprep.subr.mxu0 0.0
    %4963 = vmatpush1.msra.mxu0 0.0
    %4964 = vmatprep.subr.mxu0 0.0
    %4965 = vmatpush1.msra.mxu0 0.0
    %4966 = vmatprep.subr.mxu0 0.0
    %4967 = vmatpush1.msra.mxu0 0.0
    %4968 = vmatprep.mubr.f32.mxu0 0.0
    %4969 = vmatmul.mubr.f32.gmra.mrb[0].mxu0 %v4899
    %v4970 = vpop.f32.mrb[0].mxu0
    %v4971 = vadd.f32 0.0, %v4970
    %v4972 = vpop.f32.mrb[0].mxu0
    %4973 = vdwg.mxu0
    %v4974 = vld [vmem:[%s17] sm:$0x1]
    %v4975 = vld [vmem:[%s18] sm:$0x1]
    %v4976 = vsel %vm213, %v4971, 0.0
    %4977 = vadd.xlane.f32.xlu0 %v4976
    %v4978 = vpop.xlane.xlu0 %4977
    %v4979 = vmul.f32 %v4978, %v217
    %v4980 = vsub.f32 %v4971, %v4979
    %v4981 = vmul.f32 %v4980, %v4980
    %v4982 = vsel %vm213, %v4981, 0.0
    %4983 = vadd.xlane.f32.xlu0 %v4982
    %v4984 = vpop.xlane.xlu0 %4983
    %v4985 = vmul.f32 %v4984, %v217
    %v4986 = vadd.f32 %v4985, 1e-05
    %v4987 = vrsqrt.pop %v4986
    %v4988 = vmul.f32 %v4980, %v4987
    %v4990 = vlaneseq
    %v4991 = vshrl.u32 %v4990, 7
    %v4992 = vsub.s32 0, %v4991
    %v4993 = vrot.slane %v4974, %v4992
    %v4995 = vmul.f32 %v4988, %v4993
    %v4997 = vlaneseq
    %v4998 = vshrl.u32 %v4997, 7
    %v4999 = vsub.s32 0, %v4998
    %v5000 = vrot.slane %v4975, %v4999
    %v5002 = vadd.f32 %v4995, %v5000
    %v5003 = vld [vmem:[%s19] sm:$0xff]
    %v5004 = vld [vmem:[%s19 + $0x8] sm:$0xff]
    %v5005 = vld [vmem:[%s19 + $0x10] sm:$0xff]
    %v5006 = vld [vmem:[%s19 + $0x18] sm:$0xff]
    %v5007 = vld [vmem:[%s20] sm:$0x1]
    %v5009 = vlaneseq
    %v5010 = vshrl.u32 %v5009, 7
    %v5011 = vsub.s32 0, %v5010
    %v5012 = vrot.slane %v5007, %v5011
    %v5015 = vsel %vm200, %v5002, 0
    %5017 = vmatprep.subr.mxu0 0.0
    %5018 = vmatpush1.msra.mxu0 %v5003
    %5019 = vmatprep.subr.mxu0 0.0
    %5020 = vmatpush1.msra.mxu0 %v5004
    %5021 = vmatprep.subr.mxu0 0.0
    %5022 = vmatpush1.msra.mxu0 %v5005
    %5023 = vmatprep.subr.mxu0 0.0
    %5024 = vmatpush1.msra.mxu0 %v5006
    %5025 = vmatprep.subr.mxu0 0.0
    %5026 = vmatpush1.msra.mxu0 0.0
    %5027 = vmatprep.subr.mxu0 0.0
    %5028 = vmatpush1.msra.mxu0 0.0
    %5029 = vmatprep.subr.mxu0 0.0
    %5030 = vmatpush1.msra.mxu0 0.0
    %5031 = vmatprep.subr.mxu0 0.0
    %5032 = vmatpush1.msra.mxu0 0.0
    %5033 = vmatprep.subr.mxu0 0.0
    %5034 = vmatpush1.msra.mxu0 0.0
    %5035 = vmatprep.subr.mxu0 0.0
    %5036 = vmatpush1.msra.mxu0 0.0
    %5037 = vmatprep.subr.mxu0 0.0
    %5038 = vmatpush1.msra.mxu0 0.0
    %5039 = vmatprep.subr.mxu0 0.0
    %5040 = vmatpush1.msra.mxu0 0.0
    %5041 = vmatprep.subr.mxu0 0.0
    %5042 = vmatpush1.msra.mxu0 0.0
    %5043 = vmatprep.subr.mxu0 0.0
    %5044 = vmatpush1.msra.mxu0 0.0
    %5045 = vmatprep.subr.mxu0 0.0
    %5046 = vmatpush1.msra.mxu0 0.0
    %5047 = vmatprep.subr.mxu0 0.0
    %5048 = vmatpush1.msra.mxu0 0.0
    %5049 = vmatprep.subr.mxu0 0.0
    %5050 = vmatpush1.msra.mxu0 0.0
    %5051 = vmatprep.subr.mxu0 0.0
    %5052 = vmatpush1.msra.mxu0 0.0
    %5053 = vmatprep.subr.mxu0 0.0
    %5054 = vmatpush1.msra.mxu0 0.0
    %5055 = vmatprep.subr.mxu0 0.0
    %5056 = vmatpush1.msra.mxu0 0.0
    %5057 = vmatprep.subr.mxu0 0.0
    %5058 = vmatpush1.msra.mxu0 0.0
    %5059 = vmatprep.subr.mxu0 0.0
    %5060 = vmatpush1.msra.mxu0 0.0
    %5061 = vmatprep.subr.mxu0 0.0
    %5062 = vmatpush1.msra.mxu0 0.0
    %5063 = vmatprep.subr.mxu0 0.0
    %5064 = vmatpush1.msra.mxu0 0.0
    %5065 = vmatprep.subr.mxu0 0.0
    %5066 = vmatpush1.msra.mxu0 0.0
    %5067 = vmatprep.subr.mxu0 0.0
    %5068 = vmatpush1.msra.mxu0 0.0
    %5069 = vmatprep.subr.mxu0 0.0
    %5070 = vmatpush1.msra.mxu0 0.0
    %5071 = vmatprep.subr.mxu0 0.0
    %5072 = vmatpush1.msra.mxu0 0.0
    %5073 = vmatprep.subr.mxu0 0.0
    %5074 = vmatpush1.msra.mxu0 0.0
    %5075 = vmatprep.subr.mxu0 0.0
    %5076 = vmatpush1.msra.mxu0 0.0
    %5077 = vmatprep.subr.mxu0 0.0
    %5078 = vmatpush1.msra.mxu0 0.0
    %5079 = vmatprep.subr.mxu0 0.0
    %5080 = vmatpush1.msra.mxu0 0.0
    %5081 = vmatprep.mubr.f32.mxu0 0.0
    %5082 = vmatmul.mubr.f32.gmra.mrb[0].mxu0 %v5015
    %v5083 = vpop.f32.mrb[0].mxu0
    %v5084 = vadd.f32 %v5012, %v5083
    %v5085 = vpop.f32.mrb[0].mxu0
    %5086 = vdwg.mxu0
    %vm5087 = vcmask 74752
    %5088 = vst.msk [vmem:[#allocation2] sm:$0x3] %vm5087, %v5084
    // Predicated region
    $region86: #{vit_forward.1} parent=1 // pred_check
      _
    $region87: #{vit_forward.1} parent=1 // pred_check_branch
      %5090 = sbr.rel (0) target = $region89
    $region88: #{vit_forward.1} parent=1 // pred_region
      %s5092 = ssub.s32 32, 32
      %5093 = vsyncadd [#allocation3], %s5092
      %s5095 = sshll.u32 [#allocation2], 4
      %s5096 = int_to_ptr.vmem [resolvable:$true] %s5095
      %5098 = dma.vmem_to_hbm [thread:$0]  %s5096, 32, %s21, [#allocation3]
    $region89: #{vit_forward.1} parent=1 // pred_fallthru
      _
    // Predicated region
    $region90: #{vit_forward.1} parent=1 // pred_check
      _
    $region91: #{vit_forward.1} parent=1 // pred_check_branch
      %5100 = sbr.rel (0) target = $region93
    $region92: #{vit_forward.1} parent=1 // pred_region
      %5101 = dma.done [#allocation3], 32
    $region93: #{vit_forward.1} parent=1 // pred_fallthru
      _
    %5102 = vsyncpa [#allocation3], 1

</llo_original>
